<compile_context>
chip_gen: v7x
topology: tpu7x:2x2x1
jax: 0.10.0
libtpu: 0.0.40
codegen_flags: <defaults>
</compile_context>

<pallas_src>
import functools

import jax
import jax.numpy as jnp
from jax.experimental import pallas as pl
from jax.experimental.pallas import tpu as pltpu

# Below this many bytes a pallas_call's fixed launch/step overhead dominates a
# memory-bound copy, so we skip the kernel entirely.
_SMALL_INPUT_BYTES = 1 << 20  # 1 MiB


def _copy_kernel(s2_ref, out_ref):
    # forward() == return estimated_S2 -> straight copy of the current block.
    out_ref[...] = s2_ref[...]


def _pick_block(dim: int, pref: int, align: int) -> int:
    """Pick a block size along one dimension.

    - dim <= pref: use the full extent (exempt from the (8,128) rule); the
      tile stays small so VMEM is safe.
    - dim  > pref: use the aligned preferred block; the grid's cdiv plus
      masked edge stores handle any ragged tail.  (Never return a huge
      unaligned full extent as the block.)
    """
    assert pref % align == 0
    if dim <= pref:
        return dim
    return pref


@functools.lru_cache(maxsize=None)
def _build_materialize(n: int, m: int, dtype_name: str):
    """Build (once per (n, m, dtype)) the jitted Pallas copy kernel."""
    dtype = jnp.dtype(dtype_name)
    # Sublane-aligned rows, lane-dense (multiple-of-128) columns -> unmasked
    # vst on interior tiles.  512 x 1024 f32 = 2 MiB/tile; with in+out double
    # buffering that is 8 MiB of VMEM — inside every generation's scoped
    # default (16 MiB v5e, 32 MiB v6e/v7x) and far below v7x's 64 MiB VMEM.
    bn = _pick_block(n, 512, 8)
    bm = _pick_block(m, 1024, 128)
    grid = (pl.cdiv(n, bn), pl.cdiv(m, bm))

    call = pl.pallas_call(
        _copy_kernel,
        out_shape=jax.ShapeDtypeStruct((n, m), dtype),
        grid=grid,
        in_specs=[pl.BlockSpec((bn, bm), lambda i, j: (i, j))],
        out_specs=pl.BlockSpec((bn, bm), lambda i, j: (i, j)),
        # No input/output alias: materialize() exists to produce a distinct
        # output buffer; alias-without-donation would force a protective copy
        # that doubles HBM traffic.
        compiler_params=pltpu.CompilerParams(
            # Independent tiles -> shard across v7x's two TensorCores;
            # measured-neutral on single-TC v5e/v6e.
            dimension_semantics=("parallel", "parallel"),
        ),
    )
    return jax.jit(call)


def estimate_s2_materialize(estimated_s2: jax.Array) -> jax.Array:
    """Materialize a copy of the parameter via a tiled Pallas kernel.

    Small inputs bypass the kernel (launch overhead dominates); larger inputs
    run a memoized, compiled-once tiled copy at the HBM roofline.
    """
    n, m = estimated_s2.shape
    if n * m * estimated_s2.dtype.itemsize < _SMALL_INPUT_BYTES:
        # JAX arrays are immutable, so returning the array keeps the exact
        # forward() semantics with zero HBM traffic.
        return estimated_s2
    return _build_materialize(n, m, jnp.dtype(estimated_s2.dtype).name)(estimated_s2)


class EstimateS2:
    """JAX/Pallas port of the PyTorch EstimateS2 module."""

    def __init__(self, S2: jax.Array):
        # nn.Parameter(FloatTensor(n, m)) initialized by copying S2 in.
        self.estimated_S2 = jnp.asarray(S2, dtype=jnp.float32)

    def forward(self) -> jax.Array:
        # Identity forward: return the parameter directly — zero HBM traffic,
        # no kernel-launch overhead (hot path, per the performance review).
        return self.estimated_S2

    __call__ = forward


if __name__ == "__main__":
    key = jax.random.PRNGKey(0)

    # 1) Module semantics at a small (n, m): identity forward, no kernel.
    n, m = 8, 256
    S2_init = jax.random.normal(key, (n, m), dtype=jnp.float32)
    module = EstimateS2(S2_init)

    out = jax.block_until_ready(module())
    assert out.shape == (n, m)
    assert out.dtype == jnp.float32
    assert bool(jnp.allclose(out, S2_init)), "forward() must return the parameter"

    # Small-input bypass path (no pallas_call launched for tiny shapes).
    out_small = jax.block_until_ready(estimate_s2_materialize(module.estimated_S2))
    assert bool(jnp.allclose(out_small, S2_init))

    # 2) Pallas kernel path: shape above the bypass threshold, with an
    #    unaligned ragged tail along m to exercise the fixed _pick_block
    #    (bn=512, bm=1024, grid=(2, 2), masked edge stores on the tail).
    n2, m2 = 1024, 1100
    big = jax.random.normal(jax.random.PRNGKey(0), (n2, m2), dtype=jnp.float32)
    out_k = jax.block_until_ready(estimate_s2_materialize(big))
    assert out_k.shape == (n2, m2)
    assert out_k.dtype == jnp.float32
    assert bool(jnp.allclose(out_k, big)), "Pallas copy must match the input"

    # Second call reuses the lru_cache'd compiled executable (no retrace).
    out_k2 = jax.block_until_ready(estimate_s2_materialize(big))
    assert bool(jnp.allclose(out_k2, big))

    print("KERNEL_OK")
</pallas_src>

<mosaic_0001>
module attributes {stable_mosaic.version = 11 : i64} {
  func.func @_copy_kernel(%arg0: i32, %arg1: i32, %arg2: memref<512x1024xf32, #tpu.memory_space<vmem>>, %arg3: memref<512x1024xf32, #tpu.memory_space<vmem>>) attributes {dimension_semantics = [#tpu.dimension_semantics<parallel>, #tpu.dimension_semantics<parallel>], iteration_bounds = array<i64: 2, 2>, scalar_prefetch = 0 : i64, scratch_operands = 0 : i64, tpu.core_type = #tpu.core_type<tc>, window_params = [{transform_indices = @transform_0, window_bounds = array<i64: 512, 1024>}, {transform_indices = @transform_1, window_bounds = array<i64: 512, 1024>}]} {
    %c0 = arith.constant 0 : index
    %c0_0 = arith.constant 0 : index
    %0 = vector.load %arg2[%c0, %c0_0] : memref<512x1024xf32, #tpu.memory_space<vmem>>, vector<512x1024xf32>
    %c0_1 = arith.constant 0 : index
    %c0_2 = arith.constant 0 : index
    %1 = vector.load %arg3[%c0_1, %c0_2] : memref<512x1024xf32, #tpu.memory_space<vmem>>, vector<512x1024xf32>
    tpu.vector_store %arg3[%c0_1, %c0_2], %0 {strides = array<i32>} : memref<512x1024xf32, #tpu.memory_space<vmem>>, vector<512x1024xf32>,
    return
  }
  func.func @transform_0(%arg0: i32, %arg1: i32) -> (i32, i32) {
    %c0_i32 = arith.constant 0 : i32
    return %arg0, %arg1 : i32, i32
  }
  func.func @transform_1(%arg0: i32, %arg1: i32) -> (i32, i32) {
    %c0_i32 = arith.constant 0 : i32
    return %arg0, %arg1 : i32, i32
  }
}

</mosaic_0001>

<llo_original>
// kernel: tpu_custom_call.1
$region0: #{tpu_custom_call.1}
  #allocation0 [shape = 'u32[]', space=smem, size = 0x4, offset = 0x4, fixed_abs, tag = 'smem constant byte address 0x4 - core index']
  #allocation1 [shape = 'u32[144,128]{1,0:T(1,128)}', space=vmem, size = 0x12000, scoped, tag = 'internal scratch']
  %s0 = inlined_call_operand.vmem [shape: f32[1024,1100], index: 0, kind: input, shape index: {}]
  %s1 = inlined_call_operand.vmem [shape: f32[1024,1100], index: 1, kind: output, shape index: {}]
  %s2 = sld [smem:[#allocation0]]
  $region137: #{tpu_custom_call.1} parent=0
    _
  %s4 = ssub.s32 1, %s2
  %s5 = scalar_select 0, %s4, %s2
  $region1: #{tpu_custom_call.1} parent=0
    #allocation2 [shape = 'u8[4194304]{0}', space=vmem, size = 0x400000, scoped, tag = 'input window, operand 0']
    #allocation3 [shape = 'u8[4194304]{0}', space=vmem, size = 0x400000, scoped, tag = 'output window, operand 0']
    loop: start=0, step=1, limit=6
    $region2: #{tpu_custom_call.1} parent=1 // loop_pre_header
      _
    $region3: #{tpu_custom_call.1} parent=1 // loop_header
      %s7 = sphi 0, %s11
      %p8 = scmp.ge.s32.totalorder %s7, 6
      %s14 = sphi 0, %s26
      %s15 = sphi 0, %s22
      %s16 = sphi 0, %s14
      %s17 = sphi 0, %s15
      %s18 = sphi 0, %s16
      %s19 = sphi 0, %s17
      %s31 = sphi 0, %s33
      %s34 = sphi 0, %s31
      %s35 = sphi 0, %s34
      %s51 = sphi 0, %s35
      %s59 = sphi 0, %s61
      %s62 = sphi 0, %s59
      %s63 = sphi 0, %s62
      %s79 = sphi 0, %s63
    $region4: #{tpu_custom_call.1} parent=1 // loop_header_branch
      %10 = sbr.rel (%p8) target = $region8
    $region5: #{tpu_custom_call.1} parent=1 // loop_body
      %s12 = ssub.s32 %s7, 1
      %s13 = ssub.s32 %s7, 2
      %s20 = sadd.s32 1, %s15
      %p21 = scmp.ge.s32.totalorder %s20, 2
      %s22 = scalar_select %p21, 0, %s20
      %s23 = sadd.s32 1, %s14
      %s24 = scalar_select %p21, %s23, %s14
      %p25 = scmp.ge.s32.totalorder %s24, 2
      %s26 = scalar_select %p25, 0, %s24
      %s27 = ssub.s32 %s14, %s26
      %s28 = ssub.s32 %s15, %s22
      %s29 = sor.u32 %s27, %s28
      %p30 = scmp.eq.s32.totalorder %s29, 0
      %s32 = sadd.s32 %s31, 1
      %s33 = scalar_select %p30, %s31, %s32
      %p36 = pneg %p30
      %p37 = scmp.eq.s32.totalorder %s7, 3
      %p38 = por %p36, %p37
      %p39 = scmp.ne.s32.totalorder %s31, %s34
      %p40 = scmp.eq.s32.totalorder %s7, 0
      %p41 = por %p39, %p40
      %p42 = scmp.ne.s32.totalorder %s31, %s34
      %p43 = scmp.eq.s32.totalorder %s12, 3
      %p44 = por %p42, %p43
      %p45 = scmp.ne.s32.totalorder %s34, %s35
      %p46 = scmp.eq.s32.totalorder %s12, 0
      %p47 = por %p45, %p46
      %p48 = scmp.ne.s32.totalorder %s34, %s35
      %p49 = scmp.eq.s32.totalorder %s13, 3
      %p50 = por %p48, %p49
      %p52 = scmp.ne.s32.totalorder %s35, %s51
      %p53 = scmp.eq.s32.totalorder %s13, 0
      %p54 = por %p52, %p53
      %s55 = ssub.s32 %s14, %s26
      %s56 = ssub.s32 %s15, %s22
      %s57 = sor.u32 %s55, %s56
      %p58 = scmp.eq.s32.totalorder %s57, 0
      %s60 = sadd.s32 %s59, 1
      %s61 = scalar_select %p58, %s59, %s60
      %p64 = pneg %p58
      %p65 = scmp.eq.s32.totalorder %s7, 3
      %p66 = por %p64, %p65
      %p67 = scmp.ne.s32.totalorder %s59, %s62
      %p68 = scmp.eq.s32.totalorder %s7, 0
      %p69 = por %p67, %p68
      %p70 = scmp.ne.s32.totalorder %s59, %s62
      %p71 = scmp.eq.s32.totalorder %s12, 3
      %p72 = por %p70, %p71
      %p73 = scmp.ne.s32.totalorder %s62, %s63
      %p74 = scmp.eq.s32.totalorder %s12, 0
      %p75 = por %p73, %p74
      %p76 = scmp.ne.s32.totalorder %s62, %s63
      %p77 = scmp.eq.s32.totalorder %s13, 3
      %p78 = por %p76, %p77
      %p80 = scmp.ne.s32.totalorder %s63, %s79
      %p81 = scmp.eq.s32.totalorder %s13, 0
      %p82 = por %p80, %p81
      %p83 = scmp.le.s32.totalorder 1, %s7
      %p84 = scmp.lt.s32.totalorder %s7, 5
      %p85 = pnand %p83, %p84
      %p86 = pneg %p85
      // Predicated region
      $region9: #{tpu_custom_call.1} parent=5 // pred_check
        _
      $region10: #{tpu_custom_call.1} parent=5 // pred_check_branch
        %88 = sbr.rel (%p85) target = $region12
      $region11: #{tpu_custom_call.1} parent=5 // pred_region
        %s89 = ssub.s32 %s7, 1
      $region12: #{tpu_custom_call.1} parent=5 // pred_fallthru
        _
      %p90 = scmp.lt.s32.totalorder %s7, 4
      // Predicated region
      $region13: #{tpu_custom_call.1} parent=5 // pred_check
        %p91 = pneg %p90
      $region14: #{tpu_custom_call.1} parent=5 // pred_check_branch
        %93 = sbr.rel (%p91) target = $region16
      $region15: #{tpu_custom_call.1} parent=5 // pred_region
        // Predicated region
        $region17: #{tpu_custom_call.1} parent=15 // pred_check
          %p94 = pneg %p41
        $region18: #{tpu_custom_call.1} parent=15 // pred_check_branch
          %96 = sbr.rel (%p94) target = $region20
        $region19: #{tpu_custom_call.1} parent=15 // pred_region
          %s97 = sand.u32 %s31, 1
          %s98 = sand.u32 %s31, 1
          %s99 = smul.addr %s98, 4096
          %s100 = scalar_lea.vmem [#allocation2], %s99
          %s101 = smul.u32 64, %s14
          %s102 = smul.u32 8, %s15
          %s103 = ssub.s32 9, %s102
          %p104 = scmp.lt.s32.totalorder %s103, 8
          %s105 = scalar_select %p104, %s103, 8
          %s106 = smul.u32 8192, %s105
          %p107 = scmp.ne.s32.totalorder 0, %s106
          %s108 = smul.addr %s101, 9
          %s109 = sadd.s32 %s102, %s108
          %s110 = smul.addr %s109, 8
          %s111 = scalar_lea.vmem %s0, %s110
          %s112 = smul.u32 %s105, 8
          // Predicated region
          $region21: #{tpu_custom_call.1} parent=19 // pred_check
            %p113 = pneg %p107
          $region22: #{tpu_custom_call.1} parent=19 // pred_check_branch
            %115 = sbr.rel (%p113) target = $region24
          $region23: #{tpu_custom_call.1} parent=19 // pred_region
            %p116 = scmp.lt.u32.totalorder %s112, 8
            %p117 = pneg %p116
            // Predicated region
            $region25: #{tpu_custom_call.1} parent=23 // pred_check
              _
            $region26: #{tpu_custom_call.1} parent=23 // pred_check_branch
              %119 = sbr.rel (%p116) target = $region28
            $region27: #{tpu_custom_call.1} parent=23 // pred_region
              %s260 = sand.u32 %s112, 7
              %p261 = scmp.eq.s32.totalorder %s260, 0
              // Predicated region
              $region40: #{tpu_custom_call.1} parent=27 // pred_check
                %p262 = pneg %p261
              $region41: #{tpu_custom_call.1} parent=27 // pred_check_branch
                %264 = sbr.rel (%p262) target = $region43
              $region42: #{tpu_custom_call.1} parent=27 // pred_region
                %s265 = sshrl.u32 %s112, 3
                // While loop
                $region44: #{tpu_custom_call.1} parent=42 // loop_pre_header
                  _
                $region45: #{tpu_custom_call.1} parent=42 // loop_header
                  %s269 = sphi 0, %s271
                  %p270 = scmp.ge.s32.totalorder %s269, %s265
                  %s274 = sphi 0, %s407
                  %s275 = sphi %s111, %s410
                  %s276 = sphi %s100, %s411
                $region46: #{tpu_custom_call.1} parent=42 // loop_header_branch
                  %273 = sbr.rel (%p270) target = $region50
                $region47: #{tpu_custom_call.1} parent=42 // loop_body
                  %v277 = vld [vmem:[%s275] sm:$0xff]
                  %278 = vst [vmem:[%s276] sm:$0xff] %v277
                  %v279 = vld [vmem:[%s275 + $0x48] sm:$0xff]
                  %280 = vst [vmem:[%s276 + $0x40] sm:$0xff] %v279
                  %v281 = vld [vmem:[%s275 + $0x90] sm:$0xff]
                  %282 = vst [vmem:[%s276 + $0x80] sm:$0xff] %v281
                  %v283 = vld [vmem:[%s275 + $0xd8] sm:$0xff]
                  %284 = vst [vmem:[%s276 + $0xc0] sm:$0xff] %v283
                  %v285 = vld [vmem:[%s275 + $0x120] sm:$0xff]
                  %286 = vst [vmem:[%s276 + $0x100] sm:$0xff] %v285
                  %v287 = vld [vmem:[%s275 + $0x168] sm:$0xff]
                  %288 = vst [vmem:[%s276 + $0x140] sm:$0xff] %v287
                  %v289 = vld [vmem:[%s275 + $0x1b0] sm:$0xff]
                  %290 = vst [vmem:[%s276 + $0x180] sm:$0xff] %v289
                  %v291 = vld [vmem:[%s275 + $0x1f8] sm:$0xff]
                  %292 = vst [vmem:[%s276 + $0x1c0] sm:$0xff] %v291
                  %v293 = vld [vmem:[%s275 + $0x240] sm:$0xff]
                  %294 = vst [vmem:[%s276 + $0x200] sm:$0xff] %v293
                  %v295 = vld [vmem:[%s275 + $0x288] sm:$0xff]
                  %296 = vst [vmem:[%s276 + $0x240] sm:$0xff] %v295
                  %v297 = vld [vmem:[%s275 + $0x2d0] sm:$0xff]
                  %298 = vst [vmem:[%s276 + $0x280] sm:$0xff] %v297
                  %v299 = vld [vmem:[%s275 + $0x318] sm:$0xff]
                  %300 = vst [vmem:[%s276 + $0x2c0] sm:$0xff] %v299
                  %v301 = vld [vmem:[%s275 + $0x360] sm:$0xff]
                  %302 = vst [vmem:[%s276 + $0x300] sm:$0xff] %v301
                  %v303 = vld [vmem:[%s275 + $0x3a8] sm:$0xff]
                  %304 = vst [vmem:[%s276 + $0x340] sm:$0xff] %v303
                  %v305 = vld [vmem:[%s275 + $0x3f0] sm:$0xff]
                  %306 = vst [vmem:[%s276 + $0x380] sm:$0xff] %v305
                  %v307 = vld [vmem:[%s275 + $0x438] sm:$0xff]
                  %308 = vst [vmem:[%s276 + $0x3c0] sm:$0xff] %v307
                  %v309 = vld [vmem:[%s275 + $0x480] sm:$0xff]
                  %310 = vst [vmem:[%s276 + $0x400] sm:$0xff] %v309
                  %v311 = vld [vmem:[%s275 + $0x4c8] sm:$0xff]
                  %312 = vst [vmem:[%s276 + $0x440] sm:$0xff] %v311
                  %v313 = vld [vmem:[%s275 + $0x510] sm:$0xff]
                  %314 = vst [vmem:[%s276 + $0x480] sm:$0xff] %v313
                  %v315 = vld [vmem:[%s275 + $0x558] sm:$0xff]
                  %316 = vst [vmem:[%s276 + $0x4c0] sm:$0xff] %v315
                  %v317 = vld [vmem:[%s275 + $0x5a0] sm:$0xff]
                  %318 = vst [vmem:[%s276 + $0x500] sm:$0xff] %v317
                  %v319 = vld [vmem:[%s275 + $0x5e8] sm:$0xff]
                  %320 = vst [vmem:[%s276 + $0x540] sm:$0xff] %v319
                  %v321 = vld [vmem:[%s275 + $0x630] sm:$0xff]
                  %322 = vst [vmem:[%s276 + $0x580] sm:$0xff] %v321
                  %v323 = vld [vmem:[%s275 + $0x678] sm:$0xff]
                  %324 = vst [vmem:[%s276 + $0x5c0] sm:$0xff] %v323
                  %v325 = vld [vmem:[%s275 + $0x6c0] sm:$0xff]
                  %326 = vst [vmem:[%s276 + $0x600] sm:$0xff] %v325
                  %v327 = vld [vmem:[%s275 + $0x708] sm:$0xff]
                  %328 = vst [vmem:[%s276 + $0x640] sm:$0xff] %v327
                  %v329 = vld [vmem:[%s275 + $0x750] sm:$0xff]
                  %330 = vst [vmem:[%s276 + $0x680] sm:$0xff] %v329
                  %v331 = vld [vmem:[%s275 + $0x798] sm:$0xff]
                  %332 = vst [vmem:[%s276 + $0x6c0] sm:$0xff] %v331
                  %v333 = vld [vmem:[%s275 + $0x7e0] sm:$0xff]
                  %334 = vst [vmem:[%s276 + $0x700] sm:$0xff] %v333
                  %v335 = vld [vmem:[%s275 + $0x828] sm:$0xff]
                  %336 = vst [vmem:[%s276 + $0x740] sm:$0xff] %v335
                  %v337 = vld [vmem:[%s275 + $0x870] sm:$0xff]
                  %338 = vst [vmem:[%s276 + $0x780] sm:$0xff] %v337
                  %v339 = vld [vmem:[%s275 + $0x8b8] sm:$0xff]
                  %340 = vst [vmem:[%s276 + $0x7c0] sm:$0xff] %v339
                  %v341 = vld [vmem:[%s275 + $0x900] sm:$0xff]
                  %342 = vst [vmem:[%s276 + $0x800] sm:$0xff] %v341
                  %v343 = vld [vmem:[%s275 + $0x948] sm:$0xff]
                  %344 = vst [vmem:[%s276 + $0x840] sm:$0xff] %v343
                  %v345 = vld [vmem:[%s275 + $0x990] sm:$0xff]
                  %346 = vst [vmem:[%s276 + $0x880] sm:$0xff] %v345
                  %v347 = vld [vmem:[%s275 + $0x9d8] sm:$0xff]
                  %348 = vst [vmem:[%s276 + $0x8c0] sm:$0xff] %v347
                  %v349 = vld [vmem:[%s275 + $0xa20] sm:$0xff]
                  %350 = vst [vmem:[%s276 + $0x900] sm:$0xff] %v349
                  %v351 = vld [vmem:[%s275 + $0xa68] sm:$0xff]
                  %352 = vst [vmem:[%s276 + $0x940] sm:$0xff] %v351
                  %v353 = vld [vmem:[%s275 + $0xab0] sm:$0xff]
                  %354 = vst [vmem:[%s276 + $0x980] sm:$0xff] %v353
                  %v355 = vld [vmem:[%s275 + $0xaf8] sm:$0xff]
                  %356 = vst [vmem:[%s276 + $0x9c0] sm:$0xff] %v355
                  %v357 = vld [vmem:[%s275 + $0xb40] sm:$0xff]
                  %358 = vst [vmem:[%s276 + $0xa00] sm:$0xff] %v357
                  %v359 = vld [vmem:[%s275 + $0xb88] sm:$0xff]
                  %360 = vst [vmem:[%s276 + $0xa40] sm:$0xff] %v359
                  %v361 = vld [vmem:[%s275 + $0xbd0] sm:$0xff]
                  %362 = vst [vmem:[%s276 + $0xa80] sm:$0xff] %v361
                  %v363 = vld [vmem:[%s275 + $0xc18] sm:$0xff]
                  %364 = vst [vmem:[%s276 + $0xac0] sm:$0xff] %v363
                  %v365 = vld [vmem:[%s275 + $0xc60] sm:$0xff]
                  %366 = vst [vmem:[%s276 + $0xb00] sm:$0xff] %v365
                  %v367 = vld [vmem:[%s275 + $0xca8] sm:$0xff]
                  %368 = vst [vmem:[%s276 + $0xb40] sm:$0xff] %v367
                  %v369 = vld [vmem:[%s275 + $0xcf0] sm:$0xff]
                  %370 = vst [vmem:[%s276 + $0xb80] sm:$0xff] %v369
                  %v371 = vld [vmem:[%s275 + $0xd38] sm:$0xff]
                  %372 = vst [vmem:[%s276 + $0xbc0] sm:$0xff] %v371
                  %v373 = vld [vmem:[%s275 + $0xd80] sm:$0xff]
                  %374 = vst [vmem:[%s276 + $0xc00] sm:$0xff] %v373
                  %v375 = vld [vmem:[%s275 + $0xdc8] sm:$0xff]
                  %376 = vst [vmem:[%s276 + $0xc40] sm:$0xff] %v375
                  %v377 = vld [vmem:[%s275 + $0xe10] sm:$0xff]
                  %378 = vst [vmem:[%s276 + $0xc80] sm:$0xff] %v377
                  %v379 = vld [vmem:[%s275 + $0xe58] sm:$0xff]
                  %380 = vst [vmem:[%s276 + $0xcc0] sm:$0xff] %v379
                  %v381 = vld [vmem:[%s275 + $0xea0] sm:$0xff]
                  %382 = vst [vmem:[%s276 + $0xd00] sm:$0xff] %v381
                  %v383 = vld [vmem:[%s275 + $0xee8] sm:$0xff]
                  %384 = vst [vmem:[%s276 + $0xd40] sm:$0xff] %v383
                  %v385 = vld [vmem:[%s275 + $0xf30] sm:$0xff]
                  %386 = vst [vmem:[%s276 + $0xd80] sm:$0xff] %v385
                  %v387 = vld [vmem:[%s275 + $0xf78] sm:$0xff]
                  %388 = vst [vmem:[%s276 + $0xdc0] sm:$0xff] %v387
                  %v389 = vld [vmem:[%s275 + $0xfc0] sm:$0xff]
                  %390 = vst [vmem:[%s276 + $0xe00] sm:$0xff] %v389
                  %v391 = vld [vmem:[%s275 + $0x1008] sm:$0xff]
                  %392 = vst [vmem:[%s276 + $0xe40] sm:$0xff] %v391
                  %v393 = vld [vmem:[%s275 + $0x1050] sm:$0xff]
                  %394 = vst [vmem:[%s276 + $0xe80] sm:$0xff] %v393
                  %v395 = vld [vmem:[%s275 + $0x1098] sm:$0xff]
                  %396 = vst [vmem:[%s276 + $0xec0] sm:$0xff] %v395
                  %v397 = vld [vmem:[%s275 + $0x10e0] sm:$0xff]
                  %398 = vst [vmem:[%s276 + $0xf00] sm:$0xff] %v397
                  %v399 = vld [vmem:[%s275 + $0x1128] sm:$0xff]
                  %400 = vst [vmem:[%s276 + $0xf40] sm:$0xff] %v399
                  %v401 = vld [vmem:[%s275 + $0x1170] sm:$0xff]
                  %402 = vst [vmem:[%s276 + $0xf80] sm:$0xff] %v401
                  %v403 = vld [vmem:[%s275 + $0x11b8] sm:$0xff]
                  %404 = vst [vmem:[%s276 + $0xfc0] sm:$0xff] %v403
                  %s405 = sadd.s32 1, %s274
                  %p406 = scmp.ge.s32.totalorder %s405, %s265
                  %s407 = scalar_select %p406, 0, %s405
                  %s408 = smul.u32 %s407, 8
                  %s409 = smul.u32 %s407, 8
                  %s410 = scalar_lea.vmem %s111, %s408
                  %s411 = scalar_lea.vmem %s100, %s409 [#allocation2]
                $region48: #{tpu_custom_call.1} parent=42 // loop_footer
                  %s271 = sadd.s32 %s269, 1
                $region49: #{tpu_custom_call.1} parent=42 // loop_footer_branch
                  %268 = sbr.rel target = $region45
                $region50: #{tpu_custom_call.1} parent=42 // loop_exit
                  _
              $region43: #{tpu_custom_call.1} parent=27 // pred_fallthru
                _
              %p412 = pneg %p261
              // Predicated region
              $region51: #{tpu_custom_call.1} parent=27 // pred_check
                _
              $region52: #{tpu_custom_call.1} parent=27 // pred_check_branch
                %414 = sbr.rel (%p261) target = $region54
              $region53: #{tpu_custom_call.1} parent=27 // pred_region
                %s415 = sand.u32 %s112, 7
                %s416 = ssub.s32 %s112, %s415
                %s417 = scalar_lea.vmem %s111, %s416
                %s418 = ssub.s32 %s112, %s415
                %s419 = scalar_lea.vmem %s100, %s418 [#allocation2]
                %s420 = sshrl.u32 %s112, 3
                // While loop
                $region55: #{tpu_custom_call.1} parent=53 // loop_pre_header
                  _
                $region56: #{tpu_custom_call.1} parent=53 // loop_header
                  %s424 = sphi 0, %s426
                  %p425 = scmp.ge.s32.totalorder %s424, %s420
                  %s429 = sphi 0, %s562
                  %s430 = sphi %s111, %s565
                  %s431 = sphi %s100, %s566
                $region57: #{tpu_custom_call.1} parent=53 // loop_header_branch
                  %428 = sbr.rel (%p425) target = $region61
                $region58: #{tpu_custom_call.1} parent=53 // loop_body
                  %v432 = vld [vmem:[%s430] sm:$0xff]
                  %433 = vst [vmem:[%s431] sm:$0xff] %v432
                  %v434 = vld [vmem:[%s430 + $0x48] sm:$0xff]
                  %435 = vst [vmem:[%s431 + $0x40] sm:$0xff] %v434
                  %v436 = vld [vmem:[%s430 + $0x90] sm:$0xff]
                  %437 = vst [vmem:[%s431 + $0x80] sm:$0xff] %v436
                  %v438 = vld [vmem:[%s430 + $0xd8] sm:$0xff]
                  %439 = vst [vmem:[%s431 + $0xc0] sm:$0xff] %v438
                  %v440 = vld [vmem:[%s430 + $0x120] sm:$0xff]
                  %441 = vst [vmem:[%s431 + $0x100] sm:$0xff] %v440
                  %v442 = vld [vmem:[%s430 + $0x168] sm:$0xff]
                  %443 = vst [vmem:[%s431 + $0x140] sm:$0xff] %v442
                  %v444 = vld [vmem:[%s430 + $0x1b0] sm:$0xff]
                  %445 = vst [vmem:[%s431 + $0x180] sm:$0xff] %v444
                  %v446 = vld [vmem:[%s430 + $0x1f8] sm:$0xff]
                  %447 = vst [vmem:[%s431 + $0x1c0] sm:$0xff] %v446
                  %v448 = vld [vmem:[%s430 + $0x240] sm:$0xff]
                  %449 = vst [vmem:[%s431 + $0x200] sm:$0xff] %v448
                  %v450 = vld [vmem:[%s430 + $0x288] sm:$0xff]
                  %451 = vst [vmem:[%s431 + $0x240] sm:$0xff] %v450
                  %v452 = vld [vmem:[%s430 + $0x2d0] sm:$0xff]
                  %453 = vst [vmem:[%s431 + $0x280] sm:$0xff] %v452
                  %v454 = vld [vmem:[%s430 + $0x318] sm:$0xff]
                  %455 = vst [vmem:[%s431 + $0x2c0] sm:$0xff] %v454
                  %v456 = vld [vmem:[%s430 + $0x360] sm:$0xff]
                  %457 = vst [vmem:[%s431 + $0x300] sm:$0xff] %v456
                  %v458 = vld [vmem:[%s430 + $0x3a8] sm:$0xff]
                  %459 = vst [vmem:[%s431 + $0x340] sm:$0xff] %v458
                  %v460 = vld [vmem:[%s430 + $0x3f0] sm:$0xff]
                  %461 = vst [vmem:[%s431 + $0x380] sm:$0xff] %v460
                  %v462 = vld [vmem:[%s430 + $0x438] sm:$0xff]
                  %463 = vst [vmem:[%s431 + $0x3c0] sm:$0xff] %v462
                  %v464 = vld [vmem:[%s430 + $0x480] sm:$0xff]
                  %465 = vst [vmem:[%s431 + $0x400] sm:$0xff] %v464
                  %v466 = vld [vmem:[%s430 + $0x4c8] sm:$0xff]
                  %467 = vst [vmem:[%s431 + $0x440] sm:$0xff] %v466
                  %v468 = vld [vmem:[%s430 + $0x510] sm:$0xff]
                  %469 = vst [vmem:[%s431 + $0x480] sm:$0xff] %v468
                  %v470 = vld [vmem:[%s430 + $0x558] sm:$0xff]
                  %471 = vst [vmem:[%s431 + $0x4c0] sm:$0xff] %v470
                  %v472 = vld [vmem:[%s430 + $0x5a0] sm:$0xff]
                  %473 = vst [vmem:[%s431 + $0x500] sm:$0xff] %v472
                  %v474 = vld [vmem:[%s430 + $0x5e8] sm:$0xff]
                  %475 = vst [vmem:[%s431 + $0x540] sm:$0xff] %v474
                  %v476 = vld [vmem:[%s430 + $0x630] sm:$0xff]
                  %477 = vst [vmem:[%s431 + $0x580] sm:$0xff] %v476
                  %v478 = vld [vmem:[%s430 + $0x678] sm:$0xff]
                  %479 = vst [vmem:[%s431 + $0x5c0] sm:$0xff] %v478
                  %v480 = vld [vmem:[%s430 + $0x6c0] sm:$0xff]
                  %481 = vst [vmem:[%s431 + $0x600] sm:$0xff] %v480
                  %v482 = vld [vmem:[%s430 + $0x708] sm:$0xff]
                  %483 = vst [vmem:[%s431 + $0x640] sm:$0xff] %v482
                  %v484 = vld [vmem:[%s430 + $0x750] sm:$0xff]
                  %485 = vst [vmem:[%s431 + $0x680] sm:$0xff] %v484
                  %v486 = vld [vmem:[%s430 + $0x798] sm:$0xff]
                  %487 = vst [vmem:[%s431 + $0x6c0] sm:$0xff] %v486
                  %v488 = vld [vmem:[%s430 + $0x7e0] sm:$0xff]
                  %489 = vst [vmem:[%s431 + $0x700] sm:$0xff] %v488
                  %v490 = vld [vmem:[%s430 + $0x828] sm:$0xff]
                  %491 = vst [vmem:[%s431 + $0x740] sm:$0xff] %v490
                  %v492 = vld [vmem:[%s430 + $0x870] sm:$0xff]
                  %493 = vst [vmem:[%s431 + $0x780] sm:$0xff] %v492
                  %v494 = vld [vmem:[%s430 + $0x8b8] sm:$0xff]
                  %495 = vst [vmem:[%s431 + $0x7c0] sm:$0xff] %v494
                  %v496 = vld [vmem:[%s430 + $0x900] sm:$0xff]
                  %497 = vst [vmem:[%s431 + $0x800] sm:$0xff] %v496
                  %v498 = vld [vmem:[%s430 + $0x948] sm:$0xff]
                  %499 = vst [vmem:[%s431 + $0x840] sm:$0xff] %v498
                  %v500 = vld [vmem:[%s430 + $0x990] sm:$0xff]
                  %501 = vst [vmem:[%s431 + $0x880] sm:$0xff] %v500
                  %v502 = vld [vmem:[%s430 + $0x9d8] sm:$0xff]
                  %503 = vst [vmem:[%s431 + $0x8c0] sm:$0xff] %v502
                  %v504 = vld [vmem:[%s430 + $0xa20] sm:$0xff]
                  %505 = vst [vmem:[%s431 + $0x900] sm:$0xff] %v504
                  %v506 = vld [vmem:[%s430 + $0xa68] sm:$0xff]
                  %507 = vst [vmem:[%s431 + $0x940] sm:$0xff] %v506
                  %v508 = vld [vmem:[%s430 + $0xab0] sm:$0xff]
                  %509 = vst [vmem:[%s431 + $0x980] sm:$0xff] %v508
                  %v510 = vld [vmem:[%s430 + $0xaf8] sm:$0xff]
                  %511 = vst [vmem:[%s431 + $0x9c0] sm:$0xff] %v510
                  %v512 = vld [vmem:[%s430 + $0xb40] sm:$0xff]
                  %513 = vst [vmem:[%s431 + $0xa00] sm:$0xff] %v512
                  %v514 = vld [vmem:[%s430 + $0xb88] sm:$0xff]
                  %515 = vst [vmem:[%s431 + $0xa40] sm:$0xff] %v514
                  %v516 = vld [vmem:[%s430 + $0xbd0] sm:$0xff]
                  %517 = vst [vmem:[%s431 + $0xa80] sm:$0xff] %v516
                  %v518 = vld [vmem:[%s430 + $0xc18] sm:$0xff]
                  %519 = vst [vmem:[%s431 + $0xac0] sm:$0xff] %v518
                  %v520 = vld [vmem:[%s430 + $0xc60] sm:$0xff]
                  %521 = vst [vmem:[%s431 + $0xb00] sm:$0xff] %v520
                  %v522 = vld [vmem:[%s430 + $0xca8] sm:$0xff]
                  %523 = vst [vmem:[%s431 + $0xb40] sm:$0xff] %v522
                  %v524 = vld [vmem:[%s430 + $0xcf0] sm:$0xff]
                  %525 = vst [vmem:[%s431 + $0xb80] sm:$0xff] %v524
                  %v526 = vld [vmem:[%s430 + $0xd38] sm:$0xff]
                  %527 = vst [vmem:[%s431 + $0xbc0] sm:$0xff] %v526
                  %v528 = vld [vmem:[%s430 + $0xd80] sm:$0xff]
                  %529 = vst [vmem:[%s431 + $0xc00] sm:$0xff] %v528
                  %v530 = vld [vmem:[%s430 + $0xdc8] sm:$0xff]
                  %531 = vst [vmem:[%s431 + $0xc40] sm:$0xff] %v530
                  %v532 = vld [vmem:[%s430 + $0xe10] sm:$0xff]
                  %533 = vst [vmem:[%s431 + $0xc80] sm:$0xff] %v532
                  %v534 = vld [vmem:[%s430 + $0xe58] sm:$0xff]
                  %535 = vst [vmem:[%s431 + $0xcc0] sm:$0xff] %v534
                  %v536 = vld [vmem:[%s430 + $0xea0] sm:$0xff]
                  %537 = vst [vmem:[%s431 + $0xd00] sm:$0xff] %v536
                  %v538 = vld [vmem:[%s430 + $0xee8] sm:$0xff]
                  %539 = vst [vmem:[%s431 + $0xd40] sm:$0xff] %v538
                  %v540 = vld [vmem:[%s430 + $0xf30] sm:$0xff]
                  %541 = vst [vmem:[%s431 + $0xd80] sm:$0xff] %v540
                  %v542 = vld [vmem:[%s430 + $0xf78] sm:$0xff]
                  %543 = vst [vmem:[%s431 + $0xdc0] sm:$0xff] %v542
                  %v544 = vld [vmem:[%s430 + $0xfc0] sm:$0xff]
                  %545 = vst [vmem:[%s431 + $0xe00] sm:$0xff] %v544
                  %v546 = vld [vmem:[%s430 + $0x1008] sm:$0xff]
                  %547 = vst [vmem:[%s431 + $0xe40] sm:$0xff] %v546
                  %v548 = vld [vmem:[%s430 + $0x1050] sm:$0xff]
                  %549 = vst [vmem:[%s431 + $0xe80] sm:$0xff] %v548
                  %v550 = vld [vmem:[%s430 + $0x1098] sm:$0xff]
                  %551 = vst [vmem:[%s431 + $0xec0] sm:$0xff] %v550
                  %v552 = vld [vmem:[%s430 + $0x10e0] sm:$0xff]
                  %553 = vst [vmem:[%s431 + $0xf00] sm:$0xff] %v552
                  %v554 = vld [vmem:[%s430 + $0x1128] sm:$0xff]
                  %555 = vst [vmem:[%s431 + $0xf40] sm:$0xff] %v554
                  %v556 = vld [vmem:[%s430 + $0x1170] sm:$0xff]
                  %557 = vst [vmem:[%s431 + $0xf80] sm:$0xff] %v556
                  %v558 = vld [vmem:[%s430 + $0x11b8] sm:$0xff]
                  %559 = vst [vmem:[%s431 + $0xfc0] sm:$0xff] %v558
                  %s560 = sadd.s32 1, %s429
                  %p561 = scmp.ge.s32.totalorder %s560, %s420
                  %s562 = scalar_select %p561, 0, %s560
                  %s563 = smul.u32 %s562, 8
                  %s564 = smul.u32 %s562, 8
                  %s565 = scalar_lea.vmem %s111, %s563
                  %s566 = scalar_lea.vmem %s100, %s564 [#allocation2]
                $region59: #{tpu_custom_call.1} parent=53 // loop_footer
                  %s426 = sadd.s32 %s424, 1
                $region60: #{tpu_custom_call.1} parent=53 // loop_footer_branch
                  %423 = sbr.rel target = $region56
                $region61: #{tpu_custom_call.1} parent=53 // loop_exit
                  _
                %s567 = sshllo.u32 0, %s415
                loop: start=0, step=1, limit=1
                $region62: #{tpu_custom_call.1} parent=53 // loop_pre_header
                  _
                $region63: #{tpu_custom_call.1} parent=53 // loop_header
                  %s569 = sphi 0, %s573
                  %p570 = scmp.ge.s32.totalorder %s569, 1
                  %s574 = sphi %s417, %s417
                  %s575 = sphi %s419, %s419
                $region64: #{tpu_custom_call.1} parent=53 // loop_header_branch
                  %572 = sbr.rel (%p570) target = $region68
                $region65: #{tpu_custom_call.1} parent=53 // loop_body
                  %v576 = vld [vmem:[%s574] sm:%s567]
                  %577 = vst [vmem:[%s575] sm:%s567] %v576
                  %v578 = vld [vmem:[%s574 + $0x48] sm:%s567]
                  %579 = vst [vmem:[%s575 + $0x40] sm:%s567] %v578
                  %v580 = vld [vmem:[%s574 + $0x90] sm:%s567]
                  %581 = vst [vmem:[%s575 + $0x80] sm:%s567] %v580
                  %v582 = vld [vmem:[%s574 + $0xd8] sm:%s567]
                  %583 = vst [vmem:[%s575 + $0xc0] sm:%s567] %v582
                  %v584 = vld [vmem:[%s574 + $0x120] sm:%s567]
                  %585 = vst [vmem:[%s575 + $0x100] sm:%s567] %v584
                  %v586 = vld [vmem:[%s574 + $0x168] sm:%s567]
                  %587 = vst [vmem:[%s575 + $0x140] sm:%s567] %v586
                  %v588 = vld [vmem:[%s574 + $0x1b0] sm:%s567]
                  %589 = vst [vmem:[%s575 + $0x180] sm:%s567] %v588
                  %v590 = vld [vmem:[%s574 + $0x1f8] sm:%s567]
                  %591 = vst [vmem:[%s575 + $0x1c0] sm:%s567] %v590
                  %v592 = vld [vmem:[%s574 + $0x240] sm:%s567]
                  %593 = vst [vmem:[%s575 + $0x200] sm:%s567] %v592
                  %v594 = vld [vmem:[%s574 + $0x288] sm:%s567]
                  %595 = vst [vmem:[%s575 + $0x240] sm:%s567] %v594
                  %v596 = vld [vmem:[%s574 + $0x2d0] sm:%s567]
                  %597 = vst [vmem:[%s575 + $0x280] sm:%s567] %v596
                  %v598 = vld [vmem:[%s574 + $0x318] sm:%s567]
                  %599 = vst [vmem:[%s575 + $0x2c0] sm:%s567] %v598
                  %v600 = vld [vmem:[%s574 + $0x360] sm:%s567]
                  %601 = vst [vmem:[%s575 + $0x300] sm:%s567] %v600
                  %v602 = vld [vmem:[%s574 + $0x3a8] sm:%s567]
                  %603 = vst [vmem:[%s575 + $0x340] sm:%s567] %v602
                  %v604 = vld [vmem:[%s574 + $0x3f0] sm:%s567]
                  %605 = vst [vmem:[%s575 + $0x380] sm:%s567] %v604
                  %v606 = vld [vmem:[%s574 + $0x438] sm:%s567]
                  %607 = vst [vmem:[%s575 + $0x3c0] sm:%s567] %v606
                  %v608 = vld [vmem:[%s574 + $0x480] sm:%s567]
                  %609 = vst [vmem:[%s575 + $0x400] sm:%s567] %v608
                  %v610 = vld [vmem:[%s574 + $0x4c8] sm:%s567]
                  %611 = vst [vmem:[%s575 + $0x440] sm:%s567] %v610
                  %v612 = vld [vmem:[%s574 + $0x510] sm:%s567]
                  %613 = vst [vmem:[%s575 + $0x480] sm:%s567] %v612
                  %v614 = vld [vmem:[%s574 + $0x558] sm:%s567]
                  %615 = vst [vmem:[%s575 + $0x4c0] sm:%s567] %v614
                  %v616 = vld [vmem:[%s574 + $0x5a0] sm:%s567]
                  %617 = vst [vmem:[%s575 + $0x500] sm:%s567] %v616
                  %v618 = vld [vmem:[%s574 + $0x5e8] sm:%s567]
                  %619 = vst [vmem:[%s575 + $0x540] sm:%s567] %v618
                  %v620 = vld [vmem:[%s574 + $0x630] sm:%s567]
                  %621 = vst [vmem:[%s575 + $0x580] sm:%s567] %v620
                  %v622 = vld [vmem:[%s574 + $0x678] sm:%s567]
                  %623 = vst [vmem:[%s575 + $0x5c0] sm:%s567] %v622
                  %v624 = vld [vmem:[%s574 + $0x6c0] sm:%s567]
                  %625 = vst [vmem:[%s575 + $0x600] sm:%s567] %v624
                  %v626 = vld [vmem:[%s574 + $0x708] sm:%s567]
                  %627 = vst [vmem:[%s575 + $0x640] sm:%s567] %v626
                  %v628 = vld [vmem:[%s574 + $0x750] sm:%s567]
                  %629 = vst [vmem:[%s575 + $0x680] sm:%s567] %v628
                  %v630 = vld [vmem:[%s574 + $0x798] sm:%s567]
                  %631 = vst [vmem:[%s575 + $0x6c0] sm:%s567] %v630
                  %v632 = vld [vmem:[%s574 + $0x7e0] sm:%s567]
                  %633 = vst [vmem:[%s575 + $0x700] sm:%s567] %v632
                  %v634 = vld [vmem:[%s574 + $0x828] sm:%s567]
                  %635 = vst [vmem:[%s575 + $0x740] sm:%s567] %v634
                  %v636 = vld [vmem:[%s574 + $0x870] sm:%s567]
                  %637 = vst [vmem:[%s575 + $0x780] sm:%s567] %v636
                  %v638 = vld [vmem:[%s574 + $0x8b8] sm:%s567]
                  %639 = vst [vmem:[%s575 + $0x7c0] sm:%s567] %v638
                  %v640 = vld [vmem:[%s574 + $0x900] sm:%s567]
                  %641 = vst [vmem:[%s575 + $0x800] sm:%s567] %v640
                  %v642 = vld [vmem:[%s574 + $0x948] sm:%s567]
                  %643 = vst [vmem:[%s575 + $0x840] sm:%s567] %v642
                  %v644 = vld [vmem:[%s574 + $0x990] sm:%s567]
                  %645 = vst [vmem:[%s575 + $0x880] sm:%s567] %v644
                  %v646 = vld [vmem:[%s574 + $0x9d8] sm:%s567]
                  %647 = vst [vmem:[%s575 + $0x8c0] sm:%s567] %v646
                  %v648 = vld [vmem:[%s574 + $0xa20] sm:%s567]
                  %649 = vst [vmem:[%s575 + $0x900] sm:%s567] %v648
                  %v650 = vld [vmem:[%s574 + $0xa68] sm:%s567]
                  %651 = vst [vmem:[%s575 + $0x940] sm:%s567] %v650
                  %v652 = vld [vmem:[%s574 + $0xab0] sm:%s567]
                  %653 = vst [vmem:[%s575 + $0x980] sm:%s567] %v652
                  %v654 = vld [vmem:[%s574 + $0xaf8] sm:%s567]
                  %655 = vst [vmem:[%s575 + $0x9c0] sm:%s567] %v654
                  %v656 = vld [vmem:[%s574 + $0xb40] sm:%s567]
                  %657 = vst [vmem:[%s575 + $0xa00] sm:%s567] %v656
                  %v658 = vld [vmem:[%s574 + $0xb88] sm:%s567]
                  %659 = vst [vmem:[%s575 + $0xa40] sm:%s567] %v658
                  %v660 = vld [vmem:[%s574 + $0xbd0] sm:%s567]
                  %661 = vst [vmem:[%s575 + $0xa80] sm:%s567] %v660
                  %v662 = vld [vmem:[%s574 + $0xc18] sm:%s567]
                  %663 = vst [vmem:[%s575 + $0xac0] sm:%s567] %v662
                  %v664 = vld [vmem:[%s574 + $0xc60] sm:%s567]
                  %665 = vst [vmem:[%s575 + $0xb00] sm:%s567] %v664
                  %v666 = vld [vmem:[%s574 + $0xca8] sm:%s567]
                  %667 = vst [vmem:[%s575 + $0xb40] sm:%s567] %v666
                  %v668 = vld [vmem:[%s574 + $0xcf0] sm:%s567]
                  %669 = vst [vmem:[%s575 + $0xb80] sm:%s567] %v668
                  %v670 = vld [vmem:[%s574 + $0xd38] sm:%s567]
                  %671 = vst [vmem:[%s575 + $0xbc0] sm:%s567] %v670
                  %v672 = vld [vmem:[%s574 + $0xd80] sm:%s567]
                  %673 = vst [vmem:[%s575 + $0xc00] sm:%s567] %v672
                  %v674 = vld [vmem:[%s574 + $0xdc8] sm:%s567]
                  %675 = vst [vmem:[%s575 + $0xc40] sm:%s567] %v674
                  %v676 = vld [vmem:[%s574 + $0xe10] sm:%s567]
                  %677 = vst [vmem:[%s575 + $0xc80] sm:%s567] %v676
                  %v678 = vld [vmem:[%s574 + $0xe58] sm:%s567]
                  %679 = vst [vmem:[%s575 + $0xcc0] sm:%s567] %v678
                  %v680 = vld [vmem:[%s574 + $0xea0] sm:%s567]
                  %681 = vst [vmem:[%s575 + $0xd00] sm:%s567] %v680
                  %v682 = vld [vmem:[%s574 + $0xee8] sm:%s567]
                  %683 = vst [vmem:[%s575 + $0xd40] sm:%s567] %v682
                  %v684 = vld [vmem:[%s574 + $0xf30] sm:%s567]
                  %685 = vst [vmem:[%s575 + $0xd80] sm:%s567] %v684
                  %v686 = vld [vmem:[%s574 + $0xf78] sm:%s567]
                  %687 = vst [vmem:[%s575 + $0xdc0] sm:%s567] %v686
                  %v688 = vld [vmem:[%s574 + $0xfc0] sm:%s567]
                  %689 = vst [vmem:[%s575 + $0xe00] sm:%s567] %v688
                  %v690 = vld [vmem:[%s574 + $0x1008] sm:%s567]
                  %691 = vst [vmem:[%s575 + $0xe40] sm:%s567] %v690
                  %v692 = vld [vmem:[%s574 + $0x1050] sm:%s567]
                  %693 = vst [vmem:[%s575 + $0xe80] sm:%s567] %v692
                  %v694 = vld [vmem:[%s574 + $0x1098] sm:%s567]
                  %695 = vst [vmem:[%s575 + $0xec0] sm:%s567] %v694
                  %v696 = vld [vmem:[%s574 + $0x10e0] sm:%s567]
                  %697 = vst [vmem:[%s575 + $0xf00] sm:%s567] %v696
                  %v698 = vld [vmem:[%s574 + $0x1128] sm:%s567]
                  %699 = vst [vmem:[%s575 + $0xf40] sm:%s567] %v698
                  %v700 = vld [vmem:[%s574 + $0x1170] sm:%s567]
                  %701 = vst [vmem:[%s575 + $0xf80] sm:%s567] %v700
                  %v702 = vld [vmem:[%s574 + $0x11b8] sm:%s567]
                  %703 = vst [vmem:[%s575 + $0xfc0] sm:%s567] %v702
                $region66: #{tpu_custom_call.1} parent=53 // loop_footer
                  %s573 = sadd.s32 1, %s569
                $region67: #{tpu_custom_call.1} parent=53 // loop_footer_branch
                  %568 = sbr.rel target = $region63
                $region68: #{tpu_custom_call.1} parent=53 // loop_exit
                  _
              $region54: #{tpu_custom_call.1} parent=27 // pred_fallthru
                _
            $region28: #{tpu_custom_call.1} parent=23 // pred_fallthru
              _
            // Predicated region
            $region29: #{tpu_custom_call.1} parent=23 // pred_check
              %p120 = pneg %p116
            $region30: #{tpu_custom_call.1} parent=23 // pred_check_branch
              %122 = sbr.rel (%p120) target = $region32
            $region31: #{tpu_custom_call.1} parent=23 // pred_region
              %s123 = sshllo.u32 0, %s112
              loop: start=0, step=1, limit=1
              $region33: #{tpu_custom_call.1} parent=31 // loop_pre_header
                _
              $region34: #{tpu_custom_call.1} parent=31 // loop_header
                %s125 = sphi 0, %s129
                %p126 = scmp.ge.s32.totalorder %s125, 1
                %s130 = sphi %s111, %s111
                %s131 = sphi %s100, %s100
              $region35: #{tpu_custom_call.1} parent=31 // loop_header_branch
                %128 = sbr.rel (%p126) target = $region39
              $region36: #{tpu_custom_call.1} parent=31 // loop_body
                %v132 = vld [vmem:[%s130] sm:%s123]
                %133 = vst [vmem:[%s131] sm:%s123] %v132
                %v134 = vld [vmem:[%s130 + $0x48] sm:%s123]
                %135 = vst [vmem:[%s131 + $0x40] sm:%s123] %v134
                %v136 = vld [vmem:[%s130 + $0x90] sm:%s123]
                %137 = vst [vmem:[%s131 + $0x80] sm:%s123] %v136
                %v138 = vld [vmem:[%s130 + $0xd8] sm:%s123]
                %139 = vst [vmem:[%s131 + $0xc0] sm:%s123] %v138
                %v140 = vld [vmem:[%s130 + $0x120] sm:%s123]
                %141 = vst [vmem:[%s131 + $0x100] sm:%s123] %v140
                %v142 = vld [vmem:[%s130 + $0x168] sm:%s123]
                %143 = vst [vmem:[%s131 + $0x140] sm:%s123] %v142
                %v144 = vld [vmem:[%s130 + $0x1b0] sm:%s123]
                %145 = vst [vmem:[%s131 + $0x180] sm:%s123] %v144
                %v146 = vld [vmem:[%s130 + $0x1f8] sm:%s123]
                %147 = vst [vmem:[%s131 + $0x1c0] sm:%s123] %v146
                %v148 = vld [vmem:[%s130 + $0x240] sm:%s123]
                %149 = vst [vmem:[%s131 + $0x200] sm:%s123] %v148
                %v150 = vld [vmem:[%s130 + $0x288] sm:%s123]
                %151 = vst [vmem:[%s131 + $0x240] sm:%s123] %v150
                %v152 = vld [vmem:[%s130 + $0x2d0] sm:%s123]
                %153 = vst [vmem:[%s131 + $0x280] sm:%s123] %v152
                %v154 = vld [vmem:[%s130 + $0x318] sm:%s123]
                %155 = vst [vmem:[%s131 + $0x2c0] sm:%s123] %v154
                %v156 = vld [vmem:[%s130 + $0x360] sm:%s123]
                %157 = vst [vmem:[%s131 + $0x300] sm:%s123] %v156
                %v158 = vld [vmem:[%s130 + $0x3a8] sm:%s123]
                %159 = vst [vmem:[%s131 + $0x340] sm:%s123] %v158
                %v160 = vld [vmem:[%s130 + $0x3f0] sm:%s123]
                %161 = vst [vmem:[%s131 + $0x380] sm:%s123] %v160
                %v162 = vld [vmem:[%s130 + $0x438] sm:%s123]
                %163 = vst [vmem:[%s131 + $0x3c0] sm:%s123] %v162
                %v164 = vld [vmem:[%s130 + $0x480] sm:%s123]
                %165 = vst [vmem:[%s131 + $0x400] sm:%s123] %v164
                %v166 = vld [vmem:[%s130 + $0x4c8] sm:%s123]
                %167 = vst [vmem:[%s131 + $0x440] sm:%s123] %v166
                %v168 = vld [vmem:[%s130 + $0x510] sm:%s123]
                %169 = vst [vmem:[%s131 + $0x480] sm:%s123] %v168
                %v170 = vld [vmem:[%s130 + $0x558] sm:%s123]
                %171 = vst [vmem:[%s131 + $0x4c0] sm:%s123] %v170
                %v172 = vld [vmem:[%s130 + $0x5a0] sm:%s123]
                %173 = vst [vmem:[%s131 + $0x500] sm:%s123] %v172
                %v174 = vld [vmem:[%s130 + $0x5e8] sm:%s123]
                %175 = vst [vmem:[%s131 + $0x540] sm:%s123] %v174
                %v176 = vld [vmem:[%s130 + $0x630] sm:%s123]
                %177 = vst [vmem:[%s131 + $0x580] sm:%s123] %v176
                %v178 = vld [vmem:[%s130 + $0x678] sm:%s123]
                %179 = vst [vmem:[%s131 + $0x5c0] sm:%s123] %v178
                %v180 = vld [vmem:[%s130 + $0x6c0] sm:%s123]
                %181 = vst [vmem:[%s131 + $0x600] sm:%s123] %v180
                %v182 = vld [vmem:[%s130 + $0x708] sm:%s123]
                %183 = vst [vmem:[%s131 + $0x640] sm:%s123] %v182
                %v184 = vld [vmem:[%s130 + $0x750] sm:%s123]
                %185 = vst [vmem:[%s131 + $0x680] sm:%s123] %v184
                %v186 = vld [vmem:[%s130 + $0x798] sm:%s123]
                %187 = vst [vmem:[%s131 + $0x6c0] sm:%s123] %v186
                %v188 = vld [vmem:[%s130 + $0x7e0] sm:%s123]
                %189 = vst [vmem:[%s131 + $0x700] sm:%s123] %v188
                %v190 = vld [vmem:[%s130 + $0x828] sm:%s123]
                %191 = vst [vmem:[%s131 + $0x740] sm:%s123] %v190
                %v192 = vld [vmem:[%s130 + $0x870] sm:%s123]
                %193 = vst [vmem:[%s131 + $0x780] sm:%s123] %v192
                %v194 = vld [vmem:[%s130 + $0x8b8] sm:%s123]
                %195 = vst [vmem:[%s131 + $0x7c0] sm:%s123] %v194
                %v196 = vld [vmem:[%s130 + $0x900] sm:%s123]
                %197 = vst [vmem:[%s131 + $0x800] sm:%s123] %v196
                %v198 = vld [vmem:[%s130 + $0x948] sm:%s123]
                %199 = vst [vmem:[%s131 + $0x840] sm:%s123] %v198
                %v200 = vld [vmem:[%s130 + $0x990] sm:%s123]
                %201 = vst [vmem:[%s131 + $0x880] sm:%s123] %v200
                %v202 = vld [vmem:[%s130 + $0x9d8] sm:%s123]
                %203 = vst [vmem:[%s131 + $0x8c0] sm:%s123] %v202
                %v204 = vld [vmem:[%s130 + $0xa20] sm:%s123]
                %205 = vst [vmem:[%s131 + $0x900] sm:%s123] %v204
                %v206 = vld [vmem:[%s130 + $0xa68] sm:%s123]
                %207 = vst [vmem:[%s131 + $0x940] sm:%s123] %v206
                %v208 = vld [vmem:[%s130 + $0xab0] sm:%s123]
                %209 = vst [vmem:[%s131 + $0x980] sm:%s123] %v208
                %v210 = vld [vmem:[%s130 + $0xaf8] sm:%s123]
                %211 = vst [vmem:[%s131 + $0x9c0] sm:%s123] %v210
                %v212 = vld [vmem:[%s130 + $0xb40] sm:%s123]
                %213 = vst [vmem:[%s131 + $0xa00] sm:%s123] %v212
                %v214 = vld [vmem:[%s130 + $0xb88] sm:%s123]
                %215 = vst [vmem:[%s131 + $0xa40] sm:%s123] %v214
                %v216 = vld [vmem:[%s130 + $0xbd0] sm:%s123]
                %217 = vst [vmem:[%s131 + $0xa80] sm:%s123] %v216
                %v218 = vld [vmem:[%s130 + $0xc18] sm:%s123]
                %219 = vst [vmem:[%s131 + $0xac0] sm:%s123] %v218
                %v220 = vld [vmem:[%s130 + $0xc60] sm:%s123]
                %221 = vst [vmem:[%s131 + $0xb00] sm:%s123] %v220
                %v222 = vld [vmem:[%s130 + $0xca8] sm:%s123]
                %223 = vst [vmem:[%s131 + $0xb40] sm:%s123] %v222
                %v224 = vld [vmem:[%s130 + $0xcf0] sm:%s123]
                %225 = vst [vmem:[%s131 + $0xb80] sm:%s123] %v224
                %v226 = vld [vmem:[%s130 + $0xd38] sm:%s123]
                %227 = vst [vmem:[%s131 + $0xbc0] sm:%s123] %v226
                %v228 = vld [vmem:[%s130 + $0xd80] sm:%s123]
                %229 = vst [vmem:[%s131 + $0xc00] sm:%s123] %v228
                %v230 = vld [vmem:[%s130 + $0xdc8] sm:%s123]
                %231 = vst [vmem:[%s131 + $0xc40] sm:%s123] %v230
                %v232 = vld [vmem:[%s130 + $0xe10] sm:%s123]
                %233 = vst [vmem:[%s131 + $0xc80] sm:%s123] %v232
                %v234 = vld [vmem:[%s130 + $0xe58] sm:%s123]
                %235 = vst [vmem:[%s131 + $0xcc0] sm:%s123] %v234
                %v236 = vld [vmem:[%s130 + $0xea0] sm:%s123]
                %237 = vst [vmem:[%s131 + $0xd00] sm:%s123] %v236
                %v238 = vld [vmem:[%s130 + $0xee8] sm:%s123]
                %239 = vst [vmem:[%s131 + $0xd40] sm:%s123] %v238
                %v240 = vld [vmem:[%s130 + $0xf30] sm:%s123]
                %241 = vst [vmem:[%s131 + $0xd80] sm:%s123] %v240
                %v242 = vld [vmem:[%s130 + $0xf78] sm:%s123]
                %243 = vst [vmem:[%s131 + $0xdc0] sm:%s123] %v242
                %v244 = vld [vmem:[%s130 + $0xfc0] sm:%s123]
                %245 = vst [vmem:[%s131 + $0xe00] sm:%s123] %v244
                %v246 = vld [vmem:[%s130 + $0x1008] sm:%s123]
                %247 = vst [vmem:[%s131 + $0xe40] sm:%s123] %v246
                %v248 = vld [vmem:[%s130 + $0x1050] sm:%s123]
                %249 = vst [vmem:[%s131 + $0xe80] sm:%s123] %v248
                %v250 = vld [vmem:[%s130 + $0x1098] sm:%s123]
                %251 = vst [vmem:[%s131 + $0xec0] sm:%s123] %v250
                %v252 = vld [vmem:[%s130 + $0x10e0] sm:%s123]
                %253 = vst [vmem:[%s131 + $0xf00] sm:%s123] %v252
                %v254 = vld [vmem:[%s130 + $0x1128] sm:%s123]
                %255 = vst [vmem:[%s131 + $0xf40] sm:%s123] %v254
                %v256 = vld [vmem:[%s130 + $0x1170] sm:%s123]
                %257 = vst [vmem:[%s131 + $0xf80] sm:%s123] %v256
                %v258 = vld [vmem:[%s130 + $0x11b8] sm:%s123]
                %259 = vst [vmem:[%s131 + $0xfc0] sm:%s123] %v258
              $region37: #{tpu_custom_call.1} parent=31 // loop_footer
                %s129 = sadd.s32 1, %s125
              $region38: #{tpu_custom_call.1} parent=31 // loop_footer_branch
                %124 = sbr.rel target = $region34
              $region39: #{tpu_custom_call.1} parent=31 // loop_exit
                _
            $region32: #{tpu_custom_call.1} parent=23 // pred_fallthru
              _
          $region24: #{tpu_custom_call.1} parent=19 // pred_fallthru
            _
          %704 = vnop
        $region20: #{tpu_custom_call.1} parent=15 // pred_fallthru
          _
      $region16: #{tpu_custom_call.1} parent=5 // pred_fallthru
        _
      %p705 = scmp.le.s32.totalorder 1, %s7
      %p706 = scmp.lt.s32.totalorder %s7, 5
      %p707 = pnand %p705, %p706
      %p708 = pneg %p707
      // Predicated region
      $region69: #{tpu_custom_call.1} parent=5 // pred_check
        _
      $region70: #{tpu_custom_call.1} parent=5 // pred_check_branch
        %710 = sbr.rel (%p707) target = $region72
      $region71: #{tpu_custom_call.1} parent=5 // pred_region
        %s711 = ssub.s32 %s7, 1
        %s712 = sand.u32 %s34, 1
        %s713 = sand.u32 %s34, 1
        %s714 = smul.addr %s713, 4096
        %s715 = scalar_lea.vmem [#allocation2], %s714
        // Predicated region
        $region73: #{tpu_custom_call.1} parent=71 // pred_check
          %p716 = pneg %p47
        $region74: #{tpu_custom_call.1} parent=71 // pred_check_branch
          %718 = sbr.rel (%p716) target = $region76
        $region75: #{tpu_custom_call.1} parent=71 // pred_region
          _
        $region76: #{tpu_custom_call.1} parent=71 // pred_fallthru
          _
        %s719 = sand.u32 %s34, 1
        %s720 = sand.u32 %s34, 1
        %s721 = smul.addr %s720, 4096
        %s722 = scalar_lea.vmem [#allocation2], %s721
        %p723 = pneg %p47
        %p724 = pneg %p44
        %p725 = pneg %p75
        %p726 = pneg %p72
        %s727 = sand.u32 %s62, 1
        %s728 = sand.u32 %s62, 1
        %s729 = smul.addr %s728, 4096
        %s730 = scalar_lea.vmem [#allocation3], %s729
        %s731 = smul.u32 64, %s16
        %s732 = smul.u32 8, %s17
        %s733 = ssub.s32 9, %s732
        %p734 = scmp.lt.s32.totalorder %s733, 8
        %s735 = scalar_select %p734, %s733, 8
        %s736 = smul.u32 8192, %s735
        %s737 = smul.u32 64, %s16
        %s738 = smul.u32 8, %s17
        %s739 = ssub.s32 9, %s738
        %p740 = scmp.lt.s32.totalorder %s739, 8
        %s741 = scalar_select %p740, %s739, 8
        %s742 = smul.u32 8192, %s741
        %v743 = vld [vmem:[%s715] sm:$0xff]
        %v744 = vld [vmem:[%s715 + $0x8] sm:$0xff]
        %v745 = vld [vmem:[%s715 + $0x10] sm:$0xff]
        %v746 = vld [vmem:[%s715 + $0x18] sm:$0xff]
        %v747 = vld [vmem:[%s715 + $0x20] sm:$0xff]
        %v748 = vld [vmem:[%s715 + $0x28] sm:$0xff]
        %v749 = vld [vmem:[%s715 + $0x30] sm:$0xff]
        %v750 = vld [vmem:[%s715 + $0x38] sm:$0xff]
        %v751 = vld [vmem:[%s715 + $0x40] sm:$0xff]
        %v752 = vld [vmem:[%s715 + $0x48] sm:$0xff]
        %v753 = vld [vmem:[%s715 + $0x50] sm:$0xff]
        %v754 = vld [vmem:[%s715 + $0x58] sm:$0xff]
        %v755 = vld [vmem:[%s715 + $0x60] sm:$0xff]
        %v756 = vld [vmem:[%s715 + $0x68] sm:$0xff]
        %v757 = vld [vmem:[%s715 + $0x70] sm:$0xff]
        %v758 = vld [vmem:[%s715 + $0x78] sm:$0xff]
        %v759 = vld [vmem:[%s715 + $0x80] sm:$0xff]
        %v760 = vld [vmem:[%s715 + $0x88] sm:$0xff]
        %v761 = vld [vmem:[%s715 + $0x90] sm:$0xff]
        %v762 = vld [vmem:[%s715 + $0x98] sm:$0xff]
        %v763 = vld [vmem:[%s715 + $0xa0] sm:$0xff]
        %v764 = vld [vmem:[%s715 + $0xa8] sm:$0xff]
        %v765 = vld [vmem:[%s715 + $0xb0] sm:$0xff]
        %v766 = vld [vmem:[%s715 + $0xb8] sm:$0xff]
        %v767 = vld [vmem:[%s715 + $0xc0] sm:$0xff]
        %v768 = vld [vmem:[%s715 + $0xc8] sm:$0xff]
        %v769 = vld [vmem:[%s715 + $0xd0] sm:$0xff]
        %v770 = vld [vmem:[%s715 + $0xd8] sm:$0xff]
        %v771 = vld [vmem:[%s715 + $0xe0] sm:$0xff]
        %v772 = vld [vmem:[%s715 + $0xe8] sm:$0xff]
        %v773 = vld [vmem:[%s715 + $0xf0] sm:$0xff]
        %v774 = vld [vmem:[%s715 + $0xf8] sm:$0xff]
        %v775 = vld [vmem:[%s715 + $0x100] sm:$0xff]
        %v776 = vld [vmem:[%s715 + $0x108] sm:$0xff]
        %v777 = vld [vmem:[%s715 + $0x110] sm:$0xff]
        %v778 = vld [vmem:[%s715 + $0x118] sm:$0xff]
        %v779 = vld [vmem:[%s715 + $0x120] sm:$0xff]
        %v780 = vld [vmem:[%s715 + $0x128] sm:$0xff]
        %v781 = vld [vmem:[%s715 + $0x130] sm:$0xff]
        %v782 = vld [vmem:[%s715 + $0x138] sm:$0xff]
        %v783 = vld [vmem:[%s715 + $0x140] sm:$0xff]
        %v784 = vld [vmem:[%s715 + $0x148] sm:$0xff]
        %v785 = vld [vmem:[%s715 + $0x150] sm:$0xff]
        %v786 = vld [vmem:[%s715 + $0x158] sm:$0xff]
        %v787 = vld [vmem:[%s715 + $0x160] sm:$0xff]
        %v788 = vld [vmem:[%s715 + $0x168] sm:$0xff]
        %v789 = vld [vmem:[%s715 + $0x170] sm:$0xff]
        %v790 = vld [vmem:[%s715 + $0x178] sm:$0xff]
        %v791 = vld [vmem:[%s715 + $0x180] sm:$0xff]
        %v792 = vld [vmem:[%s715 + $0x188] sm:$0xff]
        %v793 = vld [vmem:[%s715 + $0x190] sm:$0xff]
        %v794 = vld [vmem:[%s715 + $0x198] sm:$0xff]
        %v795 = vld [vmem:[%s715 + $0x1a0] sm:$0xff]
        %v796 = vld [vmem:[%s715 + $0x1a8] sm:$0xff]
        %v797 = vld [vmem:[%s715 + $0x1b0] sm:$0xff]
        %v798 = vld [vmem:[%s715 + $0x1b8] sm:$0xff]
        %v799 = vld [vmem:[%s715 + $0x1c0] sm:$0xff]
        %v800 = vld [vmem:[%s715 + $0x1c8] sm:$0xff]
        %v801 = vld [vmem:[%s715 + $0x1d0] sm:$0xff]
        %v802 = vld [vmem:[%s715 + $0x1d8] sm:$0xff]
        %v803 = vld [vmem:[%s715 + $0x1e0] sm:$0xff]
        %v804 = vld [vmem:[%s715 + $0x1e8] sm:$0xff]
        %v805 = vld [vmem:[%s715 + $0x1f0] sm:$0xff]
        %v806 = vld [vmem:[%s715 + $0x1f8] sm:$0xff]
        %v807 = vld [vmem:[%s715 + $0x200] sm:$0xff]
        %v808 = vld [vmem:[%s715 + $0x208] sm:$0xff]
        %v809 = vld [vmem:[%s715 + $0x210] sm:$0xff]
        %v810 = vld [vmem:[%s715 + $0x218] sm:$0xff]
        %v811 = vld [vmem:[%s715 + $0x220] sm:$0xff]
        %v812 = vld [vmem:[%s715 + $0x228] sm:$0xff]
        %v813 = vld [vmem:[%s715 + $0x230] sm:$0xff]
        %v814 = vld [vmem:[%s715 + $0x238] sm:$0xff]
        %v815 = vld [vmem:[%s715 + $0x240] sm:$0xff]
        %v816 = vld [vmem:[%s715 + $0x248] sm:$0xff]
        %v817 = vld [vmem:[%s715 + $0x250] sm:$0xff]
        %v818 = vld [vmem:[%s715 + $0x258] sm:$0xff]
        %v819 = vld [vmem:[%s715 + $0x260] sm:$0xff]
        %v820 = vld [vmem:[%s715 + $0x268] sm:$0xff]
        %v821 = vld [vmem:[%s715 + $0x270] sm:$0xff]
        %v822 = vld [vmem:[%s715 + $0x278] sm:$0xff]
        %v823 = vld [vmem:[%s715 + $0x280] sm:$0xff]
        %v824 = vld [vmem:[%s715 + $0x288] sm:$0xff]
        %v825 = vld [vmem:[%s715 + $0x290] sm:$0xff]
        %v826 = vld [vmem:[%s715 + $0x298] sm:$0xff]
        %v827 = vld [vmem:[%s715 + $0x2a0] sm:$0xff]
        %v828 = vld [vmem:[%s715 + $0x2a8] sm:$0xff]
        %v829 = vld [vmem:[%s715 + $0x2b0] sm:$0xff]
        %v830 = vld [vmem:[%s715 + $0x2b8] sm:$0xff]
        %v831 = vld [vmem:[%s715 + $0x2c0] sm:$0xff]
        %v832 = vld [vmem:[%s715 + $0x2c8] sm:$0xff]
        %v833 = vld [vmem:[%s715 + $0x2d0] sm:$0xff]
        %v834 = vld [vmem:[%s715 + $0x2d8] sm:$0xff]
        %v835 = vld [vmem:[%s715 + $0x2e0] sm:$0xff]
        %v836 = vld [vmem:[%s715 + $0x2e8] sm:$0xff]
        %v837 = vld [vmem:[%s715 + $0x2f0] sm:$0xff]
        %v838 = vld [vmem:[%s715 + $0x2f8] sm:$0xff]
        %v839 = vld [vmem:[%s715 + $0x300] sm:$0xff]
        %v840 = vld [vmem:[%s715 + $0x308] sm:$0xff]
        %v841 = vld [vmem:[%s715 + $0x310] sm:$0xff]
        %v842 = vld [vmem:[%s715 + $0x318] sm:$0xff]
        %v843 = vld [vmem:[%s715 + $0x320] sm:$0xff]
        %v844 = vld [vmem:[%s715 + $0x328] sm:$0xff]
        %v845 = vld [vmem:[%s715 + $0x330] sm:$0xff]
        %v846 = vld [vmem:[%s715 + $0x338] sm:$0xff]
        %v847 = vld [vmem:[%s715 + $0x340] sm:$0xff]
        %v848 = vld [vmem:[%s715 + $0x348] sm:$0xff]
        %v849 = vld [vmem:[%s715 + $0x350] sm:$0xff]
        %v850 = vld [vmem:[%s715 + $0x358] sm:$0xff]
        %v851 = vld [vmem:[%s715 + $0x360] sm:$0xff]
        %v852 = vld [vmem:[%s715 + $0x368] sm:$0xff]
        %v853 = vld [vmem:[%s715 + $0x370] sm:$0xff]
        %v854 = vld [vmem:[%s715 + $0x378] sm:$0xff]
        %v855 = vld [vmem:[%s715 + $0x380] sm:$0xff]
        %v856 = vld [vmem:[%s715 + $0x388] sm:$0xff]
        %v857 = vld [vmem:[%s715 + $0x390] sm:$0xff]
        %v858 = vld [vmem:[%s715 + $0x398] sm:$0xff]
        %v859 = vld [vmem:[%s715 + $0x3a0] sm:$0xff]
        %v860 = vld [vmem:[%s715 + $0x3a8] sm:$0xff]
        %v861 = vld [vmem:[%s715 + $0x3b0] sm:$0xff]
        %v862 = vld [vmem:[%s715 + $0x3b8] sm:$0xff]
        %v863 = vld [vmem:[%s715 + $0x3c0] sm:$0xff]
        %v864 = vld [vmem:[%s715 + $0x3c8] sm:$0xff]
        %v865 = vld [vmem:[%s715 + $0x3d0] sm:$0xff]
        %v866 = vld [vmem:[%s715 + $0x3d8] sm:$0xff]
        %v867 = vld [vmem:[%s715 + $0x3e0] sm:$0xff]
        %v868 = vld [vmem:[%s715 + $0x3e8] sm:$0xff]
        %v869 = vld [vmem:[%s715 + $0x3f0] sm:$0xff]
        %v870 = vld [vmem:[%s715 + $0x3f8] sm:$0xff]
        %v871 = vld [vmem:[%s715 + $0x400] sm:$0xff]
        %v872 = vld [vmem:[%s715 + $0x408] sm:$0xff]
        %v873 = vld [vmem:[%s715 + $0x410] sm:$0xff]
        %v874 = vld [vmem:[%s715 + $0x418] sm:$0xff]
        %v875 = vld [vmem:[%s715 + $0x420] sm:$0xff]
        %v876 = vld [vmem:[%s715 + $0x428] sm:$0xff]
        %v877 = vld [vmem:[%s715 + $0x430] sm:$0xff]
        %v878 = vld [vmem:[%s715 + $0x438] sm:$0xff]
        %v879 = vld [vmem:[%s715 + $0x440] sm:$0xff]
        %v880 = vld [vmem:[%s715 + $0x448] sm:$0xff]
        %v881 = vld [vmem:[%s715 + $0x450] sm:$0xff]
        %v882 = vld [vmem:[%s715 + $0x458] sm:$0xff]
        %v883 = vld [vmem:[%s715 + $0x460] sm:$0xff]
        %v884 = vld [vmem:[%s715 + $0x468] sm:$0xff]
        %v885 = vld [vmem:[%s715 + $0x470] sm:$0xff]
        %v886 = vld [vmem:[%s715 + $0x478] sm:$0xff]
        %v887 = vld [vmem:[%s715 + $0x480] sm:$0xff]
        %v888 = vld [vmem:[%s715 + $0x488] sm:$0xff]
        %v889 = vld [vmem:[%s715 + $0x490] sm:$0xff]
        %v890 = vld [vmem:[%s715 + $0x498] sm:$0xff]
        %v891 = vld [vmem:[%s715 + $0x4a0] sm:$0xff]
        %v892 = vld [vmem:[%s715 + $0x4a8] sm:$0xff]
        %v893 = vld [vmem:[%s715 + $0x4b0] sm:$0xff]
        %v894 = vld [vmem:[%s715 + $0x4b8] sm:$0xff]
        %v895 = vld [vmem:[%s715 + $0x4c0] sm:$0xff]
        %v896 = vld [vmem:[%s715 + $0x4c8] sm:$0xff]
        %v897 = vld [vmem:[%s715 + $0x4d0] sm:$0xff]
        %v898 = vld [vmem:[%s715 + $0x4d8] sm:$0xff]
        %v899 = vld [vmem:[%s715 + $0x4e0] sm:$0xff]
        %v900 = vld [vmem:[%s715 + $0x4e8] sm:$0xff]
        %v901 = vld [vmem:[%s715 + $0x4f0] sm:$0xff]
        %v902 = vld [vmem:[%s715 + $0x4f8] sm:$0xff]
        %v903 = vld [vmem:[%s715 + $0x500] sm:$0xff]
        %v904 = vld [vmem:[%s715 + $0x508] sm:$0xff]
        %v905 = vld [vmem:[%s715 + $0x510] sm:$0xff]
        %v906 = vld [vmem:[%s715 + $0x518] sm:$0xff]
        %v907 = vld [vmem:[%s715 + $0x520] sm:$0xff]
        %v908 = vld [vmem:[%s715 + $0x528] sm:$0xff]
        %v909 = vld [vmem:[%s715 + $0x530] sm:$0xff]
        %v910 = vld [vmem:[%s715 + $0x538] sm:$0xff]
        %v911 = vld [vmem:[%s715 + $0x540] sm:$0xff]
        %v912 = vld [vmem:[%s715 + $0x548] sm:$0xff]
        %v913 = vld [vmem:[%s715 + $0x550] sm:$0xff]
        %v914 = vld [vmem:[%s715 + $0x558] sm:$0xff]
        %v915 = vld [vmem:[%s715 + $0x560] sm:$0xff]
        %v916 = vld [vmem:[%s715 + $0x568] sm:$0xff]
        %v917 = vld [vmem:[%s715 + $0x570] sm:$0xff]
        %v918 = vld [vmem:[%s715 + $0x578] sm:$0xff]
        %v919 = vld [vmem:[%s715 + $0x580] sm:$0xff]
        %v920 = vld [vmem:[%s715 + $0x588] sm:$0xff]
        %v921 = vld [vmem:[%s715 + $0x590] sm:$0xff]
        %v922 = vld [vmem:[%s715 + $0x598] sm:$0xff]
        %v923 = vld [vmem:[%s715 + $0x5a0] sm:$0xff]
        %v924 = vld [vmem:[%s715 + $0x5a8] sm:$0xff]
        %v925 = vld [vmem:[%s715 + $0x5b0] sm:$0xff]
        %v926 = vld [vmem:[%s715 + $0x5b8] sm:$0xff]
        %v927 = vld [vmem:[%s715 + $0x5c0] sm:$0xff]
        %v928 = vld [vmem:[%s715 + $0x5c8] sm:$0xff]
        %v929 = vld [vmem:[%s715 + $0x5d0] sm:$0xff]
        %v930 = vld [vmem:[%s715 + $0x5d8] sm:$0xff]
        %v931 = vld [vmem:[%s715 + $0x5e0] sm:$0xff]
        %v932 = vld [vmem:[%s715 + $0x5e8] sm:$0xff]
        %v933 = vld [vmem:[%s715 + $0x5f0] sm:$0xff]
        %v934 = vld [vmem:[%s715 + $0x5f8] sm:$0xff]
        %v935 = vld [vmem:[%s715 + $0x600] sm:$0xff]
        %v936 = vld [vmem:[%s715 + $0x608] sm:$0xff]
        %v937 = vld [vmem:[%s715 + $0x610] sm:$0xff]
        %v938 = vld [vmem:[%s715 + $0x618] sm:$0xff]
        %v939 = vld [vmem:[%s715 + $0x620] sm:$0xff]
        %v940 = vld [vmem:[%s715 + $0x628] sm:$0xff]
        %v941 = vld [vmem:[%s715 + $0x630] sm:$0xff]
        %v942 = vld [vmem:[%s715 + $0x638] sm:$0xff]
        %v943 = vld [vmem:[%s715 + $0x640] sm:$0xff]
        %v944 = vld [vmem:[%s715 + $0x648] sm:$0xff]
        %v945 = vld [vmem:[%s715 + $0x650] sm:$0xff]
        %v946 = vld [vmem:[%s715 + $0x658] sm:$0xff]
        %v947 = vld [vmem:[%s715 + $0x660] sm:$0xff]
        %v948 = vld [vmem:[%s715 + $0x668] sm:$0xff]
        %v949 = vld [vmem:[%s715 + $0x670] sm:$0xff]
        %v950 = vld [vmem:[%s715 + $0x678] sm:$0xff]
        %v951 = vld [vmem:[%s715 + $0x680] sm:$0xff]
        %v952 = vld [vmem:[%s715 + $0x688] sm:$0xff]
        %v953 = vld [vmem:[%s715 + $0x690] sm:$0xff]
        %v954 = vld [vmem:[%s715 + $0x698] sm:$0xff]
        %v955 = vld [vmem:[%s715 + $0x6a0] sm:$0xff]
        %v956 = vld [vmem:[%s715 + $0x6a8] sm:$0xff]
        %v957 = vld [vmem:[%s715 + $0x6b0] sm:$0xff]
        %v958 = vld [vmem:[%s715 + $0x6b8] sm:$0xff]
        %v959 = vld [vmem:[%s715 + $0x6c0] sm:$0xff]
        %v960 = vld [vmem:[%s715 + $0x6c8] sm:$0xff]
        %v961 = vld [vmem:[%s715 + $0x6d0] sm:$0xff]
        %v962 = vld [vmem:[%s715 + $0x6d8] sm:$0xff]
        %v963 = vld [vmem:[%s715 + $0x6e0] sm:$0xff]
        %v964 = vld [vmem:[%s715 + $0x6e8] sm:$0xff]
        %v965 = vld [vmem:[%s715 + $0x6f0] sm:$0xff]
        %v966 = vld [vmem:[%s715 + $0x6f8] sm:$0xff]
        %v967 = vld [vmem:[%s715 + $0x700] sm:$0xff]
        %v968 = vld [vmem:[%s715 + $0x708] sm:$0xff]
        %v969 = vld [vmem:[%s715 + $0x710] sm:$0xff]
        %v970 = vld [vmem:[%s715 + $0x718] sm:$0xff]
        %v971 = vld [vmem:[%s715 + $0x720] sm:$0xff]
        %v972 = vld [vmem:[%s715 + $0x728] sm:$0xff]
        %v973 = vld [vmem:[%s715 + $0x730] sm:$0xff]
        %v974 = vld [vmem:[%s715 + $0x738] sm:$0xff]
        %v975 = vld [vmem:[%s715 + $0x740] sm:$0xff]
        %v976 = vld [vmem:[%s715 + $0x748] sm:$0xff]
        %v977 = vld [vmem:[%s715 + $0x750] sm:$0xff]
        %v978 = vld [vmem:[%s715 + $0x758] sm:$0xff]
        %v979 = vld [vmem:[%s715 + $0x760] sm:$0xff]
        %v980 = vld [vmem:[%s715 + $0x768] sm:$0xff]
        %v981 = vld [vmem:[%s715 + $0x770] sm:$0xff]
        %v982 = vld [vmem:[%s715 + $0x778] sm:$0xff]
        %v983 = vld [vmem:[%s715 + $0x780] sm:$0xff]
        %v984 = vld [vmem:[%s715 + $0x788] sm:$0xff]
        %v985 = vld [vmem:[%s715 + $0x790] sm:$0xff]
        %v986 = vld [vmem:[%s715 + $0x798] sm:$0xff]
        %v987 = vld [vmem:[%s715 + $0x7a0] sm:$0xff]
        %v988 = vld [vmem:[%s715 + $0x7a8] sm:$0xff]
        %v989 = vld [vmem:[%s715 + $0x7b0] sm:$0xff]
        %v990 = vld [vmem:[%s715 + $0x7b8] sm:$0xff]
        %v991 = vld [vmem:[%s715 + $0x7c0] sm:$0xff]
        %v992 = vld [vmem:[%s715 + $0x7c8] sm:$0xff]
        %v993 = vld [vmem:[%s715 + $0x7d0] sm:$0xff]
        %v994 = vld [vmem:[%s715 + $0x7d8] sm:$0xff]
        %v995 = vld [vmem:[%s715 + $0x7e0] sm:$0xff]
        %v996 = vld [vmem:[%s715 + $0x7e8] sm:$0xff]
        %v997 = vld [vmem:[%s715 + $0x7f0] sm:$0xff]
        %v998 = vld [vmem:[%s715 + $0x7f8] sm:$0xff]
        %v999 = vld [vmem:[%s715 + $0x800] sm:$0xff]
        %v1000 = vld [vmem:[%s715 + $0x808] sm:$0xff]
        %v1001 = vld [vmem:[%s715 + $0x810] sm:$0xff]
        %v1002 = vld [vmem:[%s715 + $0x818] sm:$0xff]
        %v1003 = vld [vmem:[%s715 + $0x820] sm:$0xff]
        %v1004 = vld [vmem:[%s715 + $0x828] sm:$0xff]
        %v1005 = vld [vmem:[%s715 + $0x830] sm:$0xff]
        %v1006 = vld [vmem:[%s715 + $0x838] sm:$0xff]
        %v1007 = vld [vmem:[%s715 + $0x840] sm:$0xff]
        %v1008 = vld [vmem:[%s715 + $0x848] sm:$0xff]
        %v1009 = vld [vmem:[%s715 + $0x850] sm:$0xff]
        %v1010 = vld [vmem:[%s715 + $0x858] sm:$0xff]
        %v1011 = vld [vmem:[%s715 + $0x860] sm:$0xff]
        %v1012 = vld [vmem:[%s715 + $0x868] sm:$0xff]
        %v1013 = vld [vmem:[%s715 + $0x870] sm:$0xff]
        %v1014 = vld [vmem:[%s715 + $0x878] sm:$0xff]
        %v1015 = vld [vmem:[%s715 + $0x880] sm:$0xff]
        %v1016 = vld [vmem:[%s715 + $0x888] sm:$0xff]
        %v1017 = vld [vmem:[%s715 + $0x890] sm:$0xff]
        %v1018 = vld [vmem:[%s715 + $0x898] sm:$0xff]
        %v1019 = vld [vmem:[%s715 + $0x8a0] sm:$0xff]
        %v1020 = vld [vmem:[%s715 + $0x8a8] sm:$0xff]
        %v1021 = vld [vmem:[%s715 + $0x8b0] sm:$0xff]
        %v1022 = vld [vmem:[%s715 + $0x8b8] sm:$0xff]
        %v1023 = vld [vmem:[%s715 + $0x8c0] sm:$0xff]
        %v1024 = vld [vmem:[%s715 + $0x8c8] sm:$0xff]
        %v1025 = vld [vmem:[%s715 + $0x8d0] sm:$0xff]
        %v1026 = vld [vmem:[%s715 + $0x8d8] sm:$0xff]
        %v1027 = vld [vmem:[%s715 + $0x8e0] sm:$0xff]
        %v1028 = vld [vmem:[%s715 + $0x8e8] sm:$0xff]
        %v1029 = vld [vmem:[%s715 + $0x8f0] sm:$0xff]
        %v1030 = vld [vmem:[%s715 + $0x8f8] sm:$0xff]
        %v1031 = vld [vmem:[%s715 + $0x900] sm:$0xff]
        %v1032 = vld [vmem:[%s715 + $0x908] sm:$0xff]
        %v1033 = vld [vmem:[%s715 + $0x910] sm:$0xff]
        %v1034 = vld [vmem:[%s715 + $0x918] sm:$0xff]
        %v1035 = vld [vmem:[%s715 + $0x920] sm:$0xff]
        %v1036 = vld [vmem:[%s715 + $0x928] sm:$0xff]
        %v1037 = vld [vmem:[%s715 + $0x930] sm:$0xff]
        %v1038 = vld [vmem:[%s715 + $0x938] sm:$0xff]
        %v1039 = vld [vmem:[%s715 + $0x940] sm:$0xff]
        %v1040 = vld [vmem:[%s715 + $0x948] sm:$0xff]
        %v1041 = vld [vmem:[%s715 + $0x950] sm:$0xff]
        %v1042 = vld [vmem:[%s715 + $0x958] sm:$0xff]
        %v1043 = vld [vmem:[%s715 + $0x960] sm:$0xff]
        %v1044 = vld [vmem:[%s715 + $0x968] sm:$0xff]
        %v1045 = vld [vmem:[%s715 + $0x970] sm:$0xff]
        %v1046 = vld [vmem:[%s715 + $0x978] sm:$0xff]
        %v1047 = vld [vmem:[%s715 + $0x980] sm:$0xff]
        %v1048 = vld [vmem:[%s715 + $0x988] sm:$0xff]
        %v1049 = vld [vmem:[%s715 + $0x990] sm:$0xff]
        %v1050 = vld [vmem:[%s715 + $0x998] sm:$0xff]
        %v1051 = vld [vmem:[%s715 + $0x9a0] sm:$0xff]
        %v1052 = vld [vmem:[%s715 + $0x9a8] sm:$0xff]
        %v1053 = vld [vmem:[%s715 + $0x9b0] sm:$0xff]
        %v1054 = vld [vmem:[%s715 + $0x9b8] sm:$0xff]
        %v1055 = vld [vmem:[%s715 + $0x9c0] sm:$0xff]
        %v1056 = vld [vmem:[%s715 + $0x9c8] sm:$0xff]
        %v1057 = vld [vmem:[%s715 + $0x9d0] sm:$0xff]
        %v1058 = vld [vmem:[%s715 + $0x9d8] sm:$0xff]
        %v1059 = vld [vmem:[%s715 + $0x9e0] sm:$0xff]
        %v1060 = vld [vmem:[%s715 + $0x9e8] sm:$0xff]
        %v1061 = vld [vmem:[%s715 + $0x9f0] sm:$0xff]
        %v1062 = vld [vmem:[%s715 + $0x9f8] sm:$0xff]
        %v1063 = vld [vmem:[%s715 + $0xa00] sm:$0xff]
        %v1064 = vld [vmem:[%s715 + $0xa08] sm:$0xff]
        %v1065 = vld [vmem:[%s715 + $0xa10] sm:$0xff]
        %v1066 = vld [vmem:[%s715 + $0xa18] sm:$0xff]
        %v1067 = vld [vmem:[%s715 + $0xa20] sm:$0xff]
        %v1068 = vld [vmem:[%s715 + $0xa28] sm:$0xff]
        %v1069 = vld [vmem:[%s715 + $0xa30] sm:$0xff]
        %v1070 = vld [vmem:[%s715 + $0xa38] sm:$0xff]
        %v1071 = vld [vmem:[%s715 + $0xa40] sm:$0xff]
        %v1072 = vld [vmem:[%s715 + $0xa48] sm:$0xff]
        %v1073 = vld [vmem:[%s715 + $0xa50] sm:$0xff]
        %v1074 = vld [vmem:[%s715 + $0xa58] sm:$0xff]
        %v1075 = vld [vmem:[%s715 + $0xa60] sm:$0xff]
        %v1076 = vld [vmem:[%s715 + $0xa68] sm:$0xff]
        %v1077 = vld [vmem:[%s715 + $0xa70] sm:$0xff]
        %v1078 = vld [vmem:[%s715 + $0xa78] sm:$0xff]
        %v1079 = vld [vmem:[%s715 + $0xa80] sm:$0xff]
        %v1080 = vld [vmem:[%s715 + $0xa88] sm:$0xff]
        %v1081 = vld [vmem:[%s715 + $0xa90] sm:$0xff]
        %v1082 = vld [vmem:[%s715 + $0xa98] sm:$0xff]
        %v1083 = vld [vmem:[%s715 + $0xaa0] sm:$0xff]
        %v1084 = vld [vmem:[%s715 + $0xaa8] sm:$0xff]
        %v1085 = vld [vmem:[%s715 + $0xab0] sm:$0xff]
        %v1086 = vld [vmem:[%s715 + $0xab8] sm:$0xff]
        %v1087 = vld [vmem:[%s715 + $0xac0] sm:$0xff]
        %v1088 = vld [vmem:[%s715 + $0xac8] sm:$0xff]
        %v1089 = vld [vmem:[%s715 + $0xad0] sm:$0xff]
        %v1090 = vld [vmem:[%s715 + $0xad8] sm:$0xff]
        %v1091 = vld [vmem:[%s715 + $0xae0] sm:$0xff]
        %v1092 = vld [vmem:[%s715 + $0xae8] sm:$0xff]
        %v1093 = vld [vmem:[%s715 + $0xaf0] sm:$0xff]
        %v1094 = vld [vmem:[%s715 + $0xaf8] sm:$0xff]
        %v1095 = vld [vmem:[%s715 + $0xb00] sm:$0xff]
        %v1096 = vld [vmem:[%s715 + $0xb08] sm:$0xff]
        %v1097 = vld [vmem:[%s715 + $0xb10] sm:$0xff]
        %v1098 = vld [vmem:[%s715 + $0xb18] sm:$0xff]
        %v1099 = vld [vmem:[%s715 + $0xb20] sm:$0xff]
        %v1100 = vld [vmem:[%s715 + $0xb28] sm:$0xff]
        %v1101 = vld [vmem:[%s715 + $0xb30] sm:$0xff]
        %v1102 = vld [vmem:[%s715 + $0xb38] sm:$0xff]
        %v1103 = vld [vmem:[%s715 + $0xb40] sm:$0xff]
        %v1104 = vld [vmem:[%s715 + $0xb48] sm:$0xff]
        %v1105 = vld [vmem:[%s715 + $0xb50] sm:$0xff]
        %v1106 = vld [vmem:[%s715 + $0xb58] sm:$0xff]
        %v1107 = vld [vmem:[%s715 + $0xb60] sm:$0xff]
        %v1108 = vld [vmem:[%s715 + $0xb68] sm:$0xff]
        %v1109 = vld [vmem:[%s715 + $0xb70] sm:$0xff]
        %v1110 = vld [vmem:[%s715 + $0xb78] sm:$0xff]
        %v1111 = vld [vmem:[%s715 + $0xb80] sm:$0xff]
        %v1112 = vld [vmem:[%s715 + $0xb88] sm:$0xff]
        %v1113 = vld [vmem:[%s715 + $0xb90] sm:$0xff]
        %v1114 = vld [vmem:[%s715 + $0xb98] sm:$0xff]
        %v1115 = vld [vmem:[%s715 + $0xba0] sm:$0xff]
        %v1116 = vld [vmem:[%s715 + $0xba8] sm:$0xff]
        %v1117 = vld [vmem:[%s715 + $0xbb0] sm:$0xff]
        %v1118 = vld [vmem:[%s715 + $0xbb8] sm:$0xff]
        %v1119 = vld [vmem:[%s715 + $0xbc0] sm:$0xff]
        %v1120 = vld [vmem:[%s715 + $0xbc8] sm:$0xff]
        %v1121 = vld [vmem:[%s715 + $0xbd0] sm:$0xff]
        %v1122 = vld [vmem:[%s715 + $0xbd8] sm:$0xff]
        %v1123 = vld [vmem:[%s715 + $0xbe0] sm:$0xff]
        %v1124 = vld [vmem:[%s715 + $0xbe8] sm:$0xff]
        %v1125 = vld [vmem:[%s715 + $0xbf0] sm:$0xff]
        %v1126 = vld [vmem:[%s715 + $0xbf8] sm:$0xff]
        %v1127 = vld [vmem:[%s715 + $0xc00] sm:$0xff]
        %v1128 = vld [vmem:[%s715 + $0xc08] sm:$0xff]
        %v1129 = vld [vmem:[%s715 + $0xc10] sm:$0xff]
        %v1130 = vld [vmem:[%s715 + $0xc18] sm:$0xff]
        %v1131 = vld [vmem:[%s715 + $0xc20] sm:$0xff]
        %v1132 = vld [vmem:[%s715 + $0xc28] sm:$0xff]
        %v1133 = vld [vmem:[%s715 + $0xc30] sm:$0xff]
        %v1134 = vld [vmem:[%s715 + $0xc38] sm:$0xff]
        %v1135 = vld [vmem:[%s715 + $0xc40] sm:$0xff]
        %v1136 = vld [vmem:[%s715 + $0xc48] sm:$0xff]
        %v1137 = vld [vmem:[%s715 + $0xc50] sm:$0xff]
        %v1138 = vld [vmem:[%s715 + $0xc58] sm:$0xff]
        %v1139 = vld [vmem:[%s715 + $0xc60] sm:$0xff]
        %v1140 = vld [vmem:[%s715 + $0xc68] sm:$0xff]
        %v1141 = vld [vmem:[%s715 + $0xc70] sm:$0xff]
        %v1142 = vld [vmem:[%s715 + $0xc78] sm:$0xff]
        %v1143 = vld [vmem:[%s715 + $0xc80] sm:$0xff]
        %v1144 = vld [vmem:[%s715 + $0xc88] sm:$0xff]
        %v1145 = vld [vmem:[%s715 + $0xc90] sm:$0xff]
        %v1146 = vld [vmem:[%s715 + $0xc98] sm:$0xff]
        %v1147 = vld [vmem:[%s715 + $0xca0] sm:$0xff]
        %v1148 = vld [vmem:[%s715 + $0xca8] sm:$0xff]
        %v1149 = vld [vmem:[%s715 + $0xcb0] sm:$0xff]
        %v1150 = vld [vmem:[%s715 + $0xcb8] sm:$0xff]
        %v1151 = vld [vmem:[%s715 + $0xcc0] sm:$0xff]
        %v1152 = vld [vmem:[%s715 + $0xcc8] sm:$0xff]
        %v1153 = vld [vmem:[%s715 + $0xcd0] sm:$0xff]
        %v1154 = vld [vmem:[%s715 + $0xcd8] sm:$0xff]
        %v1155 = vld [vmem:[%s715 + $0xce0] sm:$0xff]
        %v1156 = vld [vmem:[%s715 + $0xce8] sm:$0xff]
        %v1157 = vld [vmem:[%s715 + $0xcf0] sm:$0xff]
        %v1158 = vld [vmem:[%s715 + $0xcf8] sm:$0xff]
        %v1159 = vld [vmem:[%s715 + $0xd00] sm:$0xff]
        %v1160 = vld [vmem:[%s715 + $0xd08] sm:$0xff]
        %v1161 = vld [vmem:[%s715 + $0xd10] sm:$0xff]
        %v1162 = vld [vmem:[%s715 + $0xd18] sm:$0xff]
        %v1163 = vld [vmem:[%s715 + $0xd20] sm:$0xff]
        %v1164 = vld [vmem:[%s715 + $0xd28] sm:$0xff]
        %v1165 = vld [vmem:[%s715 + $0xd30] sm:$0xff]
        %v1166 = vld [vmem:[%s715 + $0xd38] sm:$0xff]
        %v1167 = vld [vmem:[%s715 + $0xd40] sm:$0xff]
        %v1168 = vld [vmem:[%s715 + $0xd48] sm:$0xff]
        %v1169 = vld [vmem:[%s715 + $0xd50] sm:$0xff]
        %v1170 = vld [vmem:[%s715 + $0xd58] sm:$0xff]
        %v1171 = vld [vmem:[%s715 + $0xd60] sm:$0xff]
        %v1172 = vld [vmem:[%s715 + $0xd68] sm:$0xff]
        %v1173 = vld [vmem:[%s715 + $0xd70] sm:$0xff]
        %v1174 = vld [vmem:[%s715 + $0xd78] sm:$0xff]
        %v1175 = vld [vmem:[%s715 + $0xd80] sm:$0xff]
        %v1176 = vld [vmem:[%s715 + $0xd88] sm:$0xff]
        %v1177 = vld [vmem:[%s715 + $0xd90] sm:$0xff]
        %v1178 = vld [vmem:[%s715 + $0xd98] sm:$0xff]
        %v1179 = vld [vmem:[%s715 + $0xda0] sm:$0xff]
        %v1180 = vld [vmem:[%s715 + $0xda8] sm:$0xff]
        %v1181 = vld [vmem:[%s715 + $0xdb0] sm:$0xff]
        %v1182 = vld [vmem:[%s715 + $0xdb8] sm:$0xff]
        %v1183 = vld [vmem:[%s715 + $0xdc0] sm:$0xff]
        %v1184 = vld [vmem:[%s715 + $0xdc8] sm:$0xff]
        %v1185 = vld [vmem:[%s715 + $0xdd0] sm:$0xff]
        %v1186 = vld [vmem:[%s715 + $0xdd8] sm:$0xff]
        %v1187 = vld [vmem:[%s715 + $0xde0] sm:$0xff]
        %v1188 = vld [vmem:[%s715 + $0xde8] sm:$0xff]
        %v1189 = vld [vmem:[%s715 + $0xdf0] sm:$0xff]
        %v1190 = vld [vmem:[%s715 + $0xdf8] sm:$0xff]
        %v1191 = vld [vmem:[%s715 + $0xe00] sm:$0xff]
        %v1192 = vld [vmem:[%s715 + $0xe08] sm:$0xff]
        %v1193 = vld [vmem:[%s715 + $0xe10] sm:$0xff]
        %v1194 = vld [vmem:[%s715 + $0xe18] sm:$0xff]
        %v1195 = vld [vmem:[%s715 + $0xe20] sm:$0xff]
        %v1196 = vld [vmem:[%s715 + $0xe28] sm:$0xff]
        %v1197 = vld [vmem:[%s715 + $0xe30] sm:$0xff]
        %v1198 = vld [vmem:[%s715 + $0xe38] sm:$0xff]
        %v1199 = vld [vmem:[%s715 + $0xe40] sm:$0xff]
        %v1200 = vld [vmem:[%s715 + $0xe48] sm:$0xff]
        %v1201 = vld [vmem:[%s715 + $0xe50] sm:$0xff]
        %v1202 = vld [vmem:[%s715 + $0xe58] sm:$0xff]
        %v1203 = vld [vmem:[%s715 + $0xe60] sm:$0xff]
        %v1204 = vld [vmem:[%s715 + $0xe68] sm:$0xff]
        %v1205 = vld [vmem:[%s715 + $0xe70] sm:$0xff]
        %v1206 = vld [vmem:[%s715 + $0xe78] sm:$0xff]
        %v1207 = vld [vmem:[%s715 + $0xe80] sm:$0xff]
        %v1208 = vld [vmem:[%s715 + $0xe88] sm:$0xff]
        %v1209 = vld [vmem:[%s715 + $0xe90] sm:$0xff]
        %v1210 = vld [vmem:[%s715 + $0xe98] sm:$0xff]
        %v1211 = vld [vmem:[%s715 + $0xea0] sm:$0xff]
        %v1212 = vld [vmem:[%s715 + $0xea8] sm:$0xff]
        %v1213 = vld [vmem:[%s715 + $0xeb0] sm:$0xff]
        %v1214 = vld [vmem:[%s715 + $0xeb8] sm:$0xff]
        %v1215 = vld [vmem:[%s715 + $0xec0] sm:$0xff]
        %v1216 = vld [vmem:[%s715 + $0xec8] sm:$0xff]
        %v1217 = vld [vmem:[%s715 + $0xed0] sm:$0xff]
        %v1218 = vld [vmem:[%s715 + $0xed8] sm:$0xff]
        %v1219 = vld [vmem:[%s715 + $0xee0] sm:$0xff]
        %v1220 = vld [vmem:[%s715 + $0xee8] sm:$0xff]
        %v1221 = vld [vmem:[%s715 + $0xef0] sm:$0xff]
        %v1222 = vld [vmem:[%s715 + $0xef8] sm:$0xff]
        %v1223 = vld [vmem:[%s715 + $0xf00] sm:$0xff]
        %v1224 = vld [vmem:[%s715 + $0xf08] sm:$0xff]
        %v1225 = vld [vmem:[%s715 + $0xf10] sm:$0xff]
        %v1226 = vld [vmem:[%s715 + $0xf18] sm:$0xff]
        %v1227 = vld [vmem:[%s715 + $0xf20] sm:$0xff]
        %v1228 = vld [vmem:[%s715 + $0xf28] sm:$0xff]
        %v1229 = vld [vmem:[%s715 + $0xf30] sm:$0xff]
        %v1230 = vld [vmem:[%s715 + $0xf38] sm:$0xff]
        %v1231 = vld [vmem:[%s715 + $0xf40] sm:$0xff]
        %v1232 = vld [vmem:[%s715 + $0xf48] sm:$0xff]
        %v1233 = vld [vmem:[%s715 + $0xf50] sm:$0xff]
        %v1234 = vld [vmem:[%s715 + $0xf58] sm:$0xff]
        %v1235 = vld [vmem:[%s715 + $0xf60] sm:$0xff]
        %v1236 = vld [vmem:[%s715 + $0xf68] sm:$0xff]
        %v1237 = vld [vmem:[%s715 + $0xf70] sm:$0xff]
        %v1238 = vld [vmem:[%s715 + $0xf78] sm:$0xff]
        %v1239 = vld [vmem:[%s715 + $0xf80] sm:$0xff]
        %v1240 = vld [vmem:[%s715 + $0xf88] sm:$0xff]
        %v1241 = vld [vmem:[%s715 + $0xf90] sm:$0xff]
        %v1242 = vld [vmem:[%s715 + $0xf98] sm:$0xff]
        %v1243 = vld [vmem:[%s715 + $0xfa0] sm:$0xff]
        %v1244 = vld [vmem:[%s715 + $0xfa8] sm:$0xff]
        %v1245 = vld [vmem:[%s715 + $0xfb0] sm:$0xff]
        %v1246 = vld [vmem:[%s715 + $0xfb8] sm:$0xff]
        %v1247 = vld [vmem:[%s715 + $0xfc0] sm:$0xff]
        %v1248 = vld [vmem:[%s715 + $0xfc8] sm:$0xff]
        %v1249 = vld [vmem:[%s715 + $0xfd0] sm:$0xff]
        %v1250 = vld [vmem:[%s715 + $0xfd8] sm:$0xff]
        %v1251 = vld [vmem:[%s715 + $0xfe0] sm:$0xff]
        %v1252 = vld [vmem:[%s715 + $0xfe8] sm:$0xff]
        %v1253 = vld [vmem:[%s715 + $0xff0] sm:$0xff]
        %v1254 = vld [vmem:[%s715 + $0xff8] sm:$0xff]
        %1255 = vst [vmem:[%s730] sm:$0xff] %v743
        %1256 = vst [vmem:[%s730 + $0x8] sm:$0xff] %v744
        %1257 = vst [vmem:[%s730 + $0x10] sm:$0xff] %v745
        %1258 = vst [vmem:[%s730 + $0x18] sm:$0xff] %v746
        %1259 = vst [vmem:[%s730 + $0x20] sm:$0xff] %v747
        %1260 = vst [vmem:[%s730 + $0x28] sm:$0xff] %v748
        %1261 = vst [vmem:[%s730 + $0x30] sm:$0xff] %v749
        %1262 = vst [vmem:[%s730 + $0x38] sm:$0xff] %v750
        %1263 = vst [vmem:[%s730 + $0x40] sm:$0xff] %v751
        %1264 = vst [vmem:[%s730 + $0x48] sm:$0xff] %v752
        %1265 = vst [vmem:[%s730 + $0x50] sm:$0xff] %v753
        %1266 = vst [vmem:[%s730 + $0x58] sm:$0xff] %v754
        %1267 = vst [vmem:[%s730 + $0x60] sm:$0xff] %v755
        %1268 = vst [vmem:[%s730 + $0x68] sm:$0xff] %v756
        %1269 = vst [vmem:[%s730 + $0x70] sm:$0xff] %v757
        %1270 = vst [vmem:[%s730 + $0x78] sm:$0xff] %v758
        %1271 = vst [vmem:[%s730 + $0x80] sm:$0xff] %v759
        %1272 = vst [vmem:[%s730 + $0x88] sm:$0xff] %v760
        %1273 = vst [vmem:[%s730 + $0x90] sm:$0xff] %v761
        %1274 = vst [vmem:[%s730 + $0x98] sm:$0xff] %v762
        %1275 = vst [vmem:[%s730 + $0xa0] sm:$0xff] %v763
        %1276 = vst [vmem:[%s730 + $0xa8] sm:$0xff] %v764
        %1277 = vst [vmem:[%s730 + $0xb0] sm:$0xff] %v765
        %1278 = vst [vmem:[%s730 + $0xb8] sm:$0xff] %v766
        %1279 = vst [vmem:[%s730 + $0xc0] sm:$0xff] %v767
        %1280 = vst [vmem:[%s730 + $0xc8] sm:$0xff] %v768
        %1281 = vst [vmem:[%s730 + $0xd0] sm:$0xff] %v769
        %1282 = vst [vmem:[%s730 + $0xd8] sm:$0xff] %v770
        %1283 = vst [vmem:[%s730 + $0xe0] sm:$0xff] %v771
        %1284 = vst [vmem:[%s730 + $0xe8] sm:$0xff] %v772
        %1285 = vst [vmem:[%s730 + $0xf0] sm:$0xff] %v773
        %1286 = vst [vmem:[%s730 + $0xf8] sm:$0xff] %v774
        %1287 = vst [vmem:[%s730 + $0x100] sm:$0xff] %v775
        %1288 = vst [vmem:[%s730 + $0x108] sm:$0xff] %v776
        %1289 = vst [vmem:[%s730 + $0x110] sm:$0xff] %v777
        %1290 = vst [vmem:[%s730 + $0x118] sm:$0xff] %v778
        %1291 = vst [vmem:[%s730 + $0x120] sm:$0xff] %v779
        %1292 = vst [vmem:[%s730 + $0x128] sm:$0xff] %v780
        %1293 = vst [vmem:[%s730 + $0x130] sm:$0xff] %v781
        %1294 = vst [vmem:[%s730 + $0x138] sm:$0xff] %v782
        %1295 = vst [vmem:[%s730 + $0x140] sm:$0xff] %v783
        %1296 = vst [vmem:[%s730 + $0x148] sm:$0xff] %v784
        %1297 = vst [vmem:[%s730 + $0x150] sm:$0xff] %v785
        %1298 = vst [vmem:[%s730 + $0x158] sm:$0xff] %v786
        %1299 = vst [vmem:[%s730 + $0x160] sm:$0xff] %v787
        %1300 = vst [vmem:[%s730 + $0x168] sm:$0xff] %v788
        %1301 = vst [vmem:[%s730 + $0x170] sm:$0xff] %v789
        %1302 = vst [vmem:[%s730 + $0x178] sm:$0xff] %v790
        %1303 = vst [vmem:[%s730 + $0x180] sm:$0xff] %v791
        %1304 = vst [vmem:[%s730 + $0x188] sm:$0xff] %v792
        %1305 = vst [vmem:[%s730 + $0x190] sm:$0xff] %v793
        %1306 = vst [vmem:[%s730 + $0x198] sm:$0xff] %v794
        %1307 = vst [vmem:[%s730 + $0x1a0] sm:$0xff] %v795
        %1308 = vst [vmem:[%s730 + $0x1a8] sm:$0xff] %v796
        %1309 = vst [vmem:[%s730 + $0x1b0] sm:$0xff] %v797
        %1310 = vst [vmem:[%s730 + $0x1b8] sm:$0xff] %v798
        %1311 = vst [vmem:[%s730 + $0x1c0] sm:$0xff] %v799
        %1312 = vst [vmem:[%s730 + $0x1c8] sm:$0xff] %v800
        %1313 = vst [vmem:[%s730 + $0x1d0] sm:$0xff] %v801
        %1314 = vst [vmem:[%s730 + $0x1d8] sm:$0xff] %v802
        %1315 = vst [vmem:[%s730 + $0x1e0] sm:$0xff] %v803
        %1316 = vst [vmem:[%s730 + $0x1e8] sm:$0xff] %v804
        %1317 = vst [vmem:[%s730 + $0x1f0] sm:$0xff] %v805
        %1318 = vst [vmem:[%s730 + $0x1f8] sm:$0xff] %v806
        %1319 = vst [vmem:[%s730 + $0x200] sm:$0xff] %v807
        %1320 = vst [vmem:[%s730 + $0x208] sm:$0xff] %v808
        %1321 = vst [vmem:[%s730 + $0x210] sm:$0xff] %v809
        %1322 = vst [vmem:[%s730 + $0x218] sm:$0xff] %v810
        %1323 = vst [vmem:[%s730 + $0x220] sm:$0xff] %v811
        %1324 = vst [vmem:[%s730 + $0x228] sm:$0xff] %v812
        %1325 = vst [vmem:[%s730 + $0x230] sm:$0xff] %v813
        %1326 = vst [vmem:[%s730 + $0x238] sm:$0xff] %v814
        %1327 = vst [vmem:[%s730 + $0x240] sm:$0xff] %v815
        %1328 = vst [vmem:[%s730 + $0x248] sm:$0xff] %v816
        %1329 = vst [vmem:[%s730 + $0x250] sm:$0xff] %v817
        %1330 = vst [vmem:[%s730 + $0x258] sm:$0xff] %v818
        %1331 = vst [vmem:[%s730 + $0x260] sm:$0xff] %v819
        %1332 = vst [vmem:[%s730 + $0x268] sm:$0xff] %v820
        %1333 = vst [vmem:[%s730 + $0x270] sm:$0xff] %v821
        %1334 = vst [vmem:[%s730 + $0x278] sm:$0xff] %v822
        %1335 = vst [vmem:[%s730 + $0x280] sm:$0xff] %v823
        %1336 = vst [vmem:[%s730 + $0x288] sm:$0xff] %v824
        %1337 = vst [vmem:[%s730 + $0x290] sm:$0xff] %v825
        %1338 = vst [vmem:[%s730 + $0x298] sm:$0xff] %v826
        %1339 = vst [vmem:[%s730 + $0x2a0] sm:$0xff] %v827
        %1340 = vst [vmem:[%s730 + $0x2a8] sm:$0xff] %v828
        %1341 = vst [vmem:[%s730 + $0x2b0] sm:$0xff] %v829
        %1342 = vst [vmem:[%s730 + $0x2b8] sm:$0xff] %v830
        %1343 = vst [vmem:[%s730 + $0x2c0] sm:$0xff] %v831
        %1344 = vst [vmem:[%s730 + $0x2c8] sm:$0xff] %v832
        %1345 = vst [vmem:[%s730 + $0x2d0] sm:$0xff] %v833
        %1346 = vst [vmem:[%s730 + $0x2d8] sm:$0xff] %v834
        %1347 = vst [vmem:[%s730 + $0x2e0] sm:$0xff] %v835
        %1348 = vst [vmem:[%s730 + $0x2e8] sm:$0xff] %v836
        %1349 = vst [vmem:[%s730 + $0x2f0] sm:$0xff] %v837
        %1350 = vst [vmem:[%s730 + $0x2f8] sm:$0xff] %v838
        %1351 = vst [vmem:[%s730 + $0x300] sm:$0xff] %v839
        %1352 = vst [vmem:[%s730 + $0x308] sm:$0xff] %v840
        %1353 = vst [vmem:[%s730 + $0x310] sm:$0xff] %v841
        %1354 = vst [vmem:[%s730 + $0x318] sm:$0xff] %v842
        %1355 = vst [vmem:[%s730 + $0x320] sm:$0xff] %v843
        %1356 = vst [vmem:[%s730 + $0x328] sm:$0xff] %v844
        %1357 = vst [vmem:[%s730 + $0x330] sm:$0xff] %v845
        %1358 = vst [vmem:[%s730 + $0x338] sm:$0xff] %v846
        %1359 = vst [vmem:[%s730 + $0x340] sm:$0xff] %v847
        %1360 = vst [vmem:[%s730 + $0x348] sm:$0xff] %v848
        %1361 = vst [vmem:[%s730 + $0x350] sm:$0xff] %v849
        %1362 = vst [vmem:[%s730 + $0x358] sm:$0xff] %v850
        %1363 = vst [vmem:[%s730 + $0x360] sm:$0xff] %v851
        %1364 = vst [vmem:[%s730 + $0x368] sm:$0xff] %v852
        %1365 = vst [vmem:[%s730 + $0x370] sm:$0xff] %v853
        %1366 = vst [vmem:[%s730 + $0x378] sm:$0xff] %v854
        %1367 = vst [vmem:[%s730 + $0x380] sm:$0xff] %v855
        %1368 = vst [vmem:[%s730 + $0x388] sm:$0xff] %v856
        %1369 = vst [vmem:[%s730 + $0x390] sm:$0xff] %v857
        %1370 = vst [vmem:[%s730 + $0x398] sm:$0xff] %v858
        %1371 = vst [vmem:[%s730 + $0x3a0] sm:$0xff] %v859
        %1372 = vst [vmem:[%s730 + $0x3a8] sm:$0xff] %v860
        %1373 = vst [vmem:[%s730 + $0x3b0] sm:$0xff] %v861
        %1374 = vst [vmem:[%s730 + $0x3b8] sm:$0xff] %v862
        %1375 = vst [vmem:[%s730 + $0x3c0] sm:$0xff] %v863
        %1376 = vst [vmem:[%s730 + $0x3c8] sm:$0xff] %v864
        %1377 = vst [vmem:[%s730 + $0x3d0] sm:$0xff] %v865
        %1378 = vst [vmem:[%s730 + $0x3d8] sm:$0xff] %v866
        %1379 = vst [vmem:[%s730 + $0x3e0] sm:$0xff] %v867
        %1380 = vst [vmem:[%s730 + $0x3e8] sm:$0xff] %v868
        %1381 = vst [vmem:[%s730 + $0x3f0] sm:$0xff] %v869
        %1382 = vst [vmem:[%s730 + $0x3f8] sm:$0xff] %v870
        %1383 = vst [vmem:[%s730 + $0x400] sm:$0xff] %v871
        %1384 = vst [vmem:[%s730 + $0x408] sm:$0xff] %v872
        %1385 = vst [vmem:[%s730 + $0x410] sm:$0xff] %v873
        %1386 = vst [vmem:[%s730 + $0x418] sm:$0xff] %v874
        %1387 = vst [vmem:[%s730 + $0x420] sm:$0xff] %v875
        %1388 = vst [vmem:[%s730 + $0x428] sm:$0xff] %v876
        %1389 = vst [vmem:[%s730 + $0x430] sm:$0xff] %v877
        %1390 = vst [vmem:[%s730 + $0x438] sm:$0xff] %v878
        %1391 = vst [vmem:[%s730 + $0x440] sm:$0xff] %v879
        %1392 = vst [vmem:[%s730 + $0x448] sm:$0xff] %v880
        %1393 = vst [vmem:[%s730 + $0x450] sm:$0xff] %v881
        %1394 = vst [vmem:[%s730 + $0x458] sm:$0xff] %v882
        %1395 = vst [vmem:[%s730 + $0x460] sm:$0xff] %v883
        %1396 = vst [vmem:[%s730 + $0x468] sm:$0xff] %v884
        %1397 = vst [vmem:[%s730 + $0x470] sm:$0xff] %v885
        %1398 = vst [vmem:[%s730 + $0x478] sm:$0xff] %v886
        %1399 = vst [vmem:[%s730 + $0x480] sm:$0xff] %v887
        %1400 = vst [vmem:[%s730 + $0x488] sm:$0xff] %v888
        %1401 = vst [vmem:[%s730 + $0x490] sm:$0xff] %v889
        %1402 = vst [vmem:[%s730 + $0x498] sm:$0xff] %v890
        %1403 = vst [vmem:[%s730 + $0x4a0] sm:$0xff] %v891
        %1404 = vst [vmem:[%s730 + $0x4a8] sm:$0xff] %v892
        %1405 = vst [vmem:[%s730 + $0x4b0] sm:$0xff] %v893
        %1406 = vst [vmem:[%s730 + $0x4b8] sm:$0xff] %v894
        %1407 = vst [vmem:[%s730 + $0x4c0] sm:$0xff] %v895
        %1408 = vst [vmem:[%s730 + $0x4c8] sm:$0xff] %v896
        %1409 = vst [vmem:[%s730 + $0x4d0] sm:$0xff] %v897
        %1410 = vst [vmem:[%s730 + $0x4d8] sm:$0xff] %v898
        %1411 = vst [vmem:[%s730 + $0x4e0] sm:$0xff] %v899
        %1412 = vst [vmem:[%s730 + $0x4e8] sm:$0xff] %v900
        %1413 = vst [vmem:[%s730 + $0x4f0] sm:$0xff] %v901
        %1414 = vst [vmem:[%s730 + $0x4f8] sm:$0xff] %v902
        %1415 = vst [vmem:[%s730 + $0x500] sm:$0xff] %v903
        %1416 = vst [vmem:[%s730 + $0x508] sm:$0xff] %v904
        %1417 = vst [vmem:[%s730 + $0x510] sm:$0xff] %v905
        %1418 = vst [vmem:[%s730 + $0x518] sm:$0xff] %v906
        %1419 = vst [vmem:[%s730 + $0x520] sm:$0xff] %v907
        %1420 = vst [vmem:[%s730 + $0x528] sm:$0xff] %v908
        %1421 = vst [vmem:[%s730 + $0x530] sm:$0xff] %v909
        %1422 = vst [vmem:[%s730 + $0x538] sm:$0xff] %v910
        %1423 = vst [vmem:[%s730 + $0x540] sm:$0xff] %v911
        %1424 = vst [vmem:[%s730 + $0x548] sm:$0xff] %v912
        %1425 = vst [vmem:[%s730 + $0x550] sm:$0xff] %v913
        %1426 = vst [vmem:[%s730 + $0x558] sm:$0xff] %v914
        %1427 = vst [vmem:[%s730 + $0x560] sm:$0xff] %v915
        %1428 = vst [vmem:[%s730 + $0x568] sm:$0xff] %v916
        %1429 = vst [vmem:[%s730 + $0x570] sm:$0xff] %v917
        %1430 = vst [vmem:[%s730 + $0x578] sm:$0xff] %v918
        %1431 = vst [vmem:[%s730 + $0x580] sm:$0xff] %v919
        %1432 = vst [vmem:[%s730 + $0x588] sm:$0xff] %v920
        %1433 = vst [vmem:[%s730 + $0x590] sm:$0xff] %v921
        %1434 = vst [vmem:[%s730 + $0x598] sm:$0xff] %v922
        %1435 = vst [vmem:[%s730 + $0x5a0] sm:$0xff] %v923
        %1436 = vst [vmem:[%s730 + $0x5a8] sm:$0xff] %v924
        %1437 = vst [vmem:[%s730 + $0x5b0] sm:$0xff] %v925
        %1438 = vst [vmem:[%s730 + $0x5b8] sm:$0xff] %v926
        %1439 = vst [vmem:[%s730 + $0x5c0] sm:$0xff] %v927
        %1440 = vst [vmem:[%s730 + $0x5c8] sm:$0xff] %v928
        %1441 = vst [vmem:[%s730 + $0x5d0] sm:$0xff] %v929
        %1442 = vst [vmem:[%s730 + $0x5d8] sm:$0xff] %v930
        %1443 = vst [vmem:[%s730 + $0x5e0] sm:$0xff] %v931
        %1444 = vst [vmem:[%s730 + $0x5e8] sm:$0xff] %v932
        %1445 = vst [vmem:[%s730 + $0x5f0] sm:$0xff] %v933
        %1446 = vst [vmem:[%s730 + $0x5f8] sm:$0xff] %v934
        %1447 = vst [vmem:[%s730 + $0x600] sm:$0xff] %v935
        %1448 = vst [vmem:[%s730 + $0x608] sm:$0xff] %v936
        %1449 = vst [vmem:[%s730 + $0x610] sm:$0xff] %v937
        %1450 = vst [vmem:[%s730 + $0x618] sm:$0xff] %v938
        %1451 = vst [vmem:[%s730 + $0x620] sm:$0xff] %v939
        %1452 = vst [vmem:[%s730 + $0x628] sm:$0xff] %v940
        %1453 = vst [vmem:[%s730 + $0x630] sm:$0xff] %v941
        %1454 = vst [vmem:[%s730 + $0x638] sm:$0xff] %v942
        %1455 = vst [vmem:[%s730 + $0x640] sm:$0xff] %v943
        %1456 = vst [vmem:[%s730 + $0x648] sm:$0xff] %v944
        %1457 = vst [vmem:[%s730 + $0x650] sm:$0xff] %v945
        %1458 = vst [vmem:[%s730 + $0x658] sm:$0xff] %v946
        %1459 = vst [vmem:[%s730 + $0x660] sm:$0xff] %v947
        %1460 = vst [vmem:[%s730 + $0x668] sm:$0xff] %v948
        %1461 = vst [vmem:[%s730 + $0x670] sm:$0xff] %v949
        %1462 = vst [vmem:[%s730 + $0x678] sm:$0xff] %v950
        %1463 = vst [vmem:[%s730 + $0x680] sm:$0xff] %v951
        %1464 = vst [vmem:[%s730 + $0x688] sm:$0xff] %v952
        %1465 = vst [vmem:[%s730 + $0x690] sm:$0xff] %v953
        %1466 = vst [vmem:[%s730 + $0x698] sm:$0xff] %v954
        %1467 = vst [vmem:[%s730 + $0x6a0] sm:$0xff] %v955
        %1468 = vst [vmem:[%s730 + $0x6a8] sm:$0xff] %v956
        %1469 = vst [vmem:[%s730 + $0x6b0] sm:$0xff] %v957
        %1470 = vst [vmem:[%s730 + $0x6b8] sm:$0xff] %v958
        %1471 = vst [vmem:[%s730 + $0x6c0] sm:$0xff] %v959
        %1472 = vst [vmem:[%s730 + $0x6c8] sm:$0xff] %v960
        %1473 = vst [vmem:[%s730 + $0x6d0] sm:$0xff] %v961
        %1474 = vst [vmem:[%s730 + $0x6d8] sm:$0xff] %v962
        %1475 = vst [vmem:[%s730 + $0x6e0] sm:$0xff] %v963
        %1476 = vst [vmem:[%s730 + $0x6e8] sm:$0xff] %v964
        %1477 = vst [vmem:[%s730 + $0x6f0] sm:$0xff] %v965
        %1478 = vst [vmem:[%s730 + $0x6f8] sm:$0xff] %v966
        %1479 = vst [vmem:[%s730 + $0x700] sm:$0xff] %v967
        %1480 = vst [vmem:[%s730 + $0x708] sm:$0xff] %v968
        %1481 = vst [vmem:[%s730 + $0x710] sm:$0xff] %v969
        %1482 = vst [vmem:[%s730 + $0x718] sm:$0xff] %v970
        %1483 = vst [vmem:[%s730 + $0x720] sm:$0xff] %v971
        %1484 = vst [vmem:[%s730 + $0x728] sm:$0xff] %v972
        %1485 = vst [vmem:[%s730 + $0x730] sm:$0xff] %v973
        %1486 = vst [vmem:[%s730 + $0x738] sm:$0xff] %v974
        %1487 = vst [vmem:[%s730 + $0x740] sm:$0xff] %v975
        %1488 = vst [vmem:[%s730 + $0x748] sm:$0xff] %v976
        %1489 = vst [vmem:[%s730 + $0x750] sm:$0xff] %v977
        %1490 = vst [vmem:[%s730 + $0x758] sm:$0xff] %v978
        %1491 = vst [vmem:[%s730 + $0x760] sm:$0xff] %v979
        %1492 = vst [vmem:[%s730 + $0x768] sm:$0xff] %v980
        %1493 = vst [vmem:[%s730 + $0x770] sm:$0xff] %v981
        %1494 = vst [vmem:[%s730 + $0x778] sm:$0xff] %v982
        %1495 = vst [vmem:[%s730 + $0x780] sm:$0xff] %v983
        %1496 = vst [vmem:[%s730 + $0x788] sm:$0xff] %v984
        %1497 = vst [vmem:[%s730 + $0x790] sm:$0xff] %v985
        %1498 = vst [vmem:[%s730 + $0x798] sm:$0xff] %v986
        %1499 = vst [vmem:[%s730 + $0x7a0] sm:$0xff] %v987
        %1500 = vst [vmem:[%s730 + $0x7a8] sm:$0xff] %v988
        %1501 = vst [vmem:[%s730 + $0x7b0] sm:$0xff] %v989
        %1502 = vst [vmem:[%s730 + $0x7b8] sm:$0xff] %v990
        %1503 = vst [vmem:[%s730 + $0x7c0] sm:$0xff] %v991
        %1504 = vst [vmem:[%s730 + $0x7c8] sm:$0xff] %v992
        %1505 = vst [vmem:[%s730 + $0x7d0] sm:$0xff] %v993
        %1506 = vst [vmem:[%s730 + $0x7d8] sm:$0xff] %v994
        %1507 = vst [vmem:[%s730 + $0x7e0] sm:$0xff] %v995
        %1508 = vst [vmem:[%s730 + $0x7e8] sm:$0xff] %v996
        %1509 = vst [vmem:[%s730 + $0x7f0] sm:$0xff] %v997
        %1510 = vst [vmem:[%s730 + $0x7f8] sm:$0xff] %v998
        %1511 = vst [vmem:[%s730 + $0x800] sm:$0xff] %v999
        %1512 = vst [vmem:[%s730 + $0x808] sm:$0xff] %v1000
        %1513 = vst [vmem:[%s730 + $0x810] sm:$0xff] %v1001
        %1514 = vst [vmem:[%s730 + $0x818] sm:$0xff] %v1002
        %1515 = vst [vmem:[%s730 + $0x820] sm:$0xff] %v1003
        %1516 = vst [vmem:[%s730 + $0x828] sm:$0xff] %v1004
        %1517 = vst [vmem:[%s730 + $0x830] sm:$0xff] %v1005
        %1518 = vst [vmem:[%s730 + $0x838] sm:$0xff] %v1006
        %1519 = vst [vmem:[%s730 + $0x840] sm:$0xff] %v1007
        %1520 = vst [vmem:[%s730 + $0x848] sm:$0xff] %v1008
        %1521 = vst [vmem:[%s730 + $0x850] sm:$0xff] %v1009
        %1522 = vst [vmem:[%s730 + $0x858] sm:$0xff] %v1010
        %1523 = vst [vmem:[%s730 + $0x860] sm:$0xff] %v1011
        %1524 = vst [vmem:[%s730 + $0x868] sm:$0xff] %v1012
        %1525 = vst [vmem:[%s730 + $0x870] sm:$0xff] %v1013
        %1526 = vst [vmem:[%s730 + $0x878] sm:$0xff] %v1014
        %1527 = vst [vmem:[%s730 + $0x880] sm:$0xff] %v1015
        %1528 = vst [vmem:[%s730 + $0x888] sm:$0xff] %v1016
        %1529 = vst [vmem:[%s730 + $0x890] sm:$0xff] %v1017
        %1530 = vst [vmem:[%s730 + $0x898] sm:$0xff] %v1018
        %1531 = vst [vmem:[%s730 + $0x8a0] sm:$0xff] %v1019
        %1532 = vst [vmem:[%s730 + $0x8a8] sm:$0xff] %v1020
        %1533 = vst [vmem:[%s730 + $0x8b0] sm:$0xff] %v1021
        %1534 = vst [vmem:[%s730 + $0x8b8] sm:$0xff] %v1022
        %1535 = vst [vmem:[%s730 + $0x8c0] sm:$0xff] %v1023
        %1536 = vst [vmem:[%s730 + $0x8c8] sm:$0xff] %v1024
        %1537 = vst [vmem:[%s730 + $0x8d0] sm:$0xff] %v1025
        %1538 = vst [vmem:[%s730 + $0x8d8] sm:$0xff] %v1026
        %1539 = vst [vmem:[%s730 + $0x8e0] sm:$0xff] %v1027
        %1540 = vst [vmem:[%s730 + $0x8e8] sm:$0xff] %v1028
        %1541 = vst [vmem:[%s730 + $0x8f0] sm:$0xff] %v1029
        %1542 = vst [vmem:[%s730 + $0x8f8] sm:$0xff] %v1030
        %1543 = vst [vmem:[%s730 + $0x900] sm:$0xff] %v1031
        %1544 = vst [vmem:[%s730 + $0x908] sm:$0xff] %v1032
        %1545 = vst [vmem:[%s730 + $0x910] sm:$0xff] %v1033
        %1546 = vst [vmem:[%s730 + $0x918] sm:$0xff] %v1034
        %1547 = vst [vmem:[%s730 + $0x920] sm:$0xff] %v1035
        %1548 = vst [vmem:[%s730 + $0x928] sm:$0xff] %v1036
        %1549 = vst [vmem:[%s730 + $0x930] sm:$0xff] %v1037
        %1550 = vst [vmem:[%s730 + $0x938] sm:$0xff] %v1038
        %1551 = vst [vmem:[%s730 + $0x940] sm:$0xff] %v1039
        %1552 = vst [vmem:[%s730 + $0x948] sm:$0xff] %v1040
        %1553 = vst [vmem:[%s730 + $0x950] sm:$0xff] %v1041
        %1554 = vst [vmem:[%s730 + $0x958] sm:$0xff] %v1042
        %1555 = vst [vmem:[%s730 + $0x960] sm:$0xff] %v1043
        %1556 = vst [vmem:[%s730 + $0x968] sm:$0xff] %v1044
        %1557 = vst [vmem:[%s730 + $0x970] sm:$0xff] %v1045
        %1558 = vst [vmem:[%s730 + $0x978] sm:$0xff] %v1046
        %1559 = vst [vmem:[%s730 + $0x980] sm:$0xff] %v1047
        %1560 = vst [vmem:[%s730 + $0x988] sm:$0xff] %v1048
        %1561 = vst [vmem:[%s730 + $0x990] sm:$0xff] %v1049
        %1562 = vst [vmem:[%s730 + $0x998] sm:$0xff] %v1050
        %1563 = vst [vmem:[%s730 + $0x9a0] sm:$0xff] %v1051
        %1564 = vst [vmem:[%s730 + $0x9a8] sm:$0xff] %v1052
        %1565 = vst [vmem:[%s730 + $0x9b0] sm:$0xff] %v1053
        %1566 = vst [vmem:[%s730 + $0x9b8] sm:$0xff] %v1054
        %1567 = vst [vmem:[%s730 + $0x9c0] sm:$0xff] %v1055
        %1568 = vst [vmem:[%s730 + $0x9c8] sm:$0xff] %v1056
        %1569 = vst [vmem:[%s730 + $0x9d0] sm:$0xff] %v1057
        %1570 = vst [vmem:[%s730 + $0x9d8] sm:$0xff] %v1058
        %1571 = vst [vmem:[%s730 + $0x9e0] sm:$0xff] %v1059
        %1572 = vst [vmem:[%s730 + $0x9e8] sm:$0xff] %v1060
        %1573 = vst [vmem:[%s730 + $0x9f0] sm:$0xff] %v1061
        %1574 = vst [vmem:[%s730 + $0x9f8] sm:$0xff] %v1062
        %1575 = vst [vmem:[%s730 + $0xa00] sm:$0xff] %v1063
        %1576 = vst [vmem:[%s730 + $0xa08] sm:$0xff] %v1064
        %1577 = vst [vmem:[%s730 + $0xa10] sm:$0xff] %v1065
        %1578 = vst [vmem:[%s730 + $0xa18] sm:$0xff] %v1066
        %1579 = vst [vmem:[%s730 + $0xa20] sm:$0xff] %v1067
        %1580 = vst [vmem:[%s730 + $0xa28] sm:$0xff] %v1068
        %1581 = vst [vmem:[%s730 + $0xa30] sm:$0xff] %v1069
        %1582 = vst [vmem:[%s730 + $0xa38] sm:$0xff] %v1070
        %1583 = vst [vmem:[%s730 + $0xa40] sm:$0xff] %v1071
        %1584 = vst [vmem:[%s730 + $0xa48] sm:$0xff] %v1072
        %1585 = vst [vmem:[%s730 + $0xa50] sm:$0xff] %v1073
        %1586 = vst [vmem:[%s730 + $0xa58] sm:$0xff] %v1074
        %1587 = vst [vmem:[%s730 + $0xa60] sm:$0xff] %v1075
        %1588 = vst [vmem:[%s730 + $0xa68] sm:$0xff] %v1076
        %1589 = vst [vmem:[%s730 + $0xa70] sm:$0xff] %v1077
        %1590 = vst [vmem:[%s730 + $0xa78] sm:$0xff] %v1078
        %1591 = vst [vmem:[%s730 + $0xa80] sm:$0xff] %v1079
        %1592 = vst [vmem:[%s730 + $0xa88] sm:$0xff] %v1080
        %1593 = vst [vmem:[%s730 + $0xa90] sm:$0xff] %v1081
        %1594 = vst [vmem:[%s730 + $0xa98] sm:$0xff] %v1082
        %1595 = vst [vmem:[%s730 + $0xaa0] sm:$0xff] %v1083
        %1596 = vst [vmem:[%s730 + $0xaa8] sm:$0xff] %v1084
        %1597 = vst [vmem:[%s730 + $0xab0] sm:$0xff] %v1085
        %1598 = vst [vmem:[%s730 + $0xab8] sm:$0xff] %v1086
        %1599 = vst [vmem:[%s730 + $0xac0] sm:$0xff] %v1087
        %1600 = vst [vmem:[%s730 + $0xac8] sm:$0xff] %v1088
        %1601 = vst [vmem:[%s730 + $0xad0] sm:$0xff] %v1089
        %1602 = vst [vmem:[%s730 + $0xad8] sm:$0xff] %v1090
        %1603 = vst [vmem:[%s730 + $0xae0] sm:$0xff] %v1091
        %1604 = vst [vmem:[%s730 + $0xae8] sm:$0xff] %v1092
        %1605 = vst [vmem:[%s730 + $0xaf0] sm:$0xff] %v1093
        %1606 = vst [vmem:[%s730 + $0xaf8] sm:$0xff] %v1094
        %1607 = vst [vmem:[%s730 + $0xb00] sm:$0xff] %v1095
        %1608 = vst [vmem:[%s730 + $0xb08] sm:$0xff] %v1096
        %1609 = vst [vmem:[%s730 + $0xb10] sm:$0xff] %v1097
        %1610 = vst [vmem:[%s730 + $0xb18] sm:$0xff] %v1098
        %1611 = vst [vmem:[%s730 + $0xb20] sm:$0xff] %v1099
        %1612 = vst [vmem:[%s730 + $0xb28] sm:$0xff] %v1100
        %1613 = vst [vmem:[%s730 + $0xb30] sm:$0xff] %v1101
        %1614 = vst [vmem:[%s730 + $0xb38] sm:$0xff] %v1102
        %1615 = vst [vmem:[%s730 + $0xb40] sm:$0xff] %v1103
        %1616 = vst [vmem:[%s730 + $0xb48] sm:$0xff] %v1104
        %1617 = vst [vmem:[%s730 + $0xb50] sm:$0xff] %v1105
        %1618 = vst [vmem:[%s730 + $0xb58] sm:$0xff] %v1106
        %1619 = vst [vmem:[%s730 + $0xb60] sm:$0xff] %v1107
        %1620 = vst [vmem:[%s730 + $0xb68] sm:$0xff] %v1108
        %1621 = vst [vmem:[%s730 + $0xb70] sm:$0xff] %v1109
        %1622 = vst [vmem:[%s730 + $0xb78] sm:$0xff] %v1110
        %1623 = vst [vmem:[%s730 + $0xb80] sm:$0xff] %v1111
        %1624 = vst [vmem:[%s730 + $0xb88] sm:$0xff] %v1112
        %1625 = vst [vmem:[%s730 + $0xb90] sm:$0xff] %v1113
        %1626 = vst [vmem:[%s730 + $0xb98] sm:$0xff] %v1114
        %1627 = vst [vmem:[%s730 + $0xba0] sm:$0xff] %v1115
        %1628 = vst [vmem:[%s730 + $0xba8] sm:$0xff] %v1116
        %1629 = vst [vmem:[%s730 + $0xbb0] sm:$0xff] %v1117
        %1630 = vst [vmem:[%s730 + $0xbb8] sm:$0xff] %v1118
        %1631 = vst [vmem:[%s730 + $0xbc0] sm:$0xff] %v1119
        %1632 = vst [vmem:[%s730 + $0xbc8] sm:$0xff] %v1120
        %1633 = vst [vmem:[%s730 + $0xbd0] sm:$0xff] %v1121
        %1634 = vst [vmem:[%s730 + $0xbd8] sm:$0xff] %v1122
        %1635 = vst [vmem:[%s730 + $0xbe0] sm:$0xff] %v1123
        %1636 = vst [vmem:[%s730 + $0xbe8] sm:$0xff] %v1124
        %1637 = vst [vmem:[%s730 + $0xbf0] sm:$0xff] %v1125
        %1638 = vst [vmem:[%s730 + $0xbf8] sm:$0xff] %v1126
        %1639 = vst [vmem:[%s730 + $0xc00] sm:$0xff] %v1127
        %1640 = vst [vmem:[%s730 + $0xc08] sm:$0xff] %v1128
        %1641 = vst [vmem:[%s730 + $0xc10] sm:$0xff] %v1129
        %1642 = vst [vmem:[%s730 + $0xc18] sm:$0xff] %v1130
        %1643 = vst [vmem:[%s730 + $0xc20] sm:$0xff] %v1131
        %1644 = vst [vmem:[%s730 + $0xc28] sm:$0xff] %v1132
        %1645 = vst [vmem:[%s730 + $0xc30] sm:$0xff] %v1133
        %1646 = vst [vmem:[%s730 + $0xc38] sm:$0xff] %v1134
        %1647 = vst [vmem:[%s730 + $0xc40] sm:$0xff] %v1135
        %1648 = vst [vmem:[%s730 + $0xc48] sm:$0xff] %v1136
        %1649 = vst [vmem:[%s730 + $0xc50] sm:$0xff] %v1137
        %1650 = vst [vmem:[%s730 + $0xc58] sm:$0xff] %v1138
        %1651 = vst [vmem:[%s730 + $0xc60] sm:$0xff] %v1139
        %1652 = vst [vmem:[%s730 + $0xc68] sm:$0xff] %v1140
        %1653 = vst [vmem:[%s730 + $0xc70] sm:$0xff] %v1141
        %1654 = vst [vmem:[%s730 + $0xc78] sm:$0xff] %v1142
        %1655 = vst [vmem:[%s730 + $0xc80] sm:$0xff] %v1143
        %1656 = vst [vmem:[%s730 + $0xc88] sm:$0xff] %v1144
        %1657 = vst [vmem:[%s730 + $0xc90] sm:$0xff] %v1145
        %1658 = vst [vmem:[%s730 + $0xc98] sm:$0xff] %v1146
        %1659 = vst [vmem:[%s730 + $0xca0] sm:$0xff] %v1147
        %1660 = vst [vmem:[%s730 + $0xca8] sm:$0xff] %v1148
        %1661 = vst [vmem:[%s730 + $0xcb0] sm:$0xff] %v1149
        %1662 = vst [vmem:[%s730 + $0xcb8] sm:$0xff] %v1150
        %1663 = vst [vmem:[%s730 + $0xcc0] sm:$0xff] %v1151
        %1664 = vst [vmem:[%s730 + $0xcc8] sm:$0xff] %v1152
        %1665 = vst [vmem:[%s730 + $0xcd0] sm:$0xff] %v1153
        %1666 = vst [vmem:[%s730 + $0xcd8] sm:$0xff] %v1154
        %1667 = vst [vmem:[%s730 + $0xce0] sm:$0xff] %v1155
        %1668 = vst [vmem:[%s730 + $0xce8] sm:$0xff] %v1156
        %1669 = vst [vmem:[%s730 + $0xcf0] sm:$0xff] %v1157
        %1670 = vst [vmem:[%s730 + $0xcf8] sm:$0xff] %v1158
        %1671 = vst [vmem:[%s730 + $0xd00] sm:$0xff] %v1159
        %1672 = vst [vmem:[%s730 + $0xd08] sm:$0xff] %v1160
        %1673 = vst [vmem:[%s730 + $0xd10] sm:$0xff] %v1161
        %1674 = vst [vmem:[%s730 + $0xd18] sm:$0xff] %v1162
        %1675 = vst [vmem:[%s730 + $0xd20] sm:$0xff] %v1163
        %1676 = vst [vmem:[%s730 + $0xd28] sm:$0xff] %v1164
        %1677 = vst [vmem:[%s730 + $0xd30] sm:$0xff] %v1165
        %1678 = vst [vmem:[%s730 + $0xd38] sm:$0xff] %v1166
        %1679 = vst [vmem:[%s730 + $0xd40] sm:$0xff] %v1167
        %1680 = vst [vmem:[%s730 + $0xd48] sm:$0xff] %v1168
        %1681 = vst [vmem:[%s730 + $0xd50] sm:$0xff] %v1169
        %1682 = vst [vmem:[%s730 + $0xd58] sm:$0xff] %v1170
        %1683 = vst [vmem:[%s730 + $0xd60] sm:$0xff] %v1171
        %1684 = vst [vmem:[%s730 + $0xd68] sm:$0xff] %v1172
        %1685 = vst [vmem:[%s730 + $0xd70] sm:$0xff] %v1173
        %1686 = vst [vmem:[%s730 + $0xd78] sm:$0xff] %v1174
        %1687 = vst [vmem:[%s730 + $0xd80] sm:$0xff] %v1175
        %1688 = vst [vmem:[%s730 + $0xd88] sm:$0xff] %v1176
        %1689 = vst [vmem:[%s730 + $0xd90] sm:$0xff] %v1177
        %1690 = vst [vmem:[%s730 + $0xd98] sm:$0xff] %v1178
        %1691 = vst [vmem:[%s730 + $0xda0] sm:$0xff] %v1179
        %1692 = vst [vmem:[%s730 + $0xda8] sm:$0xff] %v1180
        %1693 = vst [vmem:[%s730 + $0xdb0] sm:$0xff] %v1181
        %1694 = vst [vmem:[%s730 + $0xdb8] sm:$0xff] %v1182
        %1695 = vst [vmem:[%s730 + $0xdc0] sm:$0xff] %v1183
        %1696 = vst [vmem:[%s730 + $0xdc8] sm:$0xff] %v1184
        %1697 = vst [vmem:[%s730 + $0xdd0] sm:$0xff] %v1185
        %1698 = vst [vmem:[%s730 + $0xdd8] sm:$0xff] %v1186
        %1699 = vst [vmem:[%s730 + $0xde0] sm:$0xff] %v1187
        %1700 = vst [vmem:[%s730 + $0xde8] sm:$0xff] %v1188
        %1701 = vst [vmem:[%s730 + $0xdf0] sm:$0xff] %v1189
        %1702 = vst [vmem:[%s730 + $0xdf8] sm:$0xff] %v1190
        %1703 = vst [vmem:[%s730 + $0xe00] sm:$0xff] %v1191
        %1704 = vst [vmem:[%s730 + $0xe08] sm:$0xff] %v1192
        %1705 = vst [vmem:[%s730 + $0xe10] sm:$0xff] %v1193
        %1706 = vst [vmem:[%s730 + $0xe18] sm:$0xff] %v1194
        %1707 = vst [vmem:[%s730 + $0xe20] sm:$0xff] %v1195
        %1708 = vst [vmem:[%s730 + $0xe28] sm:$0xff] %v1196
        %1709 = vst [vmem:[%s730 + $0xe30] sm:$0xff] %v1197
        %1710 = vst [vmem:[%s730 + $0xe38] sm:$0xff] %v1198
        %1711 = vst [vmem:[%s730 + $0xe40] sm:$0xff] %v1199
        %1712 = vst [vmem:[%s730 + $0xe48] sm:$0xff] %v1200
        %1713 = vst [vmem:[%s730 + $0xe50] sm:$0xff] %v1201
        %1714 = vst [vmem:[%s730 + $0xe58] sm:$0xff] %v1202
        %1715 = vst [vmem:[%s730 + $0xe60] sm:$0xff] %v1203
        %1716 = vst [vmem:[%s730 + $0xe68] sm:$0xff] %v1204
        %1717 = vst [vmem:[%s730 + $0xe70] sm:$0xff] %v1205
        %1718 = vst [vmem:[%s730 + $0xe78] sm:$0xff] %v1206
        %1719 = vst [vmem:[%s730 + $0xe80] sm:$0xff] %v1207
        %1720 = vst [vmem:[%s730 + $0xe88] sm:$0xff] %v1208
        %1721 = vst [vmem:[%s730 + $0xe90] sm:$0xff] %v1209
        %1722 = vst [vmem:[%s730 + $0xe98] sm:$0xff] %v1210
        %1723 = vst [vmem:[%s730 + $0xea0] sm:$0xff] %v1211
        %1724 = vst [vmem:[%s730 + $0xea8] sm:$0xff] %v1212
        %1725 = vst [vmem:[%s730 + $0xeb0] sm:$0xff] %v1213
        %1726 = vst [vmem:[%s730 + $0xeb8] sm:$0xff] %v1214
        %1727 = vst [vmem:[%s730 + $0xec0] sm:$0xff] %v1215
        %1728 = vst [vmem:[%s730 + $0xec8] sm:$0xff] %v1216
        %1729 = vst [vmem:[%s730 + $0xed0] sm:$0xff] %v1217
        %1730 = vst [vmem:[%s730 + $0xed8] sm:$0xff] %v1218
        %1731 = vst [vmem:[%s730 + $0xee0] sm:$0xff] %v1219
        %1732 = vst [vmem:[%s730 + $0xee8] sm:$0xff] %v1220
        %1733 = vst [vmem:[%s730 + $0xef0] sm:$0xff] %v1221
        %1734 = vst [vmem:[%s730 + $0xef8] sm:$0xff] %v1222
        %1735 = vst [vmem:[%s730 + $0xf00] sm:$0xff] %v1223
        %1736 = vst [vmem:[%s730 + $0xf08] sm:$0xff] %v1224
        %1737 = vst [vmem:[%s730 + $0xf10] sm:$0xff] %v1225
        %1738 = vst [vmem:[%s730 + $0xf18] sm:$0xff] %v1226
        %1739 = vst [vmem:[%s730 + $0xf20] sm:$0xff] %v1227
        %1740 = vst [vmem:[%s730 + $0xf28] sm:$0xff] %v1228
        %1741 = vst [vmem:[%s730 + $0xf30] sm:$0xff] %v1229
        %1742 = vst [vmem:[%s730 + $0xf38] sm:$0xff] %v1230
        %1743 = vst [vmem:[%s730 + $0xf40] sm:$0xff] %v1231
        %1744 = vst [vmem:[%s730 + $0xf48] sm:$0xff] %v1232
        %1745 = vst [vmem:[%s730 + $0xf50] sm:$0xff] %v1233
        %1746 = vst [vmem:[%s730 + $0xf58] sm:$0xff] %v1234
        %1747 = vst [vmem:[%s730 + $0xf60] sm:$0xff] %v1235
        %1748 = vst [vmem:[%s730 + $0xf68] sm:$0xff] %v1236
        %1749 = vst [vmem:[%s730 + $0xf70] sm:$0xff] %v1237
        %1750 = vst [vmem:[%s730 + $0xf78] sm:$0xff] %v1238
        %1751 = vst [vmem:[%s730 + $0xf80] sm:$0xff] %v1239
        %1752 = vst [vmem:[%s730 + $0xf88] sm:$0xff] %v1240
        %1753 = vst [vmem:[%s730 + $0xf90] sm:$0xff] %v1241
        %1754 = vst [vmem:[%s730 + $0xf98] sm:$0xff] %v1242
        %1755 = vst [vmem:[%s730 + $0xfa0] sm:$0xff] %v1243
        %1756 = vst [vmem:[%s730 + $0xfa8] sm:$0xff] %v1244
        %1757 = vst [vmem:[%s730 + $0xfb0] sm:$0xff] %v1245
        %1758 = vst [vmem:[%s730 + $0xfb8] sm:$0xff] %v1246
        %1759 = vst [vmem:[%s730 + $0xfc0] sm:$0xff] %v1247
        %1760 = vst [vmem:[%s730 + $0xfc8] sm:$0xff] %v1248
        %1761 = vst [vmem:[%s730 + $0xfd0] sm:$0xff] %v1249
        %1762 = vst [vmem:[%s730 + $0xfd8] sm:$0xff] %v1250
        %1763 = vst [vmem:[%s730 + $0xfe0] sm:$0xff] %v1251
        %1764 = vst [vmem:[%s730 + $0xfe8] sm:$0xff] %v1252
        %1765 = vst [vmem:[%s730 + $0xff0] sm:$0xff] %v1253
        %1766 = vst [vmem:[%s730 + $0xff8] sm:$0xff] %v1254
        %s1767 = sand.u32 %s62, 1
        %s1768 = sand.u32 %s62, 1
        %s1769 = smul.addr %s1768, 4096
        %s1770 = scalar_lea.vmem [#allocation3], %s1769
        // Predicated region
        $region77: #{tpu_custom_call.1} parent=71 // pred_check
          %p1771 = pneg %p72
        $region78: #{tpu_custom_call.1} parent=71 // pred_check_branch
          %1773 = sbr.rel (%p1771) target = $region80
        $region79: #{tpu_custom_call.1} parent=71 // pred_region
          %s1774 = smul.u32 64, %s16
          %s1775 = smul.u32 8, %s17
          %s1776 = ssub.s32 9, %s1775
          %p1777 = scmp.lt.s32.totalorder %s1776, 8
          %s1778 = scalar_select %p1777, %s1776, 8
          %s1779 = smul.u32 8192, %s1778
          %p1780 = scmp.ne.s32.totalorder 0, %s1779
          %s1781 = smul.addr %s1774, 9
          %s1782 = sadd.s32 %s1775, %s1781
          %s1783 = smul.addr %s1782, 8
          %s1784 = scalar_lea.vmem %s1, %s1783
          %s1785 = smul.u32 %s1778, 8
          // Predicated region
          $region81: #{tpu_custom_call.1} parent=79 // pred_check
            %p1786 = pneg %p1780
          $region82: #{tpu_custom_call.1} parent=79 // pred_check_branch
            %1788 = sbr.rel (%p1786) target = $region84
          $region83: #{tpu_custom_call.1} parent=79 // pred_region
            %p1789 = scmp.lt.u32.totalorder %s1785, 8
            %p1790 = pneg %p1789
            // Predicated region
            $region85: #{tpu_custom_call.1} parent=83 // pred_check
              _
            $region86: #{tpu_custom_call.1} parent=83 // pred_check_branch
              %1792 = sbr.rel (%p1789) target = $region88
            $region87: #{tpu_custom_call.1} parent=83 // pred_region
              %s1933 = sand.u32 %s1785, 7
              %p1934 = scmp.eq.s32.totalorder %s1933, 0
              // Predicated region
              $region100: #{tpu_custom_call.1} parent=87 // pred_check
                %p1935 = pneg %p1934
              $region101: #{tpu_custom_call.1} parent=87 // pred_check_branch
                %1937 = sbr.rel (%p1935) target = $region103
              $region102: #{tpu_custom_call.1} parent=87 // pred_region
                %s1938 = sshrl.u32 %s1785, 3
                // While loop
                $region104: #{tpu_custom_call.1} parent=102 // loop_pre_header
                  _
                $region105: #{tpu_custom_call.1} parent=102 // loop_header
                  %s1942 = sphi 0, %s1944
                  %p1943 = scmp.ge.s32.totalorder %s1942, %s1938
                  %s1947 = sphi 0, %s2080
                  %s1948 = sphi %s1770, %s2083
                  %s1949 = sphi %s1784, %s2084
                $region106: #{tpu_custom_call.1} parent=102 // loop_header_branch
                  %1946 = sbr.rel (%p1943) target = $region110
                $region107: #{tpu_custom_call.1} parent=102 // loop_body
                  %v1950 = vld [vmem:[%s1948] sm:$0xff]
                  %1951 = vst [vmem:[%s1949] sm:$0xff] %v1950
                  %v1952 = vld [vmem:[%s1948 + $0x40] sm:$0xff]
                  %1953 = vst [vmem:[%s1949 + $0x48] sm:$0xff] %v1952
                  %v1954 = vld [vmem:[%s1948 + $0x80] sm:$0xff]
                  %1955 = vst [vmem:[%s1949 + $0x90] sm:$0xff] %v1954
                  %v1956 = vld [vmem:[%s1948 + $0xc0] sm:$0xff]
                  %1957 = vst [vmem:[%s1949 + $0xd8] sm:$0xff] %v1956
                  %v1958 = vld [vmem:[%s1948 + $0x100] sm:$0xff]
                  %1959 = vst [vmem:[%s1949 + $0x120] sm:$0xff] %v1958
                  %v1960 = vld [vmem:[%s1948 + $0x140] sm:$0xff]
                  %1961 = vst [vmem:[%s1949 + $0x168] sm:$0xff] %v1960
                  %v1962 = vld [vmem:[%s1948 + $0x180] sm:$0xff]
                  %1963 = vst [vmem:[%s1949 + $0x1b0] sm:$0xff] %v1962
                  %v1964 = vld [vmem:[%s1948 + $0x1c0] sm:$0xff]
                  %1965 = vst [vmem:[%s1949 + $0x1f8] sm:$0xff] %v1964
                  %v1966 = vld [vmem:[%s1948 + $0x200] sm:$0xff]
                  %1967 = vst [vmem:[%s1949 + $0x240] sm:$0xff] %v1966
                  %v1968 = vld [vmem:[%s1948 + $0x240] sm:$0xff]
                  %1969 = vst [vmem:[%s1949 + $0x288] sm:$0xff] %v1968
                  %v1970 = vld [vmem:[%s1948 + $0x280] sm:$0xff]
                  %1971 = vst [vmem:[%s1949 + $0x2d0] sm:$0xff] %v1970
                  %v1972 = vld [vmem:[%s1948 + $0x2c0] sm:$0xff]
                  %1973 = vst [vmem:[%s1949 + $0x318] sm:$0xff] %v1972
                  %v1974 = vld [vmem:[%s1948 + $0x300] sm:$0xff]
                  %1975 = vst [vmem:[%s1949 + $0x360] sm:$0xff] %v1974
                  %v1976 = vld [vmem:[%s1948 + $0x340] sm:$0xff]
                  %1977 = vst [vmem:[%s1949 + $0x3a8] sm:$0xff] %v1976
                  %v1978 = vld [vmem:[%s1948 + $0x380] sm:$0xff]
                  %1979 = vst [vmem:[%s1949 + $0x3f0] sm:$0xff] %v1978
                  %v1980 = vld [vmem:[%s1948 + $0x3c0] sm:$0xff]
                  %1981 = vst [vmem:[%s1949 + $0x438] sm:$0xff] %v1980
                  %v1982 = vld [vmem:[%s1948 + $0x400] sm:$0xff]
                  %1983 = vst [vmem:[%s1949 + $0x480] sm:$0xff] %v1982
                  %v1984 = vld [vmem:[%s1948 + $0x440] sm:$0xff]
                  %1985 = vst [vmem:[%s1949 + $0x4c8] sm:$0xff] %v1984
                  %v1986 = vld [vmem:[%s1948 + $0x480] sm:$0xff]
                  %1987 = vst [vmem:[%s1949 + $0x510] sm:$0xff] %v1986
                  %v1988 = vld [vmem:[%s1948 + $0x4c0] sm:$0xff]
                  %1989 = vst [vmem:[%s1949 + $0x558] sm:$0xff] %v1988
                  %v1990 = vld [vmem:[%s1948 + $0x500] sm:$0xff]
                  %1991 = vst [vmem:[%s1949 + $0x5a0] sm:$0xff] %v1990
                  %v1992 = vld [vmem:[%s1948 + $0x540] sm:$0xff]
                  %1993 = vst [vmem:[%s1949 + $0x5e8] sm:$0xff] %v1992
                  %v1994 = vld [vmem:[%s1948 + $0x580] sm:$0xff]
                  %1995 = vst [vmem:[%s1949 + $0x630] sm:$0xff] %v1994
                  %v1996 = vld [vmem:[%s1948 + $0x5c0] sm:$0xff]
                  %1997 = vst [vmem:[%s1949 + $0x678] sm:$0xff] %v1996
                  %v1998 = vld [vmem:[%s1948 + $0x600] sm:$0xff]
                  %1999 = vst [vmem:[%s1949 + $0x6c0] sm:$0xff] %v1998
                  %v2000 = vld [vmem:[%s1948 + $0x640] sm:$0xff]
                  %2001 = vst [vmem:[%s1949 + $0x708] sm:$0xff] %v2000
                  %v2002 = vld [vmem:[%s1948 + $0x680] sm:$0xff]
                  %2003 = vst [vmem:[%s1949 + $0x750] sm:$0xff] %v2002
                  %v2004 = vld [vmem:[%s1948 + $0x6c0] sm:$0xff]
                  %2005 = vst [vmem:[%s1949 + $0x798] sm:$0xff] %v2004
                  %v2006 = vld [vmem:[%s1948 + $0x700] sm:$0xff]
                  %2007 = vst [vmem:[%s1949 + $0x7e0] sm:$0xff] %v2006
                  %v2008 = vld [vmem:[%s1948 + $0x740] sm:$0xff]
                  %2009 = vst [vmem:[%s1949 + $0x828] sm:$0xff] %v2008
                  %v2010 = vld [vmem:[%s1948 + $0x780] sm:$0xff]
                  %2011 = vst [vmem:[%s1949 + $0x870] sm:$0xff] %v2010
                  %v2012 = vld [vmem:[%s1948 + $0x7c0] sm:$0xff]
                  %2013 = vst [vmem:[%s1949 + $0x8b8] sm:$0xff] %v2012
                  %v2014 = vld [vmem:[%s1948 + $0x800] sm:$0xff]
                  %2015 = vst [vmem:[%s1949 + $0x900] sm:$0xff] %v2014
                  %v2016 = vld [vmem:[%s1948 + $0x840] sm:$0xff]
                  %2017 = vst [vmem:[%s1949 + $0x948] sm:$0xff] %v2016
                  %v2018 = vld [vmem:[%s1948 + $0x880] sm:$0xff]
                  %2019 = vst [vmem:[%s1949 + $0x990] sm:$0xff] %v2018
                  %v2020 = vld [vmem:[%s1948 + $0x8c0] sm:$0xff]
                  %2021 = vst [vmem:[%s1949 + $0x9d8] sm:$0xff] %v2020
                  %v2022 = vld [vmem:[%s1948 + $0x900] sm:$0xff]
                  %2023 = vst [vmem:[%s1949 + $0xa20] sm:$0xff] %v2022
                  %v2024 = vld [vmem:[%s1948 + $0x940] sm:$0xff]
                  %2025 = vst [vmem:[%s1949 + $0xa68] sm:$0xff] %v2024
                  %v2026 = vld [vmem:[%s1948 + $0x980] sm:$0xff]
                  %2027 = vst [vmem:[%s1949 + $0xab0] sm:$0xff] %v2026
                  %v2028 = vld [vmem:[%s1948 + $0x9c0] sm:$0xff]
                  %2029 = vst [vmem:[%s1949 + $0xaf8] sm:$0xff] %v2028
                  %v2030 = vld [vmem:[%s1948 + $0xa00] sm:$0xff]
                  %2031 = vst [vmem:[%s1949 + $0xb40] sm:$0xff] %v2030
                  %v2032 = vld [vmem:[%s1948 + $0xa40] sm:$0xff]
                  %2033 = vst [vmem:[%s1949 + $0xb88] sm:$0xff] %v2032
                  %v2034 = vld [vmem:[%s1948 + $0xa80] sm:$0xff]
                  %2035 = vst [vmem:[%s1949 + $0xbd0] sm:$0xff] %v2034
                  %v2036 = vld [vmem:[%s1948 + $0xac0] sm:$0xff]
                  %2037 = vst [vmem:[%s1949 + $0xc18] sm:$0xff] %v2036
                  %v2038 = vld [vmem:[%s1948 + $0xb00] sm:$0xff]
                  %2039 = vst [vmem:[%s1949 + $0xc60] sm:$0xff] %v2038
                  %v2040 = vld [vmem:[%s1948 + $0xb40] sm:$0xff]
                  %2041 = vst [vmem:[%s1949 + $0xca8] sm:$0xff] %v2040
                  %v2042 = vld [vmem:[%s1948 + $0xb80] sm:$0xff]
                  %2043 = vst [vmem:[%s1949 + $0xcf0] sm:$0xff] %v2042
                  %v2044 = vld [vmem:[%s1948 + $0xbc0] sm:$0xff]
                  %2045 = vst [vmem:[%s1949 + $0xd38] sm:$0xff] %v2044
                  %v2046 = vld [vmem:[%s1948 + $0xc00] sm:$0xff]
                  %2047 = vst [vmem:[%s1949 + $0xd80] sm:$0xff] %v2046
                  %v2048 = vld [vmem:[%s1948 + $0xc40] sm:$0xff]
                  %2049 = vst [vmem:[%s1949 + $0xdc8] sm:$0xff] %v2048
                  %v2050 = vld [vmem:[%s1948 + $0xc80] sm:$0xff]
                  %2051 = vst [vmem:[%s1949 + $0xe10] sm:$0xff] %v2050
                  %v2052 = vld [vmem:[%s1948 + $0xcc0] sm:$0xff]
                  %2053 = vst [vmem:[%s1949 + $0xe58] sm:$0xff] %v2052
                  %v2054 = vld [vmem:[%s1948 + $0xd00] sm:$0xff]
                  %2055 = vst [vmem:[%s1949 + $0xea0] sm:$0xff] %v2054
                  %v2056 = vld [vmem:[%s1948 + $0xd40] sm:$0xff]
                  %2057 = vst [vmem:[%s1949 + $0xee8] sm:$0xff] %v2056
                  %v2058 = vld [vmem:[%s1948 + $0xd80] sm:$0xff]
                  %2059 = vst [vmem:[%s1949 + $0xf30] sm:$0xff] %v2058
                  %v2060 = vld [vmem:[%s1948 + $0xdc0] sm:$0xff]
                  %2061 = vst [vmem:[%s1949 + $0xf78] sm:$0xff] %v2060
                  %v2062 = vld [vmem:[%s1948 + $0xe00] sm:$0xff]
                  %2063 = vst [vmem:[%s1949 + $0xfc0] sm:$0xff] %v2062
                  %v2064 = vld [vmem:[%s1948 + $0xe40] sm:$0xff]
                  %2065 = vst [vmem:[%s1949 + $0x1008] sm:$0xff] %v2064
                  %v2066 = vld [vmem:[%s1948 + $0xe80] sm:$0xff]
                  %2067 = vst [vmem:[%s1949 + $0x1050] sm:$0xff] %v2066
                  %v2068 = vld [vmem:[%s1948 + $0xec0] sm:$0xff]
                  %2069 = vst [vmem:[%s1949 + $0x1098] sm:$0xff] %v2068
                  %v2070 = vld [vmem:[%s1948 + $0xf00] sm:$0xff]
                  %2071 = vst [vmem:[%s1949 + $0x10e0] sm:$0xff] %v2070
                  %v2072 = vld [vmem:[%s1948 + $0xf40] sm:$0xff]
                  %2073 = vst [vmem:[%s1949 + $0x1128] sm:$0xff] %v2072
                  %v2074 = vld [vmem:[%s1948 + $0xf80] sm:$0xff]
                  %2075 = vst [vmem:[%s1949 + $0x1170] sm:$0xff] %v2074
                  %v2076 = vld [vmem:[%s1948 + $0xfc0] sm:$0xff]
                  %2077 = vst [vmem:[%s1949 + $0x11b8] sm:$0xff] %v2076
                  %s2078 = sadd.s32 1, %s1947
                  %p2079 = scmp.ge.s32.totalorder %s2078, %s1938
                  %s2080 = scalar_select %p2079, 0, %s2078
                  %s2081 = smul.u32 %s2080, 8
                  %s2082 = smul.u32 %s2080, 8
                  %s2083 = scalar_lea.vmem %s1770, %s2081 [#allocation3]
                  %s2084 = scalar_lea.vmem %s1784, %s2082
                $region108: #{tpu_custom_call.1} parent=102 // loop_footer
                  %s1944 = sadd.s32 %s1942, 1
                $region109: #{tpu_custom_call.1} parent=102 // loop_footer_branch
                  %1941 = sbr.rel target = $region105
                $region110: #{tpu_custom_call.1} parent=102 // loop_exit
                  _
              $region103: #{tpu_custom_call.1} parent=87 // pred_fallthru
                _
              %p2085 = pneg %p1934
              // Predicated region
              $region111: #{tpu_custom_call.1} parent=87 // pred_check
                _
              $region112: #{tpu_custom_call.1} parent=87 // pred_check_branch
                %2087 = sbr.rel (%p1934) target = $region114
              $region113: #{tpu_custom_call.1} parent=87 // pred_region
                %s2088 = sand.u32 %s1785, 7
                %s2089 = ssub.s32 %s1785, %s2088
                %s2090 = scalar_lea.vmem %s1770, %s2089 [#allocation3]
                %s2091 = ssub.s32 %s1785, %s2088
                %s2092 = scalar_lea.vmem %s1784, %s2091
                %s2093 = sshrl.u32 %s1785, 3
                // While loop
                $region115: #{tpu_custom_call.1} parent=113 // loop_pre_header
                  _
                $region116: #{tpu_custom_call.1} parent=113 // loop_header
                  %s2097 = sphi 0, %s2099
                  %p2098 = scmp.ge.s32.totalorder %s2097, %s2093
                  %s2102 = sphi 0, %s2235
                  %s2103 = sphi %s1770, %s2238
                  %s2104 = sphi %s1784, %s2239
                $region117: #{tpu_custom_call.1} parent=113 // loop_header_branch
                  %2101 = sbr.rel (%p2098) target = $region121
                $region118: #{tpu_custom_call.1} parent=113 // loop_body
                  %v2105 = vld [vmem:[%s2103] sm:$0xff]
                  %2106 = vst [vmem:[%s2104] sm:$0xff] %v2105
                  %v2107 = vld [vmem:[%s2103 + $0x40] sm:$0xff]
                  %2108 = vst [vmem:[%s2104 + $0x48] sm:$0xff] %v2107
                  %v2109 = vld [vmem:[%s2103 + $0x80] sm:$0xff]
                  %2110 = vst [vmem:[%s2104 + $0x90] sm:$0xff] %v2109
                  %v2111 = vld [vmem:[%s2103 + $0xc0] sm:$0xff]
                  %2112 = vst [vmem:[%s2104 + $0xd8] sm:$0xff] %v2111
                  %v2113 = vld [vmem:[%s2103 + $0x100] sm:$0xff]
                  %2114 = vst [vmem:[%s2104 + $0x120] sm:$0xff] %v2113
                  %v2115 = vld [vmem:[%s2103 + $0x140] sm:$0xff]
                  %2116 = vst [vmem:[%s2104 + $0x168] sm:$0xff] %v2115
                  %v2117 = vld [vmem:[%s2103 + $0x180] sm:$0xff]
                  %2118 = vst [vmem:[%s2104 + $0x1b0] sm:$0xff] %v2117
                  %v2119 = vld [vmem:[%s2103 + $0x1c0] sm:$0xff]
                  %2120 = vst [vmem:[%s2104 + $0x1f8] sm:$0xff] %v2119
                  %v2121 = vld [vmem:[%s2103 + $0x200] sm:$0xff]
                  %2122 = vst [vmem:[%s2104 + $0x240] sm:$0xff] %v2121
                  %v2123 = vld [vmem:[%s2103 + $0x240] sm:$0xff]
                  %2124 = vst [vmem:[%s2104 + $0x288] sm:$0xff] %v2123
                  %v2125 = vld [vmem:[%s2103 + $0x280] sm:$0xff]
                  %2126 = vst [vmem:[%s2104 + $0x2d0] sm:$0xff] %v2125
                  %v2127 = vld [vmem:[%s2103 + $0x2c0] sm:$0xff]
                  %2128 = vst [vmem:[%s2104 + $0x318] sm:$0xff] %v2127
                  %v2129 = vld [vmem:[%s2103 + $0x300] sm:$0xff]
                  %2130 = vst [vmem:[%s2104 + $0x360] sm:$0xff] %v2129
                  %v2131 = vld [vmem:[%s2103 + $0x340] sm:$0xff]
                  %2132 = vst [vmem:[%s2104 + $0x3a8] sm:$0xff] %v2131
                  %v2133 = vld [vmem:[%s2103 + $0x380] sm:$0xff]
                  %2134 = vst [vmem:[%s2104 + $0x3f0] sm:$0xff] %v2133
                  %v2135 = vld [vmem:[%s2103 + $0x3c0] sm:$0xff]
                  %2136 = vst [vmem:[%s2104 + $0x438] sm:$0xff] %v2135
                  %v2137 = vld [vmem:[%s2103 + $0x400] sm:$0xff]
                  %2138 = vst [vmem:[%s2104 + $0x480] sm:$0xff] %v2137
                  %v2139 = vld [vmem:[%s2103 + $0x440] sm:$0xff]
                  %2140 = vst [vmem:[%s2104 + $0x4c8] sm:$0xff] %v2139
                  %v2141 = vld [vmem:[%s2103 + $0x480] sm:$0xff]
                  %2142 = vst [vmem:[%s2104 + $0x510] sm:$0xff] %v2141
                  %v2143 = vld [vmem:[%s2103 + $0x4c0] sm:$0xff]
                  %2144 = vst [vmem:[%s2104 + $0x558] sm:$0xff] %v2143
                  %v2145 = vld [vmem:[%s2103 + $0x500] sm:$0xff]
                  %2146 = vst [vmem:[%s2104 + $0x5a0] sm:$0xff] %v2145
                  %v2147 = vld [vmem:[%s2103 + $0x540] sm:$0xff]
                  %2148 = vst [vmem:[%s2104 + $0x5e8] sm:$0xff] %v2147
                  %v2149 = vld [vmem:[%s2103 + $0x580] sm:$0xff]
                  %2150 = vst [vmem:[%s2104 + $0x630] sm:$0xff] %v2149
                  %v2151 = vld [vmem:[%s2103 + $0x5c0] sm:$0xff]
                  %2152 = vst [vmem:[%s2104 + $0x678] sm:$0xff] %v2151
                  %v2153 = vld [vmem:[%s2103 + $0x600] sm:$0xff]
                  %2154 = vst [vmem:[%s2104 + $0x6c0] sm:$0xff] %v2153
                  %v2155 = vld [vmem:[%s2103 + $0x640] sm:$0xff]
                  %2156 = vst [vmem:[%s2104 + $0x708] sm:$0xff] %v2155
                  %v2157 = vld [vmem:[%s2103 + $0x680] sm:$0xff]
                  %2158 = vst [vmem:[%s2104 + $0x750] sm:$0xff] %v2157
                  %v2159 = vld [vmem:[%s2103 + $0x6c0] sm:$0xff]
                  %2160 = vst [vmem:[%s2104 + $0x798] sm:$0xff] %v2159
                  %v2161 = vld [vmem:[%s2103 + $0x700] sm:$0xff]
                  %2162 = vst [vmem:[%s2104 + $0x7e0] sm:$0xff] %v2161
                  %v2163 = vld [vmem:[%s2103 + $0x740] sm:$0xff]
                  %2164 = vst [vmem:[%s2104 + $0x828] sm:$0xff] %v2163
                  %v2165 = vld [vmem:[%s2103 + $0x780] sm:$0xff]
                  %2166 = vst [vmem:[%s2104 + $0x870] sm:$0xff] %v2165
                  %v2167 = vld [vmem:[%s2103 + $0x7c0] sm:$0xff]
                  %2168 = vst [vmem:[%s2104 + $0x8b8] sm:$0xff] %v2167
                  %v2169 = vld [vmem:[%s2103 + $0x800] sm:$0xff]
                  %2170 = vst [vmem:[%s2104 + $0x900] sm:$0xff] %v2169
                  %v2171 = vld [vmem:[%s2103 + $0x840] sm:$0xff]
                  %2172 = vst [vmem:[%s2104 + $0x948] sm:$0xff] %v2171
                  %v2173 = vld [vmem:[%s2103 + $0x880] sm:$0xff]
                  %2174 = vst [vmem:[%s2104 + $0x990] sm:$0xff] %v2173
                  %v2175 = vld [vmem:[%s2103 + $0x8c0] sm:$0xff]
                  %2176 = vst [vmem:[%s2104 + $0x9d8] sm:$0xff] %v2175
                  %v2177 = vld [vmem:[%s2103 + $0x900] sm:$0xff]
                  %2178 = vst [vmem:[%s2104 + $0xa20] sm:$0xff] %v2177
                  %v2179 = vld [vmem:[%s2103 + $0x940] sm:$0xff]
                  %2180 = vst [vmem:[%s2104 + $0xa68] sm:$0xff] %v2179
                  %v2181 = vld [vmem:[%s2103 + $0x980] sm:$0xff]
                  %2182 = vst [vmem:[%s2104 + $0xab0] sm:$0xff] %v2181
                  %v2183 = vld [vmem:[%s2103 + $0x9c0] sm:$0xff]
                  %2184 = vst [vmem:[%s2104 + $0xaf8] sm:$0xff] %v2183
                  %v2185 = vld [vmem:[%s2103 + $0xa00] sm:$0xff]
                  %2186 = vst [vmem:[%s2104 + $0xb40] sm:$0xff] %v2185
                  %v2187 = vld [vmem:[%s2103 + $0xa40] sm:$0xff]
                  %2188 = vst [vmem:[%s2104 + $0xb88] sm:$0xff] %v2187
                  %v2189 = vld [vmem:[%s2103 + $0xa80] sm:$0xff]
                  %2190 = vst [vmem:[%s2104 + $0xbd0] sm:$0xff] %v2189
                  %v2191 = vld [vmem:[%s2103 + $0xac0] sm:$0xff]
                  %2192 = vst [vmem:[%s2104 + $0xc18] sm:$0xff] %v2191
                  %v2193 = vld [vmem:[%s2103 + $0xb00] sm:$0xff]
                  %2194 = vst [vmem:[%s2104 + $0xc60] sm:$0xff] %v2193
                  %v2195 = vld [vmem:[%s2103 + $0xb40] sm:$0xff]
                  %2196 = vst [vmem:[%s2104 + $0xca8] sm:$0xff] %v2195
                  %v2197 = vld [vmem:[%s2103 + $0xb80] sm:$0xff]
                  %2198 = vst [vmem:[%s2104 + $0xcf0] sm:$0xff] %v2197
                  %v2199 = vld [vmem:[%s2103 + $0xbc0] sm:$0xff]
                  %2200 = vst [vmem:[%s2104 + $0xd38] sm:$0xff] %v2199
                  %v2201 = vld [vmem:[%s2103 + $0xc00] sm:$0xff]
                  %2202 = vst [vmem:[%s2104 + $0xd80] sm:$0xff] %v2201
                  %v2203 = vld [vmem:[%s2103 + $0xc40] sm:$0xff]
                  %2204 = vst [vmem:[%s2104 + $0xdc8] sm:$0xff] %v2203
                  %v2205 = vld [vmem:[%s2103 + $0xc80] sm:$0xff]
                  %2206 = vst [vmem:[%s2104 + $0xe10] sm:$0xff] %v2205
                  %v2207 = vld [vmem:[%s2103 + $0xcc0] sm:$0xff]
                  %2208 = vst [vmem:[%s2104 + $0xe58] sm:$0xff] %v2207
                  %v2209 = vld [vmem:[%s2103 + $0xd00] sm:$0xff]
                  %2210 = vst [vmem:[%s2104 + $0xea0] sm:$0xff] %v2209
                  %v2211 = vld [vmem:[%s2103 + $0xd40] sm:$0xff]
                  %2212 = vst [vmem:[%s2104 + $0xee8] sm:$0xff] %v2211
                  %v2213 = vld [vmem:[%s2103 + $0xd80] sm:$0xff]
                  %2214 = vst [vmem:[%s2104 + $0xf30] sm:$0xff] %v2213
                  %v2215 = vld [vmem:[%s2103 + $0xdc0] sm:$0xff]
                  %2216 = vst [vmem:[%s2104 + $0xf78] sm:$0xff] %v2215
                  %v2217 = vld [vmem:[%s2103 + $0xe00] sm:$0xff]
                  %2218 = vst [vmem:[%s2104 + $0xfc0] sm:$0xff] %v2217
                  %v2219 = vld [vmem:[%s2103 + $0xe40] sm:$0xff]
                  %2220 = vst [vmem:[%s2104 + $0x1008] sm:$0xff] %v2219
                  %v2221 = vld [vmem:[%s2103 + $0xe80] sm:$0xff]
                  %2222 = vst [vmem:[%s2104 + $0x1050] sm:$0xff] %v2221
                  %v2223 = vld [vmem:[%s2103 + $0xec0] sm:$0xff]
                  %2224 = vst [vmem:[%s2104 + $0x1098] sm:$0xff] %v2223
                  %v2225 = vld [vmem:[%s2103 + $0xf00] sm:$0xff]
                  %2226 = vst [vmem:[%s2104 + $0x10e0] sm:$0xff] %v2225
                  %v2227 = vld [vmem:[%s2103 + $0xf40] sm:$0xff]
                  %2228 = vst [vmem:[%s2104 + $0x1128] sm:$0xff] %v2227
                  %v2229 = vld [vmem:[%s2103 + $0xf80] sm:$0xff]
                  %2230 = vst [vmem:[%s2104 + $0x1170] sm:$0xff] %v2229
                  %v2231 = vld [vmem:[%s2103 + $0xfc0] sm:$0xff]
                  %2232 = vst [vmem:[%s2104 + $0x11b8] sm:$0xff] %v2231
                  %s2233 = sadd.s32 1, %s2102
                  %p2234 = scmp.ge.s32.totalorder %s2233, %s2093
                  %s2235 = scalar_select %p2234, 0, %s2233
                  %s2236 = smul.u32 %s2235, 8
                  %s2237 = smul.u32 %s2235, 8
                  %s2238 = scalar_lea.vmem %s1770, %s2236 [#allocation3]
                  %s2239 = scalar_lea.vmem %s1784, %s2237
                $region119: #{tpu_custom_call.1} parent=113 // loop_footer
                  %s2099 = sadd.s32 %s2097, 1
                $region120: #{tpu_custom_call.1} parent=113 // loop_footer_branch
                  %2096 = sbr.rel target = $region116
                $region121: #{tpu_custom_call.1} parent=113 // loop_exit
                  _
                %s2240 = sshllo.u32 0, %s2088
                loop: start=0, step=1, limit=1
                $region122: #{tpu_custom_call.1} parent=113 // loop_pre_header
                  _
                $region123: #{tpu_custom_call.1} parent=113 // loop_header
                  %s2242 = sphi 0, %s2246
                  %p2243 = scmp.ge.s32.totalorder %s2242, 1
                  %s2247 = sphi %s2090, %s2090
                  %s2248 = sphi %s2092, %s2092
                $region124: #{tpu_custom_call.1} parent=113 // loop_header_branch
                  %2245 = sbr.rel (%p2243) target = $region128
                $region125: #{tpu_custom_call.1} parent=113 // loop_body
                  %v2249 = vld [vmem:[%s2247] sm:%s2240]
                  %2250 = vst [vmem:[%s2248] sm:%s2240] %v2249
                  %v2251 = vld [vmem:[%s2247 + $0x40] sm:%s2240]
                  %2252 = vst [vmem:[%s2248 + $0x48] sm:%s2240] %v2251
                  %v2253 = vld [vmem:[%s2247 + $0x80] sm:%s2240]
                  %2254 = vst [vmem:[%s2248 + $0x90] sm:%s2240] %v2253
                  %v2255 = vld [vmem:[%s2247 + $0xc0] sm:%s2240]
                  %2256 = vst [vmem:[%s2248 + $0xd8] sm:%s2240] %v2255
                  %v2257 = vld [vmem:[%s2247 + $0x100] sm:%s2240]
                  %2258 = vst [vmem:[%s2248 + $0x120] sm:%s2240] %v2257
                  %v2259 = vld [vmem:[%s2247 + $0x140] sm:%s2240]
                  %2260 = vst [vmem:[%s2248 + $0x168] sm:%s2240] %v2259
                  %v2261 = vld [vmem:[%s2247 + $0x180] sm:%s2240]
                  %2262 = vst [vmem:[%s2248 + $0x1b0] sm:%s2240] %v2261
                  %v2263 = vld [vmem:[%s2247 + $0x1c0] sm:%s2240]
                  %2264 = vst [vmem:[%s2248 + $0x1f8] sm:%s2240] %v2263
                  %v2265 = vld [vmem:[%s2247 + $0x200] sm:%s2240]
                  %2266 = vst [vmem:[%s2248 + $0x240] sm:%s2240] %v2265
                  %v2267 = vld [vmem:[%s2247 + $0x240] sm:%s2240]
                  %2268 = vst [vmem:[%s2248 + $0x288] sm:%s2240] %v2267
                  %v2269 = vld [vmem:[%s2247 + $0x280] sm:%s2240]
                  %2270 = vst [vmem:[%s2248 + $0x2d0] sm:%s2240] %v2269
                  %v2271 = vld [vmem:[%s2247 + $0x2c0] sm:%s2240]
                  %2272 = vst [vmem:[%s2248 + $0x318] sm:%s2240] %v2271
                  %v2273 = vld [vmem:[%s2247 + $0x300] sm:%s2240]
                  %2274 = vst [vmem:[%s2248 + $0x360] sm:%s2240] %v2273
                  %v2275 = vld [vmem:[%s2247 + $0x340] sm:%s2240]
                  %2276 = vst [vmem:[%s2248 + $0x3a8] sm:%s2240] %v2275
                  %v2277 = vld [vmem:[%s2247 + $0x380] sm:%s2240]
                  %2278 = vst [vmem:[%s2248 + $0x3f0] sm:%s2240] %v2277
                  %v2279 = vld [vmem:[%s2247 + $0x3c0] sm:%s2240]
                  %2280 = vst [vmem:[%s2248 + $0x438] sm:%s2240] %v2279
                  %v2281 = vld [vmem:[%s2247 + $0x400] sm:%s2240]
                  %2282 = vst [vmem:[%s2248 + $0x480] sm:%s2240] %v2281
                  %v2283 = vld [vmem:[%s2247 + $0x440] sm:%s2240]
                  %2284 = vst [vmem:[%s2248 + $0x4c8] sm:%s2240] %v2283
                  %v2285 = vld [vmem:[%s2247 + $0x480] sm:%s2240]
                  %2286 = vst [vmem:[%s2248 + $0x510] sm:%s2240] %v2285
                  %v2287 = vld [vmem:[%s2247 + $0x4c0] sm:%s2240]
                  %2288 = vst [vmem:[%s2248 + $0x558] sm:%s2240] %v2287
                  %v2289 = vld [vmem:[%s2247 + $0x500] sm:%s2240]
                  %2290 = vst [vmem:[%s2248 + $0x5a0] sm:%s2240] %v2289
                  %v2291 = vld [vmem:[%s2247 + $0x540] sm:%s2240]
                  %2292 = vst [vmem:[%s2248 + $0x5e8] sm:%s2240] %v2291
                  %v2293 = vld [vmem:[%s2247 + $0x580] sm:%s2240]
                  %2294 = vst [vmem:[%s2248 + $0x630] sm:%s2240] %v2293
                  %v2295 = vld [vmem:[%s2247 + $0x5c0] sm:%s2240]
                  %2296 = vst [vmem:[%s2248 + $0x678] sm:%s2240] %v2295
                  %v2297 = vld [vmem:[%s2247 + $0x600] sm:%s2240]
                  %2298 = vst [vmem:[%s2248 + $0x6c0] sm:%s2240] %v2297
                  %v2299 = vld [vmem:[%s2247 + $0x640] sm:%s2240]
                  %2300 = vst [vmem:[%s2248 + $0x708] sm:%s2240] %v2299
                  %v2301 = vld [vmem:[%s2247 + $0x680] sm:%s2240]
                  %2302 = vst [vmem:[%s2248 + $0x750] sm:%s2240] %v2301
                  %v2303 = vld [vmem:[%s2247 + $0x6c0] sm:%s2240]
                  %2304 = vst [vmem:[%s2248 + $0x798] sm:%s2240] %v2303
                  %v2305 = vld [vmem:[%s2247 + $0x700] sm:%s2240]
                  %2306 = vst [vmem:[%s2248 + $0x7e0] sm:%s2240] %v2305
                  %v2307 = vld [vmem:[%s2247 + $0x740] sm:%s2240]
                  %2308 = vst [vmem:[%s2248 + $0x828] sm:%s2240] %v2307
                  %v2309 = vld [vmem:[%s2247 + $0x780] sm:%s2240]
                  %2310 = vst [vmem:[%s2248 + $0x870] sm:%s2240] %v2309
                  %v2311 = vld [vmem:[%s2247 + $0x7c0] sm:%s2240]
                  %2312 = vst [vmem:[%s2248 + $0x8b8] sm:%s2240] %v2311
                  %v2313 = vld [vmem:[%s2247 + $0x800] sm:%s2240]
                  %2314 = vst [vmem:[%s2248 + $0x900] sm:%s2240] %v2313
                  %v2315 = vld [vmem:[%s2247 + $0x840] sm:%s2240]
                  %2316 = vst [vmem:[%s2248 + $0x948] sm:%s2240] %v2315
                  %v2317 = vld [vmem:[%s2247 + $0x880] sm:%s2240]
                  %2318 = vst [vmem:[%s2248 + $0x990] sm:%s2240] %v2317
                  %v2319 = vld [vmem:[%s2247 + $0x8c0] sm:%s2240]
                  %2320 = vst [vmem:[%s2248 + $0x9d8] sm:%s2240] %v2319
                  %v2321 = vld [vmem:[%s2247 + $0x900] sm:%s2240]
                  %2322 = vst [vmem:[%s2248 + $0xa20] sm:%s2240] %v2321
                  %v2323 = vld [vmem:[%s2247 + $0x940] sm:%s2240]
                  %2324 = vst [vmem:[%s2248 + $0xa68] sm:%s2240] %v2323
                  %v2325 = vld [vmem:[%s2247 + $0x980] sm:%s2240]
                  %2326 = vst [vmem:[%s2248 + $0xab0] sm:%s2240] %v2325
                  %v2327 = vld [vmem:[%s2247 + $0x9c0] sm:%s2240]
                  %2328 = vst [vmem:[%s2248 + $0xaf8] sm:%s2240] %v2327
                  %v2329 = vld [vmem:[%s2247 + $0xa00] sm:%s2240]
                  %2330 = vst [vmem:[%s2248 + $0xb40] sm:%s2240] %v2329
                  %v2331 = vld [vmem:[%s2247 + $0xa40] sm:%s2240]
                  %2332 = vst [vmem:[%s2248 + $0xb88] sm:%s2240] %v2331
                  %v2333 = vld [vmem:[%s2247 + $0xa80] sm:%s2240]
                  %2334 = vst [vmem:[%s2248 + $0xbd0] sm:%s2240] %v2333
                  %v2335 = vld [vmem:[%s2247 + $0xac0] sm:%s2240]
                  %2336 = vst [vmem:[%s2248 + $0xc18] sm:%s2240] %v2335
                  %v2337 = vld [vmem:[%s2247 + $0xb00] sm:%s2240]
                  %2338 = vst [vmem:[%s2248 + $0xc60] sm:%s2240] %v2337
                  %v2339 = vld [vmem:[%s2247 + $0xb40] sm:%s2240]
                  %2340 = vst [vmem:[%s2248 + $0xca8] sm:%s2240] %v2339
                  %v2341 = vld [vmem:[%s2247 + $0xb80] sm:%s2240]
                  %2342 = vst [vmem:[%s2248 + $0xcf0] sm:%s2240] %v2341
                  %v2343 = vld [vmem:[%s2247 + $0xbc0] sm:%s2240]
                  %2344 = vst [vmem:[%s2248 + $0xd38] sm:%s2240] %v2343
                  %v2345 = vld [vmem:[%s2247 + $0xc00] sm:%s2240]
                  %2346 = vst [vmem:[%s2248 + $0xd80] sm:%s2240] %v2345
                  %v2347 = vld [vmem:[%s2247 + $0xc40] sm:%s2240]
                  %2348 = vst [vmem:[%s2248 + $0xdc8] sm:%s2240] %v2347
                  %v2349 = vld [vmem:[%s2247 + $0xc80] sm:%s2240]
                  %2350 = vst [vmem:[%s2248 + $0xe10] sm:%s2240] %v2349
                  %v2351 = vld [vmem:[%s2247 + $0xcc0] sm:%s2240]
                  %2352 = vst [vmem:[%s2248 + $0xe58] sm:%s2240] %v2351
                  %v2353 = vld [vmem:[%s2247 + $0xd00] sm:%s2240]
                  %2354 = vst [vmem:[%s2248 + $0xea0] sm:%s2240] %v2353
                  %v2355 = vld [vmem:[%s2247 + $0xd40] sm:%s2240]
                  %2356 = vst [vmem:[%s2248 + $0xee8] sm:%s2240] %v2355
                  %v2357 = vld [vmem:[%s2247 + $0xd80] sm:%s2240]
                  %2358 = vst [vmem:[%s2248 + $0xf30] sm:%s2240] %v2357
                  %v2359 = vld [vmem:[%s2247 + $0xdc0] sm:%s2240]
                  %2360 = vst [vmem:[%s2248 + $0xf78] sm:%s2240] %v2359
                  %v2361 = vld [vmem:[%s2247 + $0xe00] sm:%s2240]
                  %2362 = vst [vmem:[%s2248 + $0xfc0] sm:%s2240] %v2361
                  %v2363 = vld [vmem:[%s2247 + $0xe40] sm:%s2240]
                  %2364 = vst [vmem:[%s2248 + $0x1008] sm:%s2240] %v2363
                  %v2365 = vld [vmem:[%s2247 + $0xe80] sm:%s2240]
                  %2366 = vst [vmem:[%s2248 + $0x1050] sm:%s2240] %v2365
                  %v2367 = vld [vmem:[%s2247 + $0xec0] sm:%s2240]
                  %2368 = vst [vmem:[%s2248 + $0x1098] sm:%s2240] %v2367
                  %v2369 = vld [vmem:[%s2247 + $0xf00] sm:%s2240]
                  %2370 = vst [vmem:[%s2248 + $0x10e0] sm:%s2240] %v2369
                  %v2371 = vld [vmem:[%s2247 + $0xf40] sm:%s2240]
                  %2372 = vst [vmem:[%s2248 + $0x1128] sm:%s2240] %v2371
                  %v2373 = vld [vmem:[%s2247 + $0xf80] sm:%s2240]
                  %2374 = vst [vmem:[%s2248 + $0x1170] sm:%s2240] %v2373
                  %v2375 = vld [vmem:[%s2247 + $0xfc0] sm:%s2240]
                  %2376 = vst [vmem:[%s2248 + $0x11b8] sm:%s2240] %v2375
                $region126: #{tpu_custom_call.1} parent=113 // loop_footer
                  %s2246 = sadd.s32 1, %s2242
                $region127: #{tpu_custom_call.1} parent=113 // loop_footer_branch
                  %2241 = sbr.rel target = $region123
                $region128: #{tpu_custom_call.1} parent=113 // loop_exit
                  _
              $region114: #{tpu_custom_call.1} parent=87 // pred_fallthru
                _
            $region88: #{tpu_custom_call.1} parent=83 // pred_fallthru
              _
            // Predicated region
            $region89: #{tpu_custom_call.1} parent=83 // pred_check
              %p1793 = pneg %p1789
            $region90: #{tpu_custom_call.1} parent=83 // pred_check_branch
              %1795 = sbr.rel (%p1793) target = $region92
            $region91: #{tpu_custom_call.1} parent=83 // pred_region
              %s1796 = sshllo.u32 0, %s1785
              loop: start=0, step=1, limit=1
              $region93: #{tpu_custom_call.1} parent=91 // loop_pre_header
                _
              $region94: #{tpu_custom_call.1} parent=91 // loop_header
                %s1798 = sphi 0, %s1802
                %p1799 = scmp.ge.s32.totalorder %s1798, 1
                %s1803 = sphi %s1770, %s1770
                %s1804 = sphi %s1784, %s1784
              $region95: #{tpu_custom_call.1} parent=91 // loop_header_branch
                %1801 = sbr.rel (%p1799) target = $region99
              $region96: #{tpu_custom_call.1} parent=91 // loop_body
                %v1805 = vld [vmem:[%s1803] sm:%s1796]
                %1806 = vst [vmem:[%s1804] sm:%s1796] %v1805
                %v1807 = vld [vmem:[%s1803 + $0x40] sm:%s1796]
                %1808 = vst [vmem:[%s1804 + $0x48] sm:%s1796] %v1807
                %v1809 = vld [vmem:[%s1803 + $0x80] sm:%s1796]
                %1810 = vst [vmem:[%s1804 + $0x90] sm:%s1796] %v1809
                %v1811 = vld [vmem:[%s1803 + $0xc0] sm:%s1796]
                %1812 = vst [vmem:[%s1804 + $0xd8] sm:%s1796] %v1811
                %v1813 = vld [vmem:[%s1803 + $0x100] sm:%s1796]
                %1814 = vst [vmem:[%s1804 + $0x120] sm:%s1796] %v1813
                %v1815 = vld [vmem:[%s1803 + $0x140] sm:%s1796]
                %1816 = vst [vmem:[%s1804 + $0x168] sm:%s1796] %v1815
                %v1817 = vld [vmem:[%s1803 + $0x180] sm:%s1796]
                %1818 = vst [vmem:[%s1804 + $0x1b0] sm:%s1796] %v1817
                %v1819 = vld [vmem:[%s1803 + $0x1c0] sm:%s1796]
                %1820 = vst [vmem:[%s1804 + $0x1f8] sm:%s1796] %v1819
                %v1821 = vld [vmem:[%s1803 + $0x200] sm:%s1796]
                %1822 = vst [vmem:[%s1804 + $0x240] sm:%s1796] %v1821
                %v1823 = vld [vmem:[%s1803 + $0x240] sm:%s1796]
                %1824 = vst [vmem:[%s1804 + $0x288] sm:%s1796] %v1823
                %v1825 = vld [vmem:[%s1803 + $0x280] sm:%s1796]
                %1826 = vst [vmem:[%s1804 + $0x2d0] sm:%s1796] %v1825
                %v1827 = vld [vmem:[%s1803 + $0x2c0] sm:%s1796]
                %1828 = vst [vmem:[%s1804 + $0x318] sm:%s1796] %v1827
                %v1829 = vld [vmem:[%s1803 + $0x300] sm:%s1796]
                %1830 = vst [vmem:[%s1804 + $0x360] sm:%s1796] %v1829
                %v1831 = vld [vmem:[%s1803 + $0x340] sm:%s1796]
                %1832 = vst [vmem:[%s1804 + $0x3a8] sm:%s1796] %v1831
                %v1833 = vld [vmem:[%s1803 + $0x380] sm:%s1796]
                %1834 = vst [vmem:[%s1804 + $0x3f0] sm:%s1796] %v1833
                %v1835 = vld [vmem:[%s1803 + $0x3c0] sm:%s1796]
                %1836 = vst [vmem:[%s1804 + $0x438] sm:%s1796] %v1835
                %v1837 = vld [vmem:[%s1803 + $0x400] sm:%s1796]
                %1838 = vst [vmem:[%s1804 + $0x480] sm:%s1796] %v1837
                %v1839 = vld [vmem:[%s1803 + $0x440] sm:%s1796]
                %1840 = vst [vmem:[%s1804 + $0x4c8] sm:%s1796] %v1839
                %v1841 = vld [vmem:[%s1803 + $0x480] sm:%s1796]
                %1842 = vst [vmem:[%s1804 + $0x510] sm:%s1796] %v1841
                %v1843 = vld [vmem:[%s1803 + $0x4c0] sm:%s1796]
                %1844 = vst [vmem:[%s1804 + $0x558] sm:%s1796] %v1843
                %v1845 = vld [vmem:[%s1803 + $0x500] sm:%s1796]
                %1846 = vst [vmem:[%s1804 + $0x5a0] sm:%s1796] %v1845
                %v1847 = vld [vmem:[%s1803 + $0x540] sm:%s1796]
                %1848 = vst [vmem:[%s1804 + $0x5e8] sm:%s1796] %v1847
                %v1849 = vld [vmem:[%s1803 + $0x580] sm:%s1796]
                %1850 = vst [vmem:[%s1804 + $0x630] sm:%s1796] %v1849
                %v1851 = vld [vmem:[%s1803 + $0x5c0] sm:%s1796]
                %1852 = vst [vmem:[%s1804 + $0x678] sm:%s1796] %v1851
                %v1853 = vld [vmem:[%s1803 + $0x600] sm:%s1796]
                %1854 = vst [vmem:[%s1804 + $0x6c0] sm:%s1796] %v1853
                %v1855 = vld [vmem:[%s1803 + $0x640] sm:%s1796]
                %1856 = vst [vmem:[%s1804 + $0x708] sm:%s1796] %v1855
                %v1857 = vld [vmem:[%s1803 + $0x680] sm:%s1796]
                %1858 = vst [vmem:[%s1804 + $0x750] sm:%s1796] %v1857
                %v1859 = vld [vmem:[%s1803 + $0x6c0] sm:%s1796]
                %1860 = vst [vmem:[%s1804 + $0x798] sm:%s1796] %v1859
                %v1861 = vld [vmem:[%s1803 + $0x700] sm:%s1796]
                %1862 = vst [vmem:[%s1804 + $0x7e0] sm:%s1796] %v1861
                %v1863 = vld [vmem:[%s1803 + $0x740] sm:%s1796]
                %1864 = vst [vmem:[%s1804 + $0x828] sm:%s1796] %v1863
                %v1865 = vld [vmem:[%s1803 + $0x780] sm:%s1796]
                %1866 = vst [vmem:[%s1804 + $0x870] sm:%s1796] %v1865
                %v1867 = vld [vmem:[%s1803 + $0x7c0] sm:%s1796]
                %1868 = vst [vmem:[%s1804 + $0x8b8] sm:%s1796] %v1867
                %v1869 = vld [vmem:[%s1803 + $0x800] sm:%s1796]
                %1870 = vst [vmem:[%s1804 + $0x900] sm:%s1796] %v1869
                %v1871 = vld [vmem:[%s1803 + $0x840] sm:%s1796]
                %1872 = vst [vmem:[%s1804 + $0x948] sm:%s1796] %v1871
                %v1873 = vld [vmem:[%s1803 + $0x880] sm:%s1796]
                %1874 = vst [vmem:[%s1804 + $0x990] sm:%s1796] %v1873
                %v1875 = vld [vmem:[%s1803 + $0x8c0] sm:%s1796]
                %1876 = vst [vmem:[%s1804 + $0x9d8] sm:%s1796] %v1875
                %v1877 = vld [vmem:[%s1803 + $0x900] sm:%s1796]
                %1878 = vst [vmem:[%s1804 + $0xa20] sm:%s1796] %v1877
                %v1879 = vld [vmem:[%s1803 + $0x940] sm:%s1796]
                %1880 = vst [vmem:[%s1804 + $0xa68] sm:%s1796] %v1879
                %v1881 = vld [vmem:[%s1803 + $0x980] sm:%s1796]
                %1882 = vst [vmem:[%s1804 + $0xab0] sm:%s1796] %v1881
                %v1883 = vld [vmem:[%s1803 + $0x9c0] sm:%s1796]
                %1884 = vst [vmem:[%s1804 + $0xaf8] sm:%s1796] %v1883
                %v1885 = vld [vmem:[%s1803 + $0xa00] sm:%s1796]
                %1886 = vst [vmem:[%s1804 + $0xb40] sm:%s1796] %v1885
                %v1887 = vld [vmem:[%s1803 + $0xa40] sm:%s1796]
                %1888 = vst [vmem:[%s1804 + $0xb88] sm:%s1796] %v1887
                %v1889 = vld [vmem:[%s1803 + $0xa80] sm:%s1796]
                %1890 = vst [vmem:[%s1804 + $0xbd0] sm:%s1796] %v1889
                %v1891 = vld [vmem:[%s1803 + $0xac0] sm:%s1796]
                %1892 = vst [vmem:[%s1804 + $0xc18] sm:%s1796] %v1891
                %v1893 = vld [vmem:[%s1803 + $0xb00] sm:%s1796]
                %1894 = vst [vmem:[%s1804 + $0xc60] sm:%s1796] %v1893
                %v1895 = vld [vmem:[%s1803 + $0xb40] sm:%s1796]
                %1896 = vst [vmem:[%s1804 + $0xca8] sm:%s1796] %v1895
                %v1897 = vld [vmem:[%s1803 + $0xb80] sm:%s1796]
                %1898 = vst [vmem:[%s1804 + $0xcf0] sm:%s1796] %v1897
                %v1899 = vld [vmem:[%s1803 + $0xbc0] sm:%s1796]
                %1900 = vst [vmem:[%s1804 + $0xd38] sm:%s1796] %v1899
                %v1901 = vld [vmem:[%s1803 + $0xc00] sm:%s1796]
                %1902 = vst [vmem:[%s1804 + $0xd80] sm:%s1796] %v1901
                %v1903 = vld [vmem:[%s1803 + $0xc40] sm:%s1796]
                %1904 = vst [vmem:[%s1804 + $0xdc8] sm:%s1796] %v1903
                %v1905 = vld [vmem:[%s1803 + $0xc80] sm:%s1796]
                %1906 = vst [vmem:[%s1804 + $0xe10] sm:%s1796] %v1905
                %v1907 = vld [vmem:[%s1803 + $0xcc0] sm:%s1796]
                %1908 = vst [vmem:[%s1804 + $0xe58] sm:%s1796] %v1907
                %v1909 = vld [vmem:[%s1803 + $0xd00] sm:%s1796]
                %1910 = vst [vmem:[%s1804 + $0xea0] sm:%s1796] %v1909
                %v1911 = vld [vmem:[%s1803 + $0xd40] sm:%s1796]
                %1912 = vst [vmem:[%s1804 + $0xee8] sm:%s1796] %v1911
                %v1913 = vld [vmem:[%s1803 + $0xd80] sm:%s1796]
                %1914 = vst [vmem:[%s1804 + $0xf30] sm:%s1796] %v1913
                %v1915 = vld [vmem:[%s1803 + $0xdc0] sm:%s1796]
                %1916 = vst [vmem:[%s1804 + $0xf78] sm:%s1796] %v1915
                %v1917 = vld [vmem:[%s1803 + $0xe00] sm:%s1796]
                %1918 = vst [vmem:[%s1804 + $0xfc0] sm:%s1796] %v1917
                %v1919 = vld [vmem:[%s1803 + $0xe40] sm:%s1796]
                %1920 = vst [vmem:[%s1804 + $0x1008] sm:%s1796] %v1919
                %v1921 = vld [vmem:[%s1803 + $0xe80] sm:%s1796]
                %1922 = vst [vmem:[%s1804 + $0x1050] sm:%s1796] %v1921
                %v1923 = vld [vmem:[%s1803 + $0xec0] sm:%s1796]
                %1924 = vst [vmem:[%s1804 + $0x1098] sm:%s1796] %v1923
                %v1925 = vld [vmem:[%s1803 + $0xf00] sm:%s1796]
                %1926 = vst [vmem:[%s1804 + $0x10e0] sm:%s1796] %v1925
                %v1927 = vld [vmem:[%s1803 + $0xf40] sm:%s1796]
                %1928 = vst [vmem:[%s1804 + $0x1128] sm:%s1796] %v1927
                %v1929 = vld [vmem:[%s1803 + $0xf80] sm:%s1796]
                %1930 = vst [vmem:[%s1804 + $0x1170] sm:%s1796] %v1929
                %v1931 = vld [vmem:[%s1803 + $0xfc0] sm:%s1796]
                %1932 = vst [vmem:[%s1804 + $0x11b8] sm:%s1796] %v1931
              $region97: #{tpu_custom_call.1} parent=91 // loop_footer
                %s1802 = sadd.s32 1, %s1798
              $region98: #{tpu_custom_call.1} parent=91 // loop_footer_branch
                %1797 = sbr.rel target = $region94
              $region99: #{tpu_custom_call.1} parent=91 // loop_exit
                _
            $region92: #{tpu_custom_call.1} parent=83 // pred_fallthru
              _
          $region84: #{tpu_custom_call.1} parent=79 // pred_fallthru
            _
          %2377 = vnop
        $region80: #{tpu_custom_call.1} parent=71 // pred_fallthru
          _
      $region72: #{tpu_custom_call.1} parent=5 // pred_fallthru
        _
      %p2378 = scmp.le.s32.totalorder 2, %s7
      // Predicated region
      $region129: #{tpu_custom_call.1} parent=5 // pred_check
        %p2379 = pneg %p2378
      $region130: #{tpu_custom_call.1} parent=5 // pred_check_branch
        %2381 = sbr.rel (%p2379) target = $region132
      $region131: #{tpu_custom_call.1} parent=5 // pred_region
        %s2382 = ssub.s32 %s7, 2
        // Predicated region
        $region133: #{tpu_custom_call.1} parent=131 // pred_check
          %p2383 = pneg %p78
        $region134: #{tpu_custom_call.1} parent=131 // pred_check_branch
          %2385 = sbr.rel (%p2383) target = $region136
        $region135: #{tpu_custom_call.1} parent=131 // pred_region
          %s2386 = sand.u32 %s63, 1
          %s2387 = sand.u32 %s63, 1
          %s2388 = smul.addr %s2387, 4096
          %s2389 = scalar_lea.vmem [#allocation3], %s2388
        $region136: #{tpu_custom_call.1} parent=131 // pred_fallthru
          _
      $region132: #{tpu_custom_call.1} parent=5 // pred_fallthru
        _
    $region6: #{tpu_custom_call.1} parent=1 // loop_footer
      %s11 = sadd.s32 1, %s7
    $region7: #{tpu_custom_call.1} parent=1 // loop_footer_branch
      %6 = sbr.rel target = $region3
    $region8: #{tpu_custom_call.1} parent=1 // loop_exit
      _

</llo_original>
